<compile_context>
chip_gen: v7x
topology: tpu7x:2x2x1
jax: 0.10.0
libtpu: 0.0.40
codegen_flags: <defaults>
</compile_context>

<pallas_src>
import functools
import numpy as np
import jax
import jax.numpy as jnp
from jax import lax
from jax.experimental import pallas as pl
from jax.experimental.pallas import tpu as pltpu


def _round_up(x, m):
    return (x + m - 1) // m * m


# ---------------------------------------------------------------------------
# Multi-layer LSTM kernel: whole sequence per batch block, in-kernel time loop.
# ---------------------------------------------------------------------------
def _lstm_kernel(num_layers, x_ref, *args):
    n_w = 3 * num_layers
    w_refs = args[:n_w]
    out_ref, proj_ref, h_ref, c_ref = args[n_w:n_w + 4]
    T, B, H = out_ref.shape          # H is the lane-padded hidden (mult. of 128)

    for layer in range(num_layers):
        w_ih = w_refs[3 * layer][...]      # bf16 (in_dim, 4H) fused (i,f,g,o)
        w_hh = w_refs[3 * layer + 1][...]  # bf16 (H, 4H)
        b = w_refs[3 * layer + 2][...]     # f32  (1, 4H)

        # Layer > 0 reads the previous layer's full output (reuses out_ref).
        layer_in = x_ref[...] if layer == 0 else out_ref[...]   # (T, B, in_dim)
        in_dim = layer_in.shape[-1]

        # Hoisted (non-recurrent) input projection + bias for all T steps at
        # once: one bf16 MXU matmul instead of T tiny ones. f32 accumulate.
        x2d = layer_in.reshape(T * B, in_dim).astype(jnp.bfloat16)
        proj = jnp.dot(x2d, w_ih, preferred_element_type=jnp.float32) + b
        proj_ref[...] = proj.reshape(T, B, 4 * H)

        h_ref[...] = jnp.zeros_like(h_ref)
        c_ref[...] = jnp.zeros_like(c_ref)

        # Full unroll for short sequences (LLO visibility); partial unroll for
        # long ones to bound code size / vreg live ranges.
        unroll = True if T <= 16 else 4

        def step(t, carry, w_hh=w_hh):
            h_prev = h_ref[...]
            c_prev = c_ref[...]
            # Single fused recurrent matmul per step: (B, H) x (H, 4H), bf16
            # operands, f32 accumulate.  Gate/activation math stays in f32.
            gates = proj_ref[t] + jnp.dot(
                h_prev.astype(jnp.bfloat16), w_hh,
                preferred_element_type=jnp.float32)
            # H is a multiple of 128 -> lane-aligned (free) slices.
            i_g = jax.nn.sigmoid(gates[:, 0 * H:1 * H])
            f_g = jax.nn.sigmoid(gates[:, 1 * H:2 * H])
            g_g = jnp.tanh(gates[:, 2 * H:3 * H])
            o_g = jax.nn.sigmoid(gates[:, 3 * H:4 * H])
            c_new = f_g * c_prev + i_g * g_g
            h_new = o_g * jnp.tanh(c_new)
            c_ref[...] = c_new
            h_ref[...] = h_new
            out_ref[t] = h_new
            return carry

        lax.fori_loop(0, T, step, 0, unroll=unroll)


def lstm_forward(x_tm, layer_params, hidden_size):
    """x_tm: (T, B_pad, E) f32 time-major, batch padded to the sublane granule.
    layer_params: list of (w_ih (in_dim,4H), w_hh (H,4H), b (1,4H)) in PyTorch
    gate order (i, f, g, o).  Returns hidden states (T, B_pad, H_pad) f32 with
    the real hidden values in [..., :hidden_size] and zeros in padded lanes."""
    T, B_pad, E = x_tm.shape
    num_layers = len(layer_params)
    H = hidden_size
    H_pad = _round_up(H, 128)        # lane-align every gate slice

    def pad_gate_cols(w):
        # (in_dim, 4H) -> (in_dim, 4*H_pad), zero-padding each gate block.
        in_dim = w.shape[0]
        w4 = w.reshape(in_dim, 4, H)
        w4 = jnp.pad(w4, ((0, 0), (0, 0), (0, H_pad - H)))
        return w4.reshape(in_dim, 4 * H_pad)

    flat_w = []
    for l, (w_ih, w_hh, b) in enumerate(layer_params):
        if l > 0:                                   # in_dim == H for layers > 0
            w_ih = jnp.pad(w_ih, ((0, H_pad - H), (0, 0)))
        w_ih_p = pad_gate_cols(w_ih).astype(jnp.bfloat16)
        w_hh_p = pad_gate_cols(
            jnp.pad(w_hh, ((0, H_pad - H), (0, 0)))).astype(jnp.bfloat16)
        b_p = pad_gate_cols(b).astype(jnp.float32)  # bias stays f32
        flat_w += [w_ih_p, w_hh_p, b_p]

    # Batch block: largest divisor that still yields >= 2 blocks (feeds both
    # v7x TensorCores and bounds per-block VMEM); toy batches stay one block.
    B_blk = B_pad
    for cand in (256, 128, 64, 32, 16, 8):
        if cand < B_pad and B_pad % cand == 0:
            B_blk = cand
            break
    grid = (B_pad // B_blk,)

    def const_spec(a):
        nd = a.ndim
        return pl.BlockSpec(a.shape, lambda bb, _nd=nd: (0,) * _nd)

    in_specs = [pl.BlockSpec((T, B_blk, E), lambda bb: (0, bb, 0))]
    in_specs += [const_spec(w) for w in flat_w]

    kernel = functools.partial(_lstm_kernel, num_layers)
    return pl.pallas_call(
        kernel,
        out_shape=jax.ShapeDtypeStruct((T, B_pad, H_pad), jnp.float32),
        grid_spec=pltpu.PrefetchScalarGridSpec(
            num_scalar_prefetch=0,
            grid=grid,
            in_specs=in_specs,
            out_specs=pl.BlockSpec((T, B_blk, H_pad), lambda bb: (0, bb, 0)),
            scratch_shapes=[
                pltpu.VMEM((T, B_blk, 4 * H_pad), jnp.float32),  # hoisted proj
                pltpu.VMEM((B_blk, H_pad), jnp.float32),         # h state
                pltpu.VMEM((B_blk, H_pad), jnp.float32),         # c state
            ]),
        compiler_params=pltpu.CompilerParams(
            dimension_semantics=("parallel",),
            vmem_limit_bytes=64 * 1024 * 1024),
    )(x_tm, *flat_w)


# ---------------------------------------------------------------------------
# Tiled Linear kernel: vocab is the OUTER grid axis so the big W operand
# streams through HBM exactly once; the small activation tile re-streams.
# ---------------------------------------------------------------------------
def _linear_kernel(x_ref, w_ref, b_ref, o_ref):
    o_ref[...] = (jnp.dot(x_ref[...], w_ref[...],
                          preferred_element_type=jnp.float32) + b_ref[...])


def linear_forward(x, w, b):
    """x: (N, K) f32, w: (K, V), b: (V,) -> (N, V) f32.  K is already a
    multiple of 128 (lane-padded hidden).  bf16 matmul operands, f32 out."""
    N, K = x.shape
    V = w.shape[1]
    tile_n = min(256, _round_up(N, 16))           # bf16 sublane granule = 16
    tile_v = min(512, _round_up(V, 128))
    N_pad = _round_up(N, tile_n)
    V_pad = _round_up(V, tile_v)

    x_p = jnp.pad(x, ((0, N_pad - N), (0, 0))).astype(jnp.bfloat16)
    w_p = jnp.pad(w, ((0, 0), (0, V_pad - V))).astype(jnp.bfloat16)
    b_p = jnp.pad(b, (0, V_pad - V)).reshape(1, V_pad).astype(jnp.float32)

    out = pl.pallas_call(
        _linear_kernel,
        out_shape=jax.ShapeDtypeStruct((N_pad, V_pad), jnp.float32),
        grid_spec=pltpu.PrefetchScalarGridSpec(
            num_scalar_prefetch=0,
            grid=(V_pad // tile_v, N_pad // tile_n),   # vocab outer, rows inner
            in_specs=[pl.BlockSpec((tile_n, K), lambda v, n: (n, 0)),
                      pl.BlockSpec((K, tile_v), lambda v, n: (0, v)),
                      pl.BlockSpec((1, tile_v), lambda v, n: (0, v))],
            out_specs=pl.BlockSpec((tile_n, tile_v), lambda v, n: (n, v)),
        ),
        compiler_params=pltpu.CompilerParams(
            dimension_semantics=("parallel", "parallel"),
            vmem_limit_bytes=64 * 1024 * 1024),
    )(x_p, w_p, b_p)
    return out[:N, :V]


# ---------------------------------------------------------------------------
# DecoderRNN.forward
# ---------------------------------------------------------------------------
def decoder_forward(params, features, captions, lengths):
    """features: (B, E) f32, captions: (B, T) int32, lengths: python list
    sorted descending (pack_padded_sequence enforce_sorted semantics)."""
    # Embedding lookup + concat(features.unsqueeze(1), embeddings) -- XLA glue.
    embeddings = jnp.take(params["embed"], captions, axis=0)           # (B, T, E)
    seq = jnp.concatenate([features[:, None, :], embeddings], axis=1)  # (B, T+1, E)
    x_tm = jnp.transpose(seq, (1, 0, 2))                               # (T+1, B, E)

    # Pad batch to the f32 sublane granule (zeros through the LSTM are benign).
    B = features.shape[0]
    H = params["linear_w"].shape[0]
    B_pad = _round_up(B, 8)
    x_tm = jnp.pad(x_tm, ((0, 0), (0, B_pad - B), (0, 0)))

    hiddens_tm = lstm_forward(x_tm, params["lstm"], H)[:, :B, :]  # (T+1, B, H_pad)
    H_pad = hiddens_tm.shape[-1]

    # pack_padded_sequence ordering: time-major, all batches with length > t.
    # (Static-index gather glue; padded LSTM steps are causal so gathered
    #  positions match the packed-sequence LSTM exactly.)
    idx = [(t, b) for t in range(max(lengths)) for b in range(B) if lengths[b] > t]
    t_idx = jnp.array([i[0] for i in idx], dtype=jnp.int32)
    b_idx = jnp.array([i[1] for i in idx], dtype=jnp.int32)
    packed = hiddens_tm[t_idx, b_idx]                                  # (N, H_pad)

    # Pad the Linear's contraction dim to match the lane-padded hidden
    # (padded hidden lanes are exactly zero, so this is a no-op numerically).
    w_lin = jnp.pad(params["linear_w"], ((0, H_pad - H), (0, 0)))
    return linear_forward(packed, w_lin, params["linear_b"])


# ---------------------------------------------------------------------------
# Deterministic parameter init (synthetic, matches nn.Module shapes; gates are
# stored fused as (in_dim, 4H)/(H, 4H)/(1, 4H) in PyTorch order i,f,g,o).
# Note: uses a single bias per gate (b_ih + b_hh would be summed when importing
# real nn.LSTM weights).
# ---------------------------------------------------------------------------
def init_params(key, embed_size, hidden_size, vocab_size, num_layers):
    keys = jax.random.split(key, 3 + num_layers)
    params = {}
    params["embed"] = 0.1 * jax.random.normal(
        keys[0], (vocab_size, embed_size), jnp.float32)
    lstm = []
    for l in range(num_layers):
        in_dim = embed_size if l == 0 else hidden_size
        k = jax.random.split(keys[3 + l], 3)
        w_ih = 0.1 * jax.random.normal(k[0], (in_dim, 4 * hidden_size), jnp.float32)
        w_hh = 0.1 * jax.random.normal(k[1], (hidden_size, 4 * hidden_size), jnp.float32)
        b = 0.1 * jax.random.normal(k[2], (1, 4 * hidden_size), jnp.float32)
        lstm.append((w_ih, w_hh, b))
    params["lstm"] = lstm
    params["linear_w"] = 0.1 * jax.random.normal(
        keys[1], (hidden_size, vocab_size), jnp.float32)
    params["linear_b"] = 0.1 * jax.random.normal(
        keys[2], (vocab_size,), jnp.float32)
    return params


# ---------------------------------------------------------------------------
# Pure-JAX f32 reference for verification (matches the PyTorch module math).
# ---------------------------------------------------------------------------
def reference_forward(params, features, captions, lengths):
    embeddings = jnp.take(params["embed"], captions, axis=0)
    seq = jnp.concatenate([features[:, None, :], embeddings], axis=1)
    B, T, _ = seq.shape
    H = params["linear_w"].shape[0]
    num_layers = len(params["lstm"])
    h = [jnp.zeros((B, H), jnp.float32) for _ in range(num_layers)]
    c = [jnp.zeros((B, H), jnp.float32) for _ in range(num_layers)]
    outs = []
    for t in range(T):
        x = seq[:, t, :]
        for l in range(num_layers):
            w_ih, w_hh, b = params["lstm"][l]
            gates = x @ w_ih + h[l] @ w_hh + b          # (B, 4H)
            i_g = jax.nn.sigmoid(gates[:, 0 * H:1 * H])
            f_g = jax.nn.sigmoid(gates[:, 1 * H:2 * H])
            g_g = jnp.tanh(gates[:, 2 * H:3 * H])
            o_g = jax.nn.sigmoid(gates[:, 3 * H:4 * H])
            c[l] = f_g * c[l] + i_g * g_g
            h[l] = o_g * jnp.tanh(c[l])
            x = h[l]
        outs.append(x)
    hiddens = jnp.stack(outs, axis=0)  # (T, B, H)
    idx = [(t, b) for t in range(max(lengths)) for b in range(B) if lengths[b] > t]
    packed = jnp.stack([hiddens[t, b] for t, b in idx], axis=0)
    return packed @ params["linear_w"] + params["linear_b"]


if __name__ == "__main__":
    embed_size, hidden_size, vocab_size, num_layers = 32, 32, 40, 2
    B, T_cap = 2, 8
    lengths = [9, 6]  # sorted descending, <= T_cap + 1 (features prepended)

    key = jax.random.PRNGKey(0)
    kp, kf, kc = jax.random.split(key, 3)
    params = init_params(kp, embed_size, hidden_size, vocab_size, num_layers)
    features = jax.random.normal(kf, (B, embed_size), jnp.float32)
    captions = jax.random.randint(kc, (B, T_cap), 0, vocab_size, dtype=jnp.int32)

    out = decoder_forward(params, features, captions, lengths)
    out = jax.block_until_ready(out)

    ref = reference_forward(params, features, captions, lengths)
    assert out.shape == (sum(lengths), vocab_size)
    # bf16 MXU operands (f32 accumulate) vs f32 reference -> slightly looser tol.
    np.testing.assert_allclose(np.asarray(out), np.asarray(ref),
                               rtol=2e-2, atol=2e-2)
    print("KERNEL_OK")
</pallas_src>

<mosaic_0001>
module attributes {stable_mosaic.version = 11 : i64} {
  func.func @_lstm_kernel(%arg0: i32, %arg1: memref<9x8x32xf32, #tpu.memory_space<vmem>>, %arg2: memref<32x512xbf16, #tpu.memory_space<vmem>>, %arg3: memref<128x512xbf16, #tpu.memory_space<vmem>>, %arg4: memref<1x512xf32, #tpu.memory_space<vmem>>, %arg5: memref<128x512xbf16, #tpu.memory_space<vmem>>, %arg6: memref<128x512xbf16, #tpu.memory_space<vmem>>, %arg7: memref<1x512xf32, #tpu.memory_space<vmem>>, %arg8: memref<9x8x128xf32, #tpu.memory_space<vmem>>, %arg9: memref<9x8x512xf32, #tpu.memory_space<vmem>>, %arg10: memref<8x128xf32, #tpu.memory_space<vmem>>, %arg11: memref<8x128xf32, #tpu.memory_space<vmem>>) attributes {dimension_semantics = [#tpu.dimension_semantics<parallel>], iteration_bounds = array<i64: 1>, scalar_prefetch = 0 : i64, scratch_operands = 3 : i64, tpu.core_type = #tpu.core_type<tc>, window_params = [{transform_indices = @transform_0, window_bounds = array<i64: 9, 8, 32>}, {pipeline_mode = #tpu.pipeline_mode<synchronous>, transform_indices = @transform_1, window_bounds = array<i64: 32, 512>}, {pipeline_mode = #tpu.pipeline_mode<synchronous>, transform_indices = @transform_2, window_bounds = array<i64: 128, 512>}, {pipeline_mode = #tpu.pipeline_mode<synchronous>, transform_indices = @transform_3, window_bounds = array<i64: 1, 512>}, {pipeline_mode = #tpu.pipeline_mode<synchronous>, transform_indices = @transform_4, window_bounds = array<i64: 128, 512>}, {pipeline_mode = #tpu.pipeline_mode<synchronous>, transform_indices = @transform_5, window_bounds = array<i64: 128, 512>}, {pipeline_mode = #tpu.pipeline_mode<synchronous>, transform_indices = @transform_6, window_bounds = array<i64: 1, 512>}, {transform_indices = @transform_7, window_bounds = array<i64: 9, 8, 128>}]} {
    %c0 = arith.constant 0 : index
    %c0_0 = arith.constant 0 : index
    %0 = vector.load %arg2[%c0, %c0_0] : memref<32x512xbf16, #tpu.memory_space<vmem>>, vector<32x512xbf16>
    %c0_1 = arith.constant 0 : index
    %c0_2 = arith.constant 0 : index
    %1 = vector.load %arg3[%c0_1, %c0_2] : memref<128x512xbf16, #tpu.memory_space<vmem>>, vector<128x512xbf16>
    %c0_3 = arith.constant 0 : index
    %c0_4 = arith.constant 0 : index
    %2 = vector.load %arg4[%c0_3, %c0_4] : memref<1x512xf32, #tpu.memory_space<vmem>>, vector<1x512xf32>
    %c0_5 = arith.constant 0 : index
    %c0_6 = arith.constant 0 : index
    %c0_7 = arith.constant 0 : index
    %3 = vector.load %arg1[%c0_5, %c0_6, %c0_7] : memref<9x8x32xf32, #tpu.memory_space<vmem>>, vector<9x8x32xf32>
    %4 = vector.shape_cast %3 : vector<9x8x32xf32> to vector<72x32xf32>
    %5 = arith.truncf %4 : vector<72x32xf32> to vector<72x32xbf16>
    %cst = arith.constant dense<0.000000e+00> : vector<72x512xf32>
    %6 = tpu.matmul %5, %0, %cst {dimension_numbers = #tpu.dot_dimension_numbers<[1], [0], [0], [1], [0, 0, 1, 1], [], []>} : vector<72x32xbf16>, vector<32x512xbf16>, vector<72x512xf32> -> vector<72x512xf32>
    %7 = vector.broadcast %2 : vector<1x512xf32> to vector<72x512xf32>
    %8 = arith.addf %6, %7 : vector<72x512xf32>
    %9 = vector.shape_cast %8 : vector<72x512xf32> to vector<9x8x512xf32>
    %c0_8 = arith.constant 0 : index
    %c0_9 = arith.constant 0 : index
    %c0_10 = arith.constant 0 : index
    %10 = vector.load %arg9[%c0_8, %c0_9, %c0_10] : memref<9x8x512xf32, #tpu.memory_space<vmem>>, vector<9x8x512xf32>
    tpu.vector_store %arg9[%c0_8, %c0_9, %c0_10], %9 {strides = array<i32>} : memref<9x8x512xf32, #tpu.memory_space<vmem>>, vector<9x8x512xf32>,
    %cst_11 = arith.constant 0.000000e+00 : f32
    %11 = vector.broadcast %cst_11 : f32 to vector<8x128xf32>
    %c0_12 = arith.constant 0 : index
    %c0_13 = arith.constant 0 : index
    %12 = vector.load %arg10[%c0_12, %c0_13] : memref<8x128xf32, #tpu.memory_space<vmem>>, vector<8x128xf32>
    tpu.vector_store %arg10[%c0_12, %c0_13], %11 {strides = array<i32>} : memref<8x128xf32, #tpu.memory_space<vmem>>, vector<8x128xf32>,
    %cst_14 = arith.constant 0.000000e+00 : f32
    %13 = vector.broadcast %cst_14 : f32 to vector<8x128xf32>
    %c0_15 = arith.constant 0 : index
    %c0_16 = arith.constant 0 : index
    %14 = vector.load %arg11[%c0_15, %c0_16] : memref<8x128xf32, #tpu.memory_space<vmem>>, vector<8x128xf32>
    tpu.vector_store %arg11[%c0_15, %c0_16], %13 {strides = array<i32>} : memref<8x128xf32, #tpu.memory_space<vmem>>, vector<8x128xf32>,
    %c0_i32 = arith.constant 0 : i32
    %c0_17 = arith.constant 0 : index
    %c0_18 = arith.constant 0 : index
    %15 = vector.load %arg10[%c0_17, %c0_18] : memref<8x128xf32, #tpu.memory_space<vmem>>, vector<8x128xf32>
    %c0_19 = arith.constant 0 : index
    %c0_20 = arith.constant 0 : index
    %16 = vector.load %arg11[%c0_19, %c0_20] : memref<8x128xf32, #tpu.memory_space<vmem>>, vector<8x128xf32>
    %17 = arith.index_cast %c0_i32 : i32 to index
    %c0_21 = arith.constant 0 : index
    %c0_22 = arith.constant 0 : index
    %18 = vector.load %arg9[%17, %c0_21, %c0_22] : memref<9x8x512xf32, #tpu.memory_space<vmem>>, vector<1x8x512xf32>
    %19 = vector.shape_cast %18 : vector<1x8x512xf32> to vector<8x512xf32>
    %20 = arith.truncf %15 : vector<8x128xf32> to vector<8x128xbf16>
    %cst_23 = arith.constant dense<0.000000e+00> : vector<8x512xf32>
    %21 = tpu.matmul %20, %1, %cst_23 {dimension_numbers = #tpu.dot_dimension_numbers<[1], [0], [0], [1], [0, 0, 1, 1], [], []>} : vector<8x128xbf16>, vector<128x512xbf16>, vector<8x512xf32> -> vector<8x512xf32>
    %22 = arith.addf %19, %21 : vector<8x512xf32>
    %23 = vector.extract_strided_slice %22 {offsets = [0, 0], sizes = [8, 128], strides = [1, 1]} : vector<8x512xf32> to vector<8x128xf32>
    %24 = arith.negf %23 : vector<8x128xf32>
    %25 = math.exp %24 : vector<8x128xf32>
    %cst_24 = arith.constant 1.000000e+00 : f32
    %26 = vector.broadcast %cst_24 : f32 to vector<8x128xf32>
    %27 = arith.addf %26, %25 : vector<8x128xf32>
    %28 = arith.divf %26, %27 : vector<8x128xf32>
    %29 = vector.extract_strided_slice %22 {offsets = [0, 128], sizes = [8, 128], strides = [1, 1]} : vector<8x512xf32> to vector<8x128xf32>
    %30 = arith.negf %29 : vector<8x128xf32>
    %31 = math.exp %30 : vector<8x128xf32>
    %cst_25 = arith.constant 1.000000e+00 : f32
    %32 = vector.broadcast %cst_25 : f32 to vector<8x128xf32>
    %33 = arith.addf %32, %31 : vector<8x128xf32>
    %34 = arith.divf %32, %33 : vector<8x128xf32>
    %35 = vector.extract_strided_slice %22 {offsets = [0, 256], sizes = [8, 128], strides = [1, 1]} : vector<8x512xf32> to vector<8x128xf32>
    %36 = math.tanh %35 : vector<8x128xf32>
    %37 = vector.extract_strided_slice %22 {offsets = [0, 384], sizes = [8, 128], strides = [1, 1]} : vector<8x512xf32> to vector<8x128xf32>
    %38 = arith.negf %37 : vector<8x128xf32>
    %39 = math.exp %38 : vector<8x128xf32>
    %cst_26 = arith.constant 1.000000e+00 : f32
    %40 = vector.broadcast %cst_26 : f32 to vector<8x128xf32>
    %41 = arith.addf %40, %39 : vector<8x128xf32>
    %42 = arith.divf %40, %41 : vector<8x128xf32>
    %43 = arith.mulf %34, %16 : vector<8x128xf32>
    %44 = arith.mulf %28, %36 : vector<8x128xf32>
    %45 = arith.addf %43, %44 : vector<8x128xf32>
    %46 = math.tanh %45 : vector<8x128xf32>
    %47 = arith.mulf %42, %46 : vector<8x128xf32>
    %c0_27 = arith.constant 0 : index
    %c0_28 = arith.constant 0 : index
    %48 = vector.load %arg11[%c0_27, %c0_28] : memref<8x128xf32, #tpu.memory_space<vmem>>, vector<8x128xf32>
    tpu.vector_store %arg11[%c0_27, %c0_28], %45 {strides = array<i32>} : memref<8x128xf32, #tpu.memory_space<vmem>>, vector<8x128xf32>,
    %c0_29 = arith.constant 0 : index
    %c0_30 = arith.constant 0 : index
    %49 = vector.load %arg10[%c0_29, %c0_30] : memref<8x128xf32, #tpu.memory_space<vmem>>, vector<8x128xf32>
    tpu.vector_store %arg10[%c0_29, %c0_30], %47 {strides = array<i32>} : memref<8x128xf32, #tpu.memory_space<vmem>>, vector<8x128xf32>,
    %50 = arith.index_cast %c0_i32 : i32 to index
    %c0_31 = arith.constant 0 : index
    %c0_32 = arith.constant 0 : index
    %51 = vector.load %arg8[%50, %c0_31, %c0_32] : memref<9x8x128xf32, #tpu.memory_space<vmem>>, vector<1x8x128xf32>
    %52 = vector.shape_cast %51 : vector<1x8x128xf32> to vector<8x128xf32>
    %53 = vector.shape_cast %47 : vector<8x128xf32> to vector<1x8x128xf32>
    tpu.vector_store %arg8[%50, %c0_31, %c0_32], %53 {strides = array<i32>} : memref<9x8x128xf32, #tpu.memory_space<vmem>>, vector<1x8x128xf32>,
    %c1_i32 = arith.constant 1 : i32
    %c0_33 = arith.constant 0 : index
    %c0_34 = arith.constant 0 : index
    %54 = vector.load %arg10[%c0_33, %c0_34] : memref<8x128xf32, #tpu.memory_space<vmem>>, vector<8x128xf32>
    %c0_35 = arith.constant 0 : index
    %c0_36 = arith.constant 0 : index
    %55 = vector.load %arg11[%c0_35, %c0_36] : memref<8x128xf32, #tpu.memory_space<vmem>>, vector<8x128xf32>
    %56 = arith.index_cast %c1_i32 : i32 to index
    %c0_37 = arith.constant 0 : index
    %c0_38 = arith.constant 0 : index
    %57 = vector.load %arg9[%56, %c0_37, %c0_38] : memref<9x8x512xf32, #tpu.memory_space<vmem>>, vector<1x8x512xf32>
    %58 = vector.shape_cast %57 : vector<1x8x512xf32> to vector<8x512xf32>
    %59 = arith.truncf %54 : vector<8x128xf32> to vector<8x128xbf16>
    %cst_39 = arith.constant dense<0.000000e+00> : vector<8x512xf32>
    %60 = tpu.matmul %59, %1, %cst_39 {dimension_numbers = #tpu.dot_dimension_numbers<[1], [0], [0], [1], [0, 0, 1, 1], [], []>} : vector<8x128xbf16>, vector<128x512xbf16>, vector<8x512xf32> -> vector<8x512xf32>
    %61 = arith.addf %58, %60 : vector<8x512xf32>
    %62 = vector.extract_strided_slice %61 {offsets = [0, 0], sizes = [8, 128], strides = [1, 1]} : vector<8x512xf32> to vector<8x128xf32>
    %63 = arith.negf %62 : vector<8x128xf32>
    %64 = math.exp %63 : vector<8x128xf32>
    %cst_40 = arith.constant 1.000000e+00 : f32
    %65 = vector.broadcast %cst_40 : f32 to vector<8x128xf32>
    %66 = arith.addf %65, %64 : vector<8x128xf32>
    %67 = arith.divf %65, %66 : vector<8x128xf32>
    %68 = vector.extract_strided_slice %61 {offsets = [0, 128], sizes = [8, 128], strides = [1, 1]} : vector<8x512xf32> to vector<8x128xf32>
    %69 = arith.negf %68 : vector<8x128xf32>
    %70 = math.exp %69 : vector<8x128xf32>
    %cst_41 = arith.constant 1.000000e+00 : f32
    %71 = vector.broadcast %cst_41 : f32 to vector<8x128xf32>
    %72 = arith.addf %71, %70 : vector<8x128xf32>
    %73 = arith.divf %71, %72 : vector<8x128xf32>
    %74 = vector.extract_strided_slice %61 {offsets = [0, 256], sizes = [8, 128], strides = [1, 1]} : vector<8x512xf32> to vector<8x128xf32>
    %75 = math.tanh %74 : vector<8x128xf32>
    %76 = vector.extract_strided_slice %61 {offsets = [0, 384], sizes = [8, 128], strides = [1, 1]} : vector<8x512xf32> to vector<8x128xf32>
    %77 = arith.negf %76 : vector<8x128xf32>
    %78 = math.exp %77 : vector<8x128xf32>
    %cst_42 = arith.constant 1.000000e+00 : f32
    %79 = vector.broadcast %cst_42 : f32 to vector<8x128xf32>
    %80 = arith.addf %79, %78 : vector<8x128xf32>
    %81 = arith.divf %79, %80 : vector<8x128xf32>
    %82 = arith.mulf %73, %55 : vector<8x128xf32>
    %83 = arith.mulf %67, %75 : vector<8x128xf32>
    %84 = arith.addf %82, %83 : vector<8x128xf32>
    %85 = math.tanh %84 : vector<8x128xf32>
    %86 = arith.mulf %81, %85 : vector<8x128xf32>
    %c0_43 = arith.constant 0 : index
    %c0_44 = arith.constant 0 : index
    %87 = vector.load %arg11[%c0_43, %c0_44] : memref<8x128xf32, #tpu.memory_space<vmem>>, vector<8x128xf32>
    tpu.vector_store %arg11[%c0_43, %c0_44], %84 {strides = array<i32>} : memref<8x128xf32, #tpu.memory_space<vmem>>, vector<8x128xf32>,
    %c0_45 = arith.constant 0 : index
    %c0_46 = arith.constant 0 : index
    %88 = vector.load %arg10[%c0_45, %c0_46] : memref<8x128xf32, #tpu.memory_space<vmem>>, vector<8x128xf32>
    tpu.vector_store %arg10[%c0_45, %c0_46], %86 {strides = array<i32>} : memref<8x128xf32, #tpu.memory_space<vmem>>, vector<8x128xf32>,
    %89 = arith.index_cast %c1_i32 : i32 to index
    %c0_47 = arith.constant 0 : index
    %c0_48 = arith.constant 0 : index
    %90 = vector.load %arg8[%89, %c0_47, %c0_48] : memref<9x8x128xf32, #tpu.memory_space<vmem>>, vector<1x8x128xf32>
    %91 = vector.shape_cast %90 : vector<1x8x128xf32> to vector<8x128xf32>
    %92 = vector.shape_cast %86 : vector<8x128xf32> to vector<1x8x128xf32>
    tpu.vector_store %arg8[%89, %c0_47, %c0_48], %92 {strides = array<i32>} : memref<9x8x128xf32, #tpu.memory_space<vmem>>, vector<1x8x128xf32>,
    %c2_i32 = arith.constant 2 : i32
    %c0_49 = arith.constant 0 : index
    %c0_50 = arith.constant 0 : index
    %93 = vector.load %arg10[%c0_49, %c0_50] : memref<8x128xf32, #tpu.memory_space<vmem>>, vector<8x128xf32>
    %c0_51 = arith.constant 0 : index
    %c0_52 = arith.constant 0 : index
    %94 = vector.load %arg11[%c0_51, %c0_52] : memref<8x128xf32, #tpu.memory_space<vmem>>, vector<8x128xf32>
    %95 = arith.index_cast %c2_i32 : i32 to index
    %c0_53 = arith.constant 0 : index
    %c0_54 = arith.constant 0 : index
    %96 = vector.load %arg9[%95, %c0_53, %c0_54] : memref<9x8x512xf32, #tpu.memory_space<vmem>>, vector<1x8x512xf32>
    %97 = vector.shape_cast %96 : vector<1x8x512xf32> to vector<8x512xf32>
    %98 = arith.truncf %93 : vector<8x128xf32> to vector<8x128xbf16>
    %cst_55 = arith.constant dense<0.000000e+00> : vector<8x512xf32>
    %99 = tpu.matmul %98, %1, %cst_55 {dimension_numbers = #tpu.dot_dimension_numbers<[1], [0], [0], [1], [0, 0, 1, 1], [], []>} : vector<8x128xbf16>, vector<128x512xbf16>, vector<8x512xf32> -> vector<8x512xf32>
    %100 = arith.addf %97, %99 : vector<8x512xf32>
    %101 = vector.extract_strided_slice %100 {offsets = [0, 0], sizes = [8, 128], strides = [1, 1]} : vector<8x512xf32> to vector<8x128xf32>
    %102 = arith.negf %101 : vector<8x128xf32>
    %103 = math.exp %102 : vector<8x128xf32>
    %cst_56 = arith.constant 1.000000e+00 : f32
    %104 = vector.broadcast %cst_56 : f32 to vector<8x128xf32>
    %105 = arith.addf %104, %103 : vector<8x128xf32>
    %106 = arith.divf %104, %105 : vector<8x128xf32>
    %107 = vector.extract_strided_slice %100 {offsets = [0, 128], sizes = [8, 128], strides = [1, 1]} : vector<8x512xf32> to vector<8x128xf32>
    %108 = arith.negf %107 : vector<8x128xf32>
    %109 = math.exp %108 : vector<8x128xf32>
    %cst_57 = arith.constant 1.000000e+00 : f32
    %110 = vector.broadcast %cst_57 : f32 to vector<8x128xf32>
    %111 = arith.addf %110, %109 : vector<8x128xf32>
    %112 = arith.divf %110, %111 : vector<8x128xf32>
    %113 = vector.extract_strided_slice %100 {offsets = [0, 256], sizes = [8, 128], strides = [1, 1]} : vector<8x512xf32> to vector<8x128xf32>
    %114 = math.tanh %113 : vector<8x128xf32>
    %115 = vector.extract_strided_slice %100 {offsets = [0, 384], sizes = [8, 128], strides = [1, 1]} : vector<8x512xf32> to vector<8x128xf32>
    %116 = arith.negf %115 : vector<8x128xf32>
    %117 = math.exp %116 : vector<8x128xf32>
    %cst_58 = arith.constant 1.000000e+00 : f32
    %118 = vector.broadcast %cst_58 : f32 to vector<8x128xf32>
    %119 = arith.addf %118, %117 : vector<8x128xf32>
    %120 = arith.divf %118, %119 : vector<8x128xf32>
    %121 = arith.mulf %112, %94 : vector<8x128xf32>
    %122 = arith.mulf %106, %114 : vector<8x128xf32>
    %123 = arith.addf %121, %122 : vector<8x128xf32>
    %124 = math.tanh %123 : vector<8x128xf32>
    %125 = arith.mulf %120, %124 : vector<8x128xf32>
    %c0_59 = arith.constant 0 : index
    %c0_60 = arith.constant 0 : index
    %126 = vector.load %arg11[%c0_59, %c0_60] : memref<8x128xf32, #tpu.memory_space<vmem>>, vector<8x128xf32>
    tpu.vector_store %arg11[%c0_59, %c0_60], %123 {strides = array<i32>} : memref<8x128xf32, #tpu.memory_space<vmem>>, vector<8x128xf32>,
    %c0_61 = arith.constant 0 : index
    %c0_62 = arith.constant 0 : index
    %127 = vector.load %arg10[%c0_61, %c0_62] : memref<8x128xf32, #tpu.memory_space<vmem>>, vector<8x128xf32>
    tpu.vector_store %arg10[%c0_61, %c0_62], %125 {strides = array<i32>} : memref<8x128xf32, #tpu.memory_space<vmem>>, vector<8x128xf32>,
    %128 = arith.index_cast %c2_i32 : i32 to index
    %c0_63 = arith.constant 0 : index
    %c0_64 = arith.constant 0 : index
    %129 = vector.load %arg8[%128, %c0_63, %c0_64] : memref<9x8x128xf32, #tpu.memory_space<vmem>>, vector<1x8x128xf32>
    %130 = vector.shape_cast %129 : vector<1x8x128xf32> to vector<8x128xf32>
    %131 = vector.shape_cast %125 : vector<8x128xf32> to vector<1x8x128xf32>
    tpu.vector_store %arg8[%128, %c0_63, %c0_64], %131 {strides = array<i32>} : memref<9x8x128xf32, #tpu.memory_space<vmem>>, vector<1x8x128xf32>,
    %c3_i32 = arith.constant 3 : i32
    %c0_65 = arith.constant 0 : index
    %c0_66 = arith.constant 0 : index
    %132 = vector.load %arg10[%c0_65, %c0_66] : memref<8x128xf32, #tpu.memory_space<vmem>>, vector<8x128xf32>
    %c0_67 = arith.constant 0 : index
    %c0_68 = arith.constant 0 : index
    %133 = vector.load %arg11[%c0_67, %c0_68] : memref<8x128xf32, #tpu.memory_space<vmem>>, vector<8x128xf32>
    %134 = arith.index_cast %c3_i32 : i32 to index
    %c0_69 = arith.constant 0 : index
    %c0_70 = arith.constant 0 : index
    %135 = vector.load %arg9[%134, %c0_69, %c0_70] : memref<9x8x512xf32, #tpu.memory_space<vmem>>, vector<1x8x512xf32>
    %136 = vector.shape_cast %135 : vector<1x8x512xf32> to vector<8x512xf32>
    %137 = arith.truncf %132 : vector<8x128xf32> to vector<8x128xbf16>
    %cst_71 = arith.constant dense<0.000000e+00> : vector<8x512xf32>
    %138 = tpu.matmul %137, %1, %cst_71 {dimension_numbers = #tpu.dot_dimension_numbers<[1], [0], [0], [1], [0, 0, 1, 1], [], []>} : vector<8x128xbf16>, vector<128x512xbf16>, vector<8x512xf32> -> vector<8x512xf32>
    %139 = arith.addf %136, %138 : vector<8x512xf32>
    %140 = vector.extract_strided_slice %139 {offsets = [0, 0], sizes = [8, 128], strides = [1, 1]} : vector<8x512xf32> to vector<8x128xf32>
    %141 = arith.negf %140 : vector<8x128xf32>
    %142 = math.exp %141 : vector<8x128xf32>
    %cst_72 = arith.constant 1.000000e+00 : f32
    %143 = vector.broadcast %cst_72 : f32 to vector<8x128xf32>
    %144 = arith.addf %143, %142 : vector<8x128xf32>
    %145 = arith.divf %143, %144 : vector<8x128xf32>
    %146 = vector.extract_strided_slice %139 {offsets = [0, 128], sizes = [8, 128], strides = [1, 1]} : vector<8x512xf32> to vector<8x128xf32>
    %147 = arith.negf %146 : vector<8x128xf32>
    %148 = math.exp %147 : vector<8x128xf32>
    %cst_73 = arith.constant 1.000000e+00 : f32
    %149 = vector.broadcast %cst_73 : f32 to vector<8x128xf32>
    %150 = arith.addf %149, %148 : vector<8x128xf32>
    %151 = arith.divf %149, %150 : vector<8x128xf32>
    %152 = vector.extract_strided_slice %139 {offsets = [0, 256], sizes = [8, 128], strides = [1, 1]} : vector<8x512xf32> to vector<8x128xf32>
    %153 = math.tanh %152 : vector<8x128xf32>
    %154 = vector.extract_strided_slice %139 {offsets = [0, 384], sizes = [8, 128], strides = [1, 1]} : vector<8x512xf32> to vector<8x128xf32>
    %155 = arith.negf %154 : vector<8x128xf32>
    %156 = math.exp %155 : vector<8x128xf32>
    %cst_74 = arith.constant 1.000000e+00 : f32
    %157 = vector.broadcast %cst_74 : f32 to vector<8x128xf32>
    %158 = arith.addf %157, %156 : vector<8x128xf32>
    %159 = arith.divf %157, %158 : vector<8x128xf32>
    %160 = arith.mulf %151, %133 : vector<8x128xf32>
    %161 = arith.mulf %145, %153 : vector<8x128xf32>
    %162 = arith.addf %160, %161 : vector<8x128xf32>
    %163 = math.tanh %162 : vector<8x128xf32>
    %164 = arith.mulf %159, %163 : vector<8x128xf32>
    %c0_75 = arith.constant 0 : index
    %c0_76 = arith.constant 0 : index
    %165 = vector.load %arg11[%c0_75, %c0_76] : memref<8x128xf32, #tpu.memory_space<vmem>>, vector<8x128xf32>
    tpu.vector_store %arg11[%c0_75, %c0_76], %162 {strides = array<i32>} : memref<8x128xf32, #tpu.memory_space<vmem>>, vector<8x128xf32>,
    %c0_77 = arith.constant 0 : index
    %c0_78 = arith.constant 0 : index
    %166 = vector.load %arg10[%c0_77, %c0_78] : memref<8x128xf32, #tpu.memory_space<vmem>>, vector<8x128xf32>
    tpu.vector_store %arg10[%c0_77, %c0_78], %164 {strides = array<i32>} : memref<8x128xf32, #tpu.memory_space<vmem>>, vector<8x128xf32>,
    %167 = arith.index_cast %c3_i32 : i32 to index
    %c0_79 = arith.constant 0 : index
    %c0_80 = arith.constant 0 : index
    %168 = vector.load %arg8[%167, %c0_79, %c0_80] : memref<9x8x128xf32, #tpu.memory_space<vmem>>, vector<1x8x128xf32>
    %169 = vector.shape_cast %168 : vector<1x8x128xf32> to vector<8x128xf32>
    %170 = vector.shape_cast %164 : vector<8x128xf32> to vector<1x8x128xf32>
    tpu.vector_store %arg8[%167, %c0_79, %c0_80], %170 {strides = array<i32>} : memref<9x8x128xf32, #tpu.memory_space<vmem>>, vector<1x8x128xf32>,
    %c4_i32 = arith.constant 4 : i32
    %c0_81 = arith.constant 0 : index
    %c0_82 = arith.constant 0 : index
    %171 = vector.load %arg10[%c0_81, %c0_82] : memref<8x128xf32, #tpu.memory_space<vmem>>, vector<8x128xf32>
    %c0_83 = arith.constant 0 : index
    %c0_84 = arith.constant 0 : index
    %172 = vector.load %arg11[%c0_83, %c0_84] : memref<8x128xf32, #tpu.memory_space<vmem>>, vector<8x128xf32>
    %173 = arith.index_cast %c4_i32 : i32 to index
    %c0_85 = arith.constant 0 : index
    %c0_86 = arith.constant 0 : index
    %174 = vector.load %arg9[%173, %c0_85, %c0_86] : memref<9x8x512xf32, #tpu.memory_space<vmem>>, vector<1x8x512xf32>
    %175 = vector.shape_cast %174 : vector<1x8x512xf32> to vector<8x512xf32>
    %176 = arith.truncf %171 : vector<8x128xf32> to vector<8x128xbf16>
    %cst_87 = arith.constant dense<0.000000e+00> : vector<8x512xf32>
    %177 = tpu.matmul %176, %1, %cst_87 {dimension_numbers = #tpu.dot_dimension_numbers<[1], [0], [0], [1], [0, 0, 1, 1], [], []>} : vector<8x128xbf16>, vector<128x512xbf16>, vector<8x512xf32> -> vector<8x512xf32>
    %178 = arith.addf %175, %177 : vector<8x512xf32>
    %179 = vector.extract_strided_slice %178 {offsets = [0, 0], sizes = [8, 128], strides = [1, 1]} : vector<8x512xf32> to vector<8x128xf32>
    %180 = arith.negf %179 : vector<8x128xf32>
    %181 = math.exp %180 : vector<8x128xf32>
    %cst_88 = arith.constant 1.000000e+00 : f32
    %182 = vector.broadcast %cst_88 : f32 to vector<8x128xf32>
    %183 = arith.addf %182, %181 : vector<8x128xf32>
    %184 = arith.divf %182, %183 : vector<8x128xf32>
    %185 = vector.extract_strided_slice %178 {offsets = [0, 128], sizes = [8, 128], strides = [1, 1]} : vector<8x512xf32> to vector<8x128xf32>
    %186 = arith.negf %185 : vector<8x128xf32>
    %187 = math.exp %186 : vector<8x128xf32>
    %cst_89 = arith.constant 1.000000e+00 : f32
    %188 = vector.broadcast %cst_89 : f32 to vector<8x128xf32>
    %189 = arith.addf %188, %187 : vector<8x128xf32>
    %190 = arith.divf %188, %189 : vector<8x128xf32>
    %191 = vector.extract_strided_slice %178 {offsets = [0, 256], sizes = [8, 128], strides = [1, 1]} : vector<8x512xf32> to vector<8x128xf32>
    %192 = math.tanh %191 : vector<8x128xf32>
    %193 = vector.extract_strided_slice %178 {offsets = [0, 384], sizes = [8, 128], strides = [1, 1]} : vector<8x512xf32> to vector<8x128xf32>
    %194 = arith.negf %193 : vector<8x128xf32>
    %195 = math.exp %194 : vector<8x128xf32>
    %cst_90 = arith.constant 1.000000e+00 : f32
    %196 = vector.broadcast %cst_90 : f32 to vector<8x128xf32>
    %197 = arith.addf %196, %195 : vector<8x128xf32>
    %198 = arith.divf %196, %197 : vector<8x128xf32>
    %199 = arith.mulf %190, %172 : vector<8x128xf32>
    %200 = arith.mulf %184, %192 : vector<8x128xf32>
    %201 = arith.addf %199, %200 : vector<8x128xf32>
    %202 = math.tanh %201 : vector<8x128xf32>
    %203 = arith.mulf %198, %202 : vector<8x128xf32>
    %c0_91 = arith.constant 0 : index
    %c0_92 = arith.constant 0 : index
    %204 = vector.load %arg11[%c0_91, %c0_92] : memref<8x128xf32, #tpu.memory_space<vmem>>, vector<8x128xf32>
    tpu.vector_store %arg11[%c0_91, %c0_92], %201 {strides = array<i32>} : memref<8x128xf32, #tpu.memory_space<vmem>>, vector<8x128xf32>,
    %c0_93 = arith.constant 0 : index
    %c0_94 = arith.constant 0 : index
    %205 = vector.load %arg10[%c0_93, %c0_94] : memref<8x128xf32, #tpu.memory_space<vmem>>, vector<8x128xf32>
    tpu.vector_store %arg10[%c0_93, %c0_94], %203 {strides = array<i32>} : memref<8x128xf32, #tpu.memory_space<vmem>>, vector<8x128xf32>,
    %206 = arith.index_cast %c4_i32 : i32 to index
    %c0_95 = arith.constant 0 : index
    %c0_96 = arith.constant 0 : index
    %207 = vector.load %arg8[%206, %c0_95, %c0_96] : memref<9x8x128xf32, #tpu.memory_space<vmem>>, vector<1x8x128xf32>
    %208 = vector.shape_cast %207 : vector<1x8x128xf32> to vector<8x128xf32>
    %209 = vector.shape_cast %203 : vector<8x128xf32> to vector<1x8x128xf32>
    tpu.vector_store %arg8[%206, %c0_95, %c0_96], %209 {strides = array<i32>} : memref<9x8x128xf32, #tpu.memory_space<vmem>>, vector<1x8x128xf32>,
    %c5_i32 = arith.constant 5 : i32
    %c0_97 = arith.constant 0 : index
    %c0_98 = arith.constant 0 : index
    %210 = vector.load %arg10[%c0_97, %c0_98] : memref<8x128xf32, #tpu.memory_space<vmem>>, vector<8x128xf32>
    %c0_99 = arith.constant 0 : index
    %c0_100 = arith.constant 0 : index
    %211 = vector.load %arg11[%c0_99, %c0_100] : memref<8x128xf32, #tpu.memory_space<vmem>>, vector<8x128xf32>
    %212 = arith.index_cast %c5_i32 : i32 to index
    %c0_101 = arith.constant 0 : index
    %c0_102 = arith.constant 0 : index
    %213 = vector.load %arg9[%212, %c0_101, %c0_102] : memref<9x8x512xf32, #tpu.memory_space<vmem>>, vector<1x8x512xf32>
    %214 = vector.shape_cast %213 : vector<1x8x512xf32> to vector<8x512xf32>
    %215 = arith.truncf %210 : vector<8x128xf32> to vector<8x128xbf16>
    %cst_103 = arith.constant dense<0.000000e+00> : vector<8x512xf32>
    %216 = tpu.matmul %215, %1, %cst_103 {dimension_numbers = #tpu.dot_dimension_numbers<[1], [0], [0], [1], [0, 0, 1, 1], [], []>} : vector<8x128xbf16>, vector<128x512xbf16>, vector<8x512xf32> -> vector<8x512xf32>
    %217 = arith.addf %214, %216 : vector<8x512xf32>
    %218 = vector.extract_strided_slice %217 {offsets = [0, 0], sizes = [8, 128], strides = [1, 1]} : vector<8x512xf32> to vector<8x128xf32>
    %219 = arith.negf %218 : vector<8x128xf32>
    %220 = math.exp %219 : vector<8x128xf32>
    %cst_104 = arith.constant 1.000000e+00 : f32
    %221 = vector.broadcast %cst_104 : f32 to vector<8x128xf32>
    %222 = arith.addf %221, %220 : vector<8x128xf32>
    %223 = arith.divf %221, %222 : vector<8x128xf32>
    %224 = vector.extract_strided_slice %217 {offsets = [0, 128], sizes = [8, 128], strides = [1, 1]} : vector<8x512xf32> to vector<8x128xf32>
    %225 = arith.negf %224 : vector<8x128xf32>
    %226 = math.exp %225 : vector<8x128xf32>
    %cst_105 = arith.constant 1.000000e+00 : f32
    %227 = vector.broadcast %cst_105 : f32 to vector<8x128xf32>
    %228 = arith.addf %227, %226 : vector<8x128xf32>
    %229 = arith.divf %227, %228 : vector<8x128xf32>
    %230 = vector.extract_strided_slice %217 {offsets = [0, 256], sizes = [8, 128], strides = [1, 1]} : vector<8x512xf32> to vector<8x128xf32>
    %231 = math.tanh %230 : vector<8x128xf32>
    %232 = vector.extract_strided_slice %217 {offsets = [0, 384], sizes = [8, 128], strides = [1, 1]} : vector<8x512xf32> to vector<8x128xf32>
    %233 = arith.negf %232 : vector<8x128xf32>
    %234 = math.exp %233 : vector<8x128xf32>
    %cst_106 = arith.constant 1.000000e+00 : f32
    %235 = vector.broadcast %cst_106 : f32 to vector<8x128xf32>
    %236 = arith.addf %235, %234 : vector<8x128xf32>
    %237 = arith.divf %235, %236 : vector<8x128xf32>
    %238 = arith.mulf %229, %211 : vector<8x128xf32>
    %239 = arith.mulf %223, %231 : vector<8x128xf32>
    %240 = arith.addf %238, %239 : vector<8x128xf32>
    %241 = math.tanh %240 : vector<8x128xf32>
    %242 = arith.mulf %237, %241 : vector<8x128xf32>
    %c0_107 = arith.constant 0 : index
    %c0_108 = arith.constant 0 : index
    %243 = vector.load %arg11[%c0_107, %c0_108] : memref<8x128xf32, #tpu.memory_space<vmem>>, vector<8x128xf32>
    tpu.vector_store %arg11[%c0_107, %c0_108], %240 {strides = array<i32>} : memref<8x128xf32, #tpu.memory_space<vmem>>, vector<8x128xf32>,
    %c0_109 = arith.constant 0 : index
    %c0_110 = arith.constant 0 : index
    %244 = vector.load %arg10[%c0_109, %c0_110] : memref<8x128xf32, #tpu.memory_space<vmem>>, vector<8x128xf32>
    tpu.vector_store %arg10[%c0_109, %c0_110], %242 {strides = array<i32>} : memref<8x128xf32, #tpu.memory_space<vmem>>, vector<8x128xf32>,
    %245 = arith.index_cast %c5_i32 : i32 to index
    %c0_111 = arith.constant 0 : index
    %c0_112 = arith.constant 0 : index
    %246 = vector.load %arg8[%245, %c0_111, %c0_112] : memref<9x8x128xf32, #tpu.memory_space<vmem>>, vector<1x8x128xf32>
    %247 = vector.shape_cast %246 : vector<1x8x128xf32> to vector<8x128xf32>
    %248 = vector.shape_cast %242 : vector<8x128xf32> to vector<1x8x128xf32>
    tpu.vector_store %arg8[%245, %c0_111, %c0_112], %248 {strides = array<i32>} : memref<9x8x128xf32, #tpu.memory_space<vmem>>, vector<1x8x128xf32>,
    %c6_i32 = arith.constant 6 : i32
    %c0_113 = arith.constant 0 : index
    %c0_114 = arith.constant 0 : index
    %249 = vector.load %arg10[%c0_113, %c0_114] : memref<8x128xf32, #tpu.memory_space<vmem>>, vector<8x128xf32>
    %c0_115 = arith.constant 0 : index
    %c0_116 = arith.constant 0 : index
    %250 = vector.load %arg11[%c0_115, %c0_116] : memref<8x128xf32, #tpu.memory_space<vmem>>, vector<8x128xf32>
    %251 = arith.index_cast %c6_i32 : i32 to index
    %c0_117 = arith.constant 0 : index
    %c0_118 = arith.constant 0 : index
    %252 = vector.load %arg9[%251, %c0_117, %c0_118] : memref<9x8x512xf32, #tpu.memory_space<vmem>>, vector<1x8x512xf32>
    %253 = vector.shape_cast %252 : vector<1x8x512xf32> to vector<8x512xf32>
    %254 = arith.truncf %249 : vector<8x128xf32> to vector<8x128xbf16>
    %cst_119 = arith.constant dense<0.000000e+00> : vector<8x512xf32>
    %255 = tpu.matmul %254, %1, %cst_119 {dimension_numbers = #tpu.dot_dimension_numbers<[1], [0], [0], [1], [0, 0, 1, 1], [], []>} : vector<8x128xbf16>, vector<128x512xbf16>, vector<8x512xf32> -> vector<8x512xf32>
    %256 = arith.addf %253, %255 : vector<8x512xf32>
    %257 = vector.extract_strided_slice %256 {offsets = [0, 0], sizes = [8, 128], strides = [1, 1]} : vector<8x512xf32> to vector<8x128xf32>
    %258 = arith.negf %257 : vector<8x128xf32>
    %259 = math.exp %258 : vector<8x128xf32>
    %cst_120 = arith.constant 1.000000e+00 : f32
    %260 = vector.broadcast %cst_120 : f32 to vector<8x128xf32>
    %261 = arith.addf %260, %259 : vector<8x128xf32>
    %262 = arith.divf %260, %261 : vector<8x128xf32>
    %263 = vector.extract_strided_slice %256 {offsets = [0, 128], sizes = [8, 128], strides = [1, 1]} : vector<8x512xf32> to vector<8x128xf32>
    %264 = arith.negf %263 : vector<8x128xf32>
    %265 = math.exp %264 : vector<8x128xf32>
    %cst_121 = arith.constant 1.000000e+00 : f32
    %266 = vector.broadcast %cst_121 : f32 to vector<8x128xf32>
    %267 = arith.addf %266, %265 : vector<8x128xf32>
    %268 = arith.divf %266, %267 : vector<8x128xf32>
    %269 = vector.extract_strided_slice %256 {offsets = [0, 256], sizes = [8, 128], strides = [1, 1]} : vector<8x512xf32> to vector<8x128xf32>
    %270 = math.tanh %269 : vector<8x128xf32>
    %271 = vector.extract_strided_slice %256 {offsets = [0, 384], sizes = [8, 128], strides = [1, 1]} : vector<8x512xf32> to vector<8x128xf32>
    %272 = arith.negf %271 : vector<8x128xf32>
    %273 = math.exp %272 : vector<8x128xf32>
    %cst_122 = arith.constant 1.000000e+00 : f32
    %274 = vector.broadcast %cst_122 : f32 to vector<8x128xf32>
    %275 = arith.addf %274, %273 : vector<8x128xf32>
    %276 = arith.divf %274, %275 : vector<8x128xf32>
    %277 = arith.mulf %268, %250 : vector<8x128xf32>
    %278 = arith.mulf %262, %270 : vector<8x128xf32>
    %279 = arith.addf %277, %278 : vector<8x128xf32>
    %280 = math.tanh %279 : vector<8x128xf32>
    %281 = arith.mulf %276, %280 : vector<8x128xf32>
    %c0_123 = arith.constant 0 : index
    %c0_124 = arith.constant 0 : index
    %282 = vector.load %arg11[%c0_123, %c0_124] : memref<8x128xf32, #tpu.memory_space<vmem>>, vector<8x128xf32>
    tpu.vector_store %arg11[%c0_123, %c0_124], %279 {strides = array<i32>} : memref<8x128xf32, #tpu.memory_space<vmem>>, vector<8x128xf32>,
    %c0_125 = arith.constant 0 : index
    %c0_126 = arith.constant 0 : index
    %283 = vector.load %arg10[%c0_125, %c0_126] : memref<8x128xf32, #tpu.memory_space<vmem>>, vector<8x128xf32>
    tpu.vector_store %arg10[%c0_125, %c0_126], %281 {strides = array<i32>} : memref<8x128xf32, #tpu.memory_space<vmem>>, vector<8x128xf32>,
    %284 = arith.index_cast %c6_i32 : i32 to index
    %c0_127 = arith.constant 0 : index
    %c0_128 = arith.constant 0 : index
    %285 = vector.load %arg8[%284, %c0_127, %c0_128] : memref<9x8x128xf32, #tpu.memory_space<vmem>>, vector<1x8x128xf32>
    %286 = vector.shape_cast %285 : vector<1x8x128xf32> to vector<8x128xf32>
    %287 = vector.shape_cast %281 : vector<8x128xf32> to vector<1x8x128xf32>
    tpu.vector_store %arg8[%284, %c0_127, %c0_128], %287 {strides = array<i32>} : memref<9x8x128xf32, #tpu.memory_space<vmem>>, vector<1x8x128xf32>,
    %c7_i32 = arith.constant 7 : i32
    %c0_129 = arith.constant 0 : index
    %c0_130 = arith.constant 0 : index
    %288 = vector.load %arg10[%c0_129, %c0_130] : memref<8x128xf32, #tpu.memory_space<vmem>>, vector<8x128xf32>
    %c0_131 = arith.constant 0 : index
    %c0_132 = arith.constant 0 : index
    %289 = vector.load %arg11[%c0_131, %c0_132] : memref<8x128xf32, #tpu.memory_space<vmem>>, vector<8x128xf32>
    %290 = arith.index_cast %c7_i32 : i32 to index
    %c0_133 = arith.constant 0 : index
    %c0_134 = arith.constant 0 : index
    %291 = vector.load %arg9[%290, %c0_133, %c0_134] : memref<9x8x512xf32, #tpu.memory_space<vmem>>, vector<1x8x512xf32>
    %292 = vector.shape_cast %291 : vector<1x8x512xf32> to vector<8x512xf32>
    %293 = arith.truncf %288 : vector<8x128xf32> to vector<8x128xbf16>
    %cst_135 = arith.constant dense<0.000000e+00> : vector<8x512xf32>
    %294 = tpu.matmul %293, %1, %cst_135 {dimension_numbers = #tpu.dot_dimension_numbers<[1], [0], [0], [1], [0, 0, 1, 1], [], []>} : vector<8x128xbf16>, vector<128x512xbf16>, vector<8x512xf32> -> vector<8x512xf32>
    %295 = arith.addf %292, %294 : vector<8x512xf32>
    %296 = vector.extract_strided_slice %295 {offsets = [0, 0], sizes = [8, 128], strides = [1, 1]} : vector<8x512xf32> to vector<8x128xf32>
    %297 = arith.negf %296 : vector<8x128xf32>
    %298 = math.exp %297 : vector<8x128xf32>
    %cst_136 = arith.constant 1.000000e+00 : f32
    %299 = vector.broadcast %cst_136 : f32 to vector<8x128xf32>
    %300 = arith.addf %299, %298 : vector<8x128xf32>
    %301 = arith.divf %299, %300 : vector<8x128xf32>
    %302 = vector.extract_strided_slice %295 {offsets = [0, 128], sizes = [8, 128], strides = [1, 1]} : vector<8x512xf32> to vector<8x128xf32>
    %303 = arith.negf %302 : vector<8x128xf32>
    %304 = math.exp %303 : vector<8x128xf32>
    %cst_137 = arith.constant 1.000000e+00 : f32
    %305 = vector.broadcast %cst_137 : f32 to vector<8x128xf32>
    %306 = arith.addf %305, %304 : vector<8x128xf32>
    %307 = arith.divf %305, %306 : vector<8x128xf32>
    %308 = vector.extract_strided_slice %295 {offsets = [0, 256], sizes = [8, 128], strides = [1, 1]} : vector<8x512xf32> to vector<8x128xf32>
    %309 = math.tanh %308 : vector<8x128xf32>
    %310 = vector.extract_strided_slice %295 {offsets = [0, 384], sizes = [8, 128], strides = [1, 1]} : vector<8x512xf32> to vector<8x128xf32>
    %311 = arith.negf %310 : vector<8x128xf32>
    %312 = math.exp %311 : vector<8x128xf32>
    %cst_138 = arith.constant 1.000000e+00 : f32
    %313 = vector.broadcast %cst_138 : f32 to vector<8x128xf32>
    %314 = arith.addf %313, %312 : vector<8x128xf32>
    %315 = arith.divf %313, %314 : vector<8x128xf32>
    %316 = arith.mulf %307, %289 : vector<8x128xf32>
    %317 = arith.mulf %301, %309 : vector<8x128xf32>
    %318 = arith.addf %316, %317 : vector<8x128xf32>
    %319 = math.tanh %318 : vector<8x128xf32>
    %320 = arith.mulf %315, %319 : vector<8x128xf32>
    %c0_139 = arith.constant 0 : index
    %c0_140 = arith.constant 0 : index
    %321 = vector.load %arg11[%c0_139, %c0_140] : memref<8x128xf32, #tpu.memory_space<vmem>>, vector<8x128xf32>
    tpu.vector_store %arg11[%c0_139, %c0_140], %318 {strides = array<i32>} : memref<8x128xf32, #tpu.memory_space<vmem>>, vector<8x128xf32>,
    %c0_141 = arith.constant 0 : index
    %c0_142 = arith.constant 0 : index
    %322 = vector.load %arg10[%c0_141, %c0_142] : memref<8x128xf32, #tpu.memory_space<vmem>>, vector<8x128xf32>
    tpu.vector_store %arg10[%c0_141, %c0_142], %320 {strides = array<i32>} : memref<8x128xf32, #tpu.memory_space<vmem>>, vector<8x128xf32>,
    %323 = arith.index_cast %c7_i32 : i32 to index
    %c0_143 = arith.constant 0 : index
    %c0_144 = arith.constant 0 : index
    %324 = vector.load %arg8[%323, %c0_143, %c0_144] : memref<9x8x128xf32, #tpu.memory_space<vmem>>, vector<1x8x128xf32>
    %325 = vector.shape_cast %324 : vector<1x8x128xf32> to vector<8x128xf32>
    %326 = vector.shape_cast %320 : vector<8x128xf32> to vector<1x8x128xf32>
    tpu.vector_store %arg8[%323, %c0_143, %c0_144], %326 {strides = array<i32>} : memref<9x8x128xf32, #tpu.memory_space<vmem>>, vector<1x8x128xf32>,
    %c8_i32 = arith.constant 8 : i32
    %c0_145 = arith.constant 0 : index
    %c0_146 = arith.constant 0 : index
    %327 = vector.load %arg10[%c0_145, %c0_146] : memref<8x128xf32, #tpu.memory_space<vmem>>, vector<8x128xf32>
    %c0_147 = arith.constant 0 : index
    %c0_148 = arith.constant 0 : index
    %328 = vector.load %arg11[%c0_147, %c0_148] : memref<8x128xf32, #tpu.memory_space<vmem>>, vector<8x128xf32>
    %329 = arith.index_cast %c8_i32 : i32 to index
    %c0_149 = arith.constant 0 : index
    %c0_150 = arith.constant 0 : index
    %330 = vector.load %arg9[%329, %c0_149, %c0_150] : memref<9x8x512xf32, #tpu.memory_space<vmem>>, vector<1x8x512xf32>
    %331 = vector.shape_cast %330 : vector<1x8x512xf32> to vector<8x512xf32>
    %332 = arith.truncf %327 : vector<8x128xf32> to vector<8x128xbf16>
    %cst_151 = arith.constant dense<0.000000e+00> : vector<8x512xf32>
    %333 = tpu.matmul %332, %1, %cst_151 {dimension_numbers = #tpu.dot_dimension_numbers<[1], [0], [0], [1], [0, 0, 1, 1], [], []>} : vector<8x128xbf16>, vector<128x512xbf16>, vector<8x512xf32> -> vector<8x512xf32>
    %334 = arith.addf %331, %333 : vector<8x512xf32>
    %335 = vector.extract_strided_slice %334 {offsets = [0, 0], sizes = [8, 128], strides = [1, 1]} : vector<8x512xf32> to vector<8x128xf32>
    %336 = arith.negf %335 : vector<8x128xf32>
    %337 = math.exp %336 : vector<8x128xf32>
    %cst_152 = arith.constant 1.000000e+00 : f32
    %338 = vector.broadcast %cst_152 : f32 to vector<8x128xf32>
    %339 = arith.addf %338, %337 : vector<8x128xf32>
    %340 = arith.divf %338, %339 : vector<8x128xf32>
    %341 = vector.extract_strided_slice %334 {offsets = [0, 128], sizes = [8, 128], strides = [1, 1]} : vector<8x512xf32> to vector<8x128xf32>
    %342 = arith.negf %341 : vector<8x128xf32>
    %343 = math.exp %342 : vector<8x128xf32>
    %cst_153 = arith.constant 1.000000e+00 : f32
    %344 = vector.broadcast %cst_153 : f32 to vector<8x128xf32>
    %345 = arith.addf %344, %343 : vector<8x128xf32>
    %346 = arith.divf %344, %345 : vector<8x128xf32>
    %347 = vector.extract_strided_slice %334 {offsets = [0, 256], sizes = [8, 128], strides = [1, 1]} : vector<8x512xf32> to vector<8x128xf32>
    %348 = math.tanh %347 : vector<8x128xf32>
    %349 = vector.extract_strided_slice %334 {offsets = [0, 384], sizes = [8, 128], strides = [1, 1]} : vector<8x512xf32> to vector<8x128xf32>
    %350 = arith.negf %349 : vector<8x128xf32>
    %351 = math.exp %350 : vector<8x128xf32>
    %cst_154 = arith.constant 1.000000e+00 : f32
    %352 = vector.broadcast %cst_154 : f32 to vector<8x128xf32>
    %353 = arith.addf %352, %351 : vector<8x128xf32>
    %354 = arith.divf %352, %353 : vector<8x128xf32>
    %355 = arith.mulf %346, %328 : vector<8x128xf32>
    %356 = arith.mulf %340, %348 : vector<8x128xf32>
    %357 = arith.addf %355, %356 : vector<8x128xf32>
    %358 = math.tanh %357 : vector<8x128xf32>
    %359 = arith.mulf %354, %358 : vector<8x128xf32>
    %c0_155 = arith.constant 0 : index
    %c0_156 = arith.constant 0 : index
    %360 = vector.load %arg11[%c0_155, %c0_156] : memref<8x128xf32, #tpu.memory_space<vmem>>, vector<8x128xf32>
    tpu.vector_store %arg11[%c0_155, %c0_156], %357 {strides = array<i32>} : memref<8x128xf32, #tpu.memory_space<vmem>>, vector<8x128xf32>,
    %c0_157 = arith.constant 0 : index
    %c0_158 = arith.constant 0 : index
    %361 = vector.load %arg10[%c0_157, %c0_158] : memref<8x128xf32, #tpu.memory_space<vmem>>, vector<8x128xf32>
    tpu.vector_store %arg10[%c0_157, %c0_158], %359 {strides = array<i32>} : memref<8x128xf32, #tpu.memory_space<vmem>>, vector<8x128xf32>,
    %362 = arith.index_cast %c8_i32 : i32 to index
    %c0_159 = arith.constant 0 : index
    %c0_160 = arith.constant 0 : index
    %363 = vector.load %arg8[%362, %c0_159, %c0_160] : memref<9x8x128xf32, #tpu.memory_space<vmem>>, vector<1x8x128xf32>
    %364 = vector.shape_cast %363 : vector<1x8x128xf32> to vector<8x128xf32>
    %365 = vector.shape_cast %359 : vector<8x128xf32> to vector<1x8x128xf32>
    tpu.vector_store %arg8[%362, %c0_159, %c0_160], %365 {strides = array<i32>} : memref<9x8x128xf32, #tpu.memory_space<vmem>>, vector<1x8x128xf32>,
    %c9_i32 = arith.constant 9 : i32
    %c0_161 = arith.constant 0 : index
    %c0_162 = arith.constant 0 : index
    %366 = vector.load %arg5[%c0_161, %c0_162] : memref<128x512xbf16, #tpu.memory_space<vmem>>, vector<128x512xbf16>
    %c0_163 = arith.constant 0 : index
    %c0_164 = arith.constant 0 : index
    %367 = vector.load %arg6[%c0_163, %c0_164] : memref<128x512xbf16, #tpu.memory_space<vmem>>, vector<128x512xbf16>
    %c0_165 = arith.constant 0 : index
    %c0_166 = arith.constant 0 : index
    %368 = vector.load %arg7[%c0_165, %c0_166] : memref<1x512xf32, #tpu.memory_space<vmem>>, vector<1x512xf32>
    %c0_167 = arith.constant 0 : index
    %c0_168 = arith.constant 0 : index
    %c0_169 = arith.constant 0 : index
    %369 = vector.load %arg8[%c0_167, %c0_168, %c0_169] : memref<9x8x128xf32, #tpu.memory_space<vmem>>, vector<9x8x128xf32>
    %370 = vector.shape_cast %369 : vector<9x8x128xf32> to vector<72x128xf32>
    %371 = arith.truncf %370 : vector<72x128xf32> to vector<72x128xbf16>
    %cst_170 = arith.constant dense<0.000000e+00> : vector<72x512xf32>
    %372 = tpu.matmul %371, %366, %cst_170 {dimension_numbers = #tpu.dot_dimension_numbers<[1], [0], [0], [1], [0, 0, 1, 1], [], []>} : vector<72x128xbf16>, vector<128x512xbf16>, vector<72x512xf32> -> vector<72x512xf32>
    %373 = vector.broadcast %368 : vector<1x512xf32> to vector<72x512xf32>
    %374 = arith.addf %372, %373 : vector<72x512xf32>
    %375 = vector.shape_cast %374 : vector<72x512xf32> to vector<9x8x512xf32>
    %c0_171 = arith.constant 0 : index
    %c0_172 = arith.constant 0 : index
    %c0_173 = arith.constant 0 : index
    %376 = vector.load %arg9[%c0_171, %c0_172, %c0_173] : memref<9x8x512xf32, #tpu.memory_space<vmem>>, vector<9x8x512xf32>
    tpu.vector_store %arg9[%c0_171, %c0_172, %c0_173], %375 {strides = array<i32>} : memref<9x8x512xf32, #tpu.memory_space<vmem>>, vector<9x8x512xf32>,
    %cst_174 = arith.constant 0.000000e+00 : f32
    %377 = vector.broadcast %cst_174 : f32 to vector<8x128xf32>
    %c0_175 = arith.constant 0 : index
    %c0_176 = arith.constant 0 : index
    %378 = vector.load %arg10[%c0_175, %c0_176] : memref<8x128xf32, #tpu.memory_space<vmem>>, vector<8x128xf32>
    tpu.vector_store %arg10[%c0_175, %c0_176], %377 {strides = array<i32>} : memref<8x128xf32, #tpu.memory_space<vmem>>, vector<8x128xf32>,
    %cst_177 = arith.constant 0.000000e+00 : f32
    %379 = vector.broadcast %cst_177 : f32 to vector<8x128xf32>
    %c0_178 = arith.constant 0 : index
    %c0_179 = arith.constant 0 : index
    %380 = vector.load %arg11[%c0_178, %c0_179] : memref<8x128xf32, #tpu.memory_space<vmem>>, vector<8x128xf32>
    tpu.vector_store %arg11[%c0_178, %c0_179], %379 {strides = array<i32>} : memref<8x128xf32, #tpu.memory_space<vmem>>, vector<8x128xf32>,
    %c0_i32_180 = arith.constant 0 : i32
    %c0_181 = arith.constant 0 : index
    %c0_182 = arith.constant 0 : index
    %381 = vector.load %arg10[%c0_181, %c0_182] : memref<8x128xf32, #tpu.memory_space<vmem>>, vector<8x128xf32>
    %c0_183 = arith.constant 0 : index
    %c0_184 = arith.constant 0 : index
    %382 = vector.load %arg11[%c0_183, %c0_184] : memref<8x128xf32, #tpu.memory_space<vmem>>, vector<8x128xf32>
    %383 = arith.index_cast %c0_i32_180 : i32 to index
    %c0_185 = arith.constant 0 : index
    %c0_186 = arith.constant 0 : index
    %384 = vector.load %arg9[%383, %c0_185, %c0_186] : memref<9x8x512xf32, #tpu.memory_space<vmem>>, vector<1x8x512xf32>
    %385 = vector.shape_cast %384 : vector<1x8x512xf32> to vector<8x512xf32>
    %386 = arith.truncf %381 : vector<8x128xf32> to vector<8x128xbf16>
    %cst_187 = arith.constant dense<0.000000e+00> : vector<8x512xf32>
    %387 = tpu.matmul %386, %367, %cst_187 {dimension_numbers = #tpu.dot_dimension_numbers<[1], [0], [0], [1], [0, 0, 1, 1], [], []>} : vector<8x128xbf16>, vector<128x512xbf16>, vector<8x512xf32> -> vector<8x512xf32>
    %388 = arith.addf %385, %387 : vector<8x512xf32>
    %389 = vector.extract_strided_slice %388 {offsets = [0, 0], sizes = [8, 128], strides = [1, 1]} : vector<8x512xf32> to vector<8x128xf32>
    %390 = arith.negf %389 : vector<8x128xf32>
    %391 = math.exp %390 : vector<8x128xf32>
    %cst_188 = arith.constant 1.000000e+00 : f32
    %392 = vector.broadcast %cst_188 : f32 to vector<8x128xf32>
    %393 = arith.addf %392, %391 : vector<8x128xf32>
    %394 = arith.divf %392, %393 : vector<8x128xf32>
    %395 = vector.extract_strided_slice %388 {offsets = [0, 128], sizes = [8, 128], strides = [1, 1]} : vector<8x512xf32> to vector<8x128xf32>
    %396 = arith.negf %395 : vector<8x128xf32>
    %397 = math.exp %396 : vector<8x128xf32>
    %cst_189 = arith.constant 1.000000e+00 : f32
    %398 = vector.broadcast %cst_189 : f32 to vector<8x128xf32>
    %399 = arith.addf %398, %397 : vector<8x128xf32>
    %400 = arith.divf %398, %399 : vector<8x128xf32>
    %401 = vector.extract_strided_slice %388 {offsets = [0, 256], sizes = [8, 128], strides = [1, 1]} : vector<8x512xf32> to vector<8x128xf32>
    %402 = math.tanh %401 : vector<8x128xf32>
    %403 = vector.extract_strided_slice %388 {offsets = [0, 384], sizes = [8, 128], strides = [1, 1]} : vector<8x512xf32> to vector<8x128xf32>
    %404 = arith.negf %403 : vector<8x128xf32>
    %405 = math.exp %404 : vector<8x128xf32>
    %cst_190 = arith.constant 1.000000e+00 : f32
    %406 = vector.broadcast %cst_190 : f32 to vector<8x128xf32>
    %407 = arith.addf %406, %405 : vector<8x128xf32>
    %408 = arith.divf %406, %407 : vector<8x128xf32>
    %409 = arith.mulf %400, %382 : vector<8x128xf32>
    %410 = arith.mulf %394, %402 : vector<8x128xf32>
    %411 = arith.addf %409, %410 : vector<8x128xf32>
    %412 = math.tanh %411 : vector<8x128xf32>
    %413 = arith.mulf %408, %412 : vector<8x128xf32>
    %c0_191 = arith.constant 0 : index
    %c0_192 = arith.constant 0 : index
    %414 = vector.load %arg11[%c0_191, %c0_192] : memref<8x128xf32, #tpu.memory_space<vmem>>, vector<8x128xf32>
    tpu.vector_store %arg11[%c0_191, %c0_192], %411 {strides = array<i32>} : memref<8x128xf32, #tpu.memory_space<vmem>>, vector<8x128xf32>,
    %c0_193 = arith.constant 0 : index
    %c0_194 = arith.constant 0 : index
    %415 = vector.load %arg10[%c0_193, %c0_194] : memref<8x128xf32, #tpu.memory_space<vmem>>, vector<8x128xf32>
    tpu.vector_store %arg10[%c0_193, %c0_194], %413 {strides = array<i32>} : memref<8x128xf32, #tpu.memory_space<vmem>>, vector<8x128xf32>,
    %416 = arith.index_cast %c0_i32_180 : i32 to index
    %c0_195 = arith.constant 0 : index
    %c0_196 = arith.constant 0 : index
    %417 = vector.load %arg8[%416, %c0_195, %c0_196] : memref<9x8x128xf32, #tpu.memory_space<vmem>>, vector<1x8x128xf32>
    %418 = vector.shape_cast %417 : vector<1x8x128xf32> to vector<8x128xf32>
    %419 = vector.shape_cast %413 : vector<8x128xf32> to vector<1x8x128xf32>
    tpu.vector_store %arg8[%416, %c0_195, %c0_196], %419 {strides = array<i32>} : memref<9x8x128xf32, #tpu.memory_space<vmem>>, vector<1x8x128xf32>,
    %c1_i32_197 = arith.constant 1 : i32
    %c0_198 = arith.constant 0 : index
    %c0_199 = arith.constant 0 : index
    %420 = vector.load %arg10[%c0_198, %c0_199] : memref<8x128xf32, #tpu.memory_space<vmem>>, vector<8x128xf32>
    %c0_200 = arith.constant 0 : index
    %c0_201 = arith.constant 0 : index
    %421 = vector.load %arg11[%c0_200, %c0_201] : memref<8x128xf32, #tpu.memory_space<vmem>>, vector<8x128xf32>
    %422 = arith.index_cast %c1_i32_197 : i32 to index
    %c0_202 = arith.constant 0 : index
    %c0_203 = arith.constant 0 : index
    %423 = vector.load %arg9[%422, %c0_202, %c0_203] : memref<9x8x512xf32, #tpu.memory_space<vmem>>, vector<1x8x512xf32>
    %424 = vector.shape_cast %423 : vector<1x8x512xf32> to vector<8x512xf32>
    %425 = arith.truncf %420 : vector<8x128xf32> to vector<8x128xbf16>
    %cst_204 = arith.constant dense<0.000000e+00> : vector<8x512xf32>
    %426 = tpu.matmul %425, %367, %cst_204 {dimension_numbers = #tpu.dot_dimension_numbers<[1], [0], [0], [1], [0, 0, 1, 1], [], []>} : vector<8x128xbf16>, vector<128x512xbf16>, vector<8x512xf32> -> vector<8x512xf32>
    %427 = arith.addf %424, %426 : vector<8x512xf32>
    %428 = vector.extract_strided_slice %427 {offsets = [0, 0], sizes = [8, 128], strides = [1, 1]} : vector<8x512xf32> to vector<8x128xf32>
    %429 = arith.negf %428 : vector<8x128xf32>
    %430 = math.exp %429 : vector<8x128xf32>
    %cst_205 = arith.constant 1.000000e+00 : f32
    %431 = vector.broadcast %cst_205 : f32 to vector<8x128xf32>
    %432 = arith.addf %431, %430 : vector<8x128xf32>
    %433 = arith.divf %431, %432 : vector<8x128xf32>
    %434 = vector.extract_strided_slice %427 {offsets = [0, 128], sizes = [8, 128], strides = [1, 1]} : vector<8x512xf32> to vector<8x128xf32>
    %435 = arith.negf %434 : vector<8x128xf32>
    %436 = math.exp %435 : vector<8x128xf32>
    %cst_206 = arith.constant 1.000000e+00 : f32
    %437 = vector.broadcast %cst_206 : f32 to vector<8x128xf32>
    %438 = arith.addf %437, %436 : vector<8x128xf32>
    %439 = arith.divf %437, %438 : vector<8x128xf32>
    %440 = vector.extract_strided_slice %427 {offsets = [0, 256], sizes = [8, 128], strides = [1, 1]} : vector<8x512xf32> to vector<8x128xf32>
    %441 = math.tanh %440 : vector<8x128xf32>
    %442 = vector.extract_strided_slice %427 {offsets = [0, 384], sizes = [8, 128], strides = [1, 1]} : vector<8x512xf32> to vector<8x128xf32>
    %443 = arith.negf %442 : vector<8x128xf32>
    %444 = math.exp %443 : vector<8x128xf32>
    %cst_207 = arith.constant 1.000000e+00 : f32
    %445 = vector.broadcast %cst_207 : f32 to vector<8x128xf32>
    %446 = arith.addf %445, %444 : vector<8x128xf32>
    %447 = arith.divf %445, %446 : vector<8x128xf32>
    %448 = arith.mulf %439, %421 : vector<8x128xf32>
    %449 = arith.mulf %433, %441 : vector<8x128xf32>
    %450 = arith.addf %448, %449 : vector<8x128xf32>
    %451 = math.tanh %450 : vector<8x128xf32>
    %452 = arith.mulf %447, %451 : vector<8x128xf32>
    %c0_208 = arith.constant 0 : index
    %c0_209 = arith.constant 0 : index
    %453 = vector.load %arg11[%c0_208, %c0_209] : memref<8x128xf32, #tpu.memory_space<vmem>>, vector<8x128xf32>
    tpu.vector_store %arg11[%c0_208, %c0_209], %450 {strides = array<i32>} : memref<8x128xf32, #tpu.memory_space<vmem>>, vector<8x128xf32>,
    %c0_210 = arith.constant 0 : index
    %c0_211 = arith.constant 0 : index
    %454 = vector.load %arg10[%c0_210, %c0_211] : memref<8x128xf32, #tpu.memory_space<vmem>>, vector<8x128xf32>
    tpu.vector_store %arg10[%c0_210, %c0_211], %452 {strides = array<i32>} : memref<8x128xf32, #tpu.memory_space<vmem>>, vector<8x128xf32>,
    %455 = arith.index_cast %c1_i32_197 : i32 to index
    %c0_212 = arith.constant 0 : index
    %c0_213 = arith.constant 0 : index
    %456 = vector.load %arg8[%455, %c0_212, %c0_213] : memref<9x8x128xf32, #tpu.memory_space<vmem>>, vector<1x8x128xf32>
    %457 = vector.shape_cast %456 : vector<1x8x128xf32> to vector<8x128xf32>
    %458 = vector.shape_cast %452 : vector<8x128xf32> to vector<1x8x128xf32>
    tpu.vector_store %arg8[%455, %c0_212, %c0_213], %458 {strides = array<i32>} : memref<9x8x128xf32, #tpu.memory_space<vmem>>, vector<1x8x128xf32>,
    %c2_i32_214 = arith.constant 2 : i32
    %c0_215 = arith.constant 0 : index
    %c0_216 = arith.constant 0 : index
    %459 = vector.load %arg10[%c0_215, %c0_216] : memref<8x128xf32, #tpu.memory_space<vmem>>, vector<8x128xf32>
    %c0_217 = arith.constant 0 : index
    %c0_218 = arith.constant 0 : index
    %460 = vector.load %arg11[%c0_217, %c0_218] : memref<8x128xf32, #tpu.memory_space<vmem>>, vector<8x128xf32>
    %461 = arith.index_cast %c2_i32_214 : i32 to index
    %c0_219 = arith.constant 0 : index
    %c0_220 = arith.constant 0 : index
    %462 = vector.load %arg9[%461, %c0_219, %c0_220] : memref<9x8x512xf32, #tpu.memory_space<vmem>>, vector<1x8x512xf32>
    %463 = vector.shape_cast %462 : vector<1x8x512xf32> to vector<8x512xf32>
    %464 = arith.truncf %459 : vector<8x128xf32> to vector<8x128xbf16>
    %cst_221 = arith.constant dense<0.000000e+00> : vector<8x512xf32>
    %465 = tpu.matmul %464, %367, %cst_221 {dimension_numbers = #tpu.dot_dimension_numbers<[1], [0], [0], [1], [0, 0, 1, 1], [], []>} : vector<8x128xbf16>, vector<128x512xbf16>, vector<8x512xf32> -> vector<8x512xf32>
    %466 = arith.addf %463, %465 : vector<8x512xf32>
    %467 = vector.extract_strided_slice %466 {offsets = [0, 0], sizes = [8, 128], strides = [1, 1]} : vector<8x512xf32> to vector<8x128xf32>
    %468 = arith.negf %467 : vector<8x128xf32>
    %469 = math.exp %468 : vector<8x128xf32>
    %cst_222 = arith.constant 1.000000e+00 : f32
    %470 = vector.broadcast %cst_222 : f32 to vector<8x128xf32>
    %471 = arith.addf %470, %469 : vector<8x128xf32>
    %472 = arith.divf %470, %471 : vector<8x128xf32>
    %473 = vector.extract_strided_slice %466 {offsets = [0, 128], sizes = [8, 128], strides = [1, 1]} : vector<8x512xf32> to vector<8x128xf32>
    %474 = arith.negf %473 : vector<8x128xf32>
    %475 = math.exp %474 : vector<8x128xf32>
    %cst_223 = arith.constant 1.000000e+00 : f32
    %476 = vector.broadcast %cst_223 : f32 to vector<8x128xf32>
    %477 = arith.addf %476, %475 : vector<8x128xf32>
    %478 = arith.divf %476, %477 : vector<8x128xf32>
    %479 = vector.extract_strided_slice %466 {offsets = [0, 256], sizes = [8, 128], strides = [1, 1]} : vector<8x512xf32> to vector<8x128xf32>
    %480 = math.tanh %479 : vector<8x128xf32>
    %481 = vector.extract_strided_slice %466 {offsets = [0, 384], sizes = [8, 128], strides = [1, 1]} : vector<8x512xf32> to vector<8x128xf32>
    %482 = arith.negf %481 : vector<8x128xf32>
    %483 = math.exp %482 : vector<8x128xf32>
    %cst_224 = arith.constant 1.000000e+00 : f32
    %484 = vector.broadcast %cst_224 : f32 to vector<8x128xf32>
    %485 = arith.addf %484, %483 : vector<8x128xf32>
    %486 = arith.divf %484, %485 : vector<8x128xf32>
    %487 = arith.mulf %478, %460 : vector<8x128xf32>
    %488 = arith.mulf %472, %480 : vector<8x128xf32>
    %489 = arith.addf %487, %488 : vector<8x128xf32>
    %490 = math.tanh %489 : vector<8x128xf32>
    %491 = arith.mulf %486, %490 : vector<8x128xf32>
    %c0_225 = arith.constant 0 : index
    %c0_226 = arith.constant 0 : index
    %492 = vector.load %arg11[%c0_225, %c0_226] : memref<8x128xf32, #tpu.memory_space<vmem>>, vector<8x128xf32>
    tpu.vector_store %arg11[%c0_225, %c0_226], %489 {strides = array<i32>} : memref<8x128xf32, #tpu.memory_space<vmem>>, vector<8x128xf32>,
    %c0_227 = arith.constant 0 : index
    %c0_228 = arith.constant 0 : index
    %493 = vector.load %arg10[%c0_227, %c0_228] : memref<8x128xf32, #tpu.memory_space<vmem>>, vector<8x128xf32>
    tpu.vector_store %arg10[%c0_227, %c0_228], %491 {strides = array<i32>} : memref<8x128xf32, #tpu.memory_space<vmem>>, vector<8x128xf32>,
    %494 = arith.index_cast %c2_i32_214 : i32 to index
    %c0_229 = arith.constant 0 : index
    %c0_230 = arith.constant 0 : index
    %495 = vector.load %arg8[%494, %c0_229, %c0_230] : memref<9x8x128xf32, #tpu.memory_space<vmem>>, vector<1x8x128xf32>
    %496 = vector.shape_cast %495 : vector<1x8x128xf32> to vector<8x128xf32>
    %497 = vector.shape_cast %491 : vector<8x128xf32> to vector<1x8x128xf32>
    tpu.vector_store %arg8[%494, %c0_229, %c0_230], %497 {strides = array<i32>} : memref<9x8x128xf32, #tpu.memory_space<vmem>>, vector<1x8x128xf32>,
    %c3_i32_231 = arith.constant 3 : i32
    %c0_232 = arith.constant 0 : index
    %c0_233 = arith.constant 0 : index
    %498 = vector.load %arg10[%c0_232, %c0_233] : memref<8x128xf32, #tpu.memory_space<vmem>>, vector<8x128xf32>
    %c0_234 = arith.constant 0 : index
    %c0_235 = arith.constant 0 : index
    %499 = vector.load %arg11[%c0_234, %c0_235] : memref<8x128xf32, #tpu.memory_space<vmem>>, vector<8x128xf32>
    %500 = arith.index_cast %c3_i32_231 : i32 to index
    %c0_236 = arith.constant 0 : index
    %c0_237 = arith.constant 0 : index
    %501 = vector.load %arg9[%500, %c0_236, %c0_237] : memref<9x8x512xf32, #tpu.memory_space<vmem>>, vector<1x8x512xf32>
    %502 = vector.shape_cast %501 : vector<1x8x512xf32> to vector<8x512xf32>
    %503 = arith.truncf %498 : vector<8x128xf32> to vector<8x128xbf16>
    %cst_238 = arith.constant dense<0.000000e+00> : vector<8x512xf32>
    %504 = tpu.matmul %503, %367, %cst_238 {dimension_numbers = #tpu.dot_dimension_numbers<[1], [0], [0], [1], [0, 0, 1, 1], [], []>} : vector<8x128xbf16>, vector<128x512xbf16>, vector<8x512xf32> -> vector<8x512xf32>
    %505 = arith.addf %502, %504 : vector<8x512xf32>
    %506 = vector.extract_strided_slice %505 {offsets = [0, 0], sizes = [8, 128], strides = [1, 1]} : vector<8x512xf32> to vector<8x128xf32>
    %507 = arith.negf %506 : vector<8x128xf32>
    %508 = math.exp %507 : vector<8x128xf32>
    %cst_239 = arith.constant 1.000000e+00 : f32
    %509 = vector.broadcast %cst_239 : f32 to vector<8x128xf32>
    %510 = arith.addf %509, %508 : vector<8x128xf32>
    %511 = arith.divf %509, %510 : vector<8x128xf32>
    %512 = vector.extract_strided_slice %505 {offsets = [0, 128], sizes = [8, 128], strides = [1, 1]} : vector<8x512xf32> to vector<8x128xf32>
    %513 = arith.negf %512 : vector<8x128xf32>
    %514 = math.exp %513 : vector<8x128xf32>
    %cst_240 = arith.constant 1.000000e+00 : f32
    %515 = vector.broadcast %cst_240 : f32 to vector<8x128xf32>
    %516 = arith.addf %515, %514 : vector<8x128xf32>
    %517 = arith.divf %515, %516 : vector<8x128xf32>
    %518 = vector.extract_strided_slice %505 {offsets = [0, 256], sizes = [8, 128], strides = [1, 1]} : vector<8x512xf32> to vector<8x128xf32>
    %519 = math.tanh %518 : vector<8x128xf32>
    %520 = vector.extract_strided_slice %505 {offsets = [0, 384], sizes = [8, 128], strides = [1, 1]} : vector<8x512xf32> to vector<8x128xf32>
    %521 = arith.negf %520 : vector<8x128xf32>
    %522 = math.exp %521 : vector<8x128xf32>
    %cst_241 = arith.constant 1.000000e+00 : f32
    %523 = vector.broadcast %cst_241 : f32 to vector<8x128xf32>
    %524 = arith.addf %523, %522 : vector<8x128xf32>
    %525 = arith.divf %523, %524 : vector<8x128xf32>
    %526 = arith.mulf %517, %499 : vector<8x128xf32>
    %527 = arith.mulf %511, %519 : vector<8x128xf32>
    %528 = arith.addf %526, %527 : vector<8x128xf32>
    %529 = math.tanh %528 : vector<8x128xf32>
    %530 = arith.mulf %525, %529 : vector<8x128xf32>
    %c0_242 = arith.constant 0 : index
    %c0_243 = arith.constant 0 : index
    %531 = vector.load %arg11[%c0_242, %c0_243] : memref<8x128xf32, #tpu.memory_space<vmem>>, vector<8x128xf32>
    tpu.vector_store %arg11[%c0_242, %c0_243], %528 {strides = array<i32>} : memref<8x128xf32, #tpu.memory_space<vmem>>, vector<8x128xf32>,
    %c0_244 = arith.constant 0 : index
    %c0_245 = arith.constant 0 : index
    %532 = vector.load %arg10[%c0_244, %c0_245] : memref<8x128xf32, #tpu.memory_space<vmem>>, vector<8x128xf32>
    tpu.vector_store %arg10[%c0_244, %c0_245], %530 {strides = array<i32>} : memref<8x128xf32, #tpu.memory_space<vmem>>, vector<8x128xf32>,
    %533 = arith.index_cast %c3_i32_231 : i32 to index
    %c0_246 = arith.constant 0 : index
    %c0_247 = arith.constant 0 : index
    %534 = vector.load %arg8[%533, %c0_246, %c0_247] : memref<9x8x128xf32, #tpu.memory_space<vmem>>, vector<1x8x128xf32>
    %535 = vector.shape_cast %534 : vector<1x8x128xf32> to vector<8x128xf32>
    %536 = vector.shape_cast %530 : vector<8x128xf32> to vector<1x8x128xf32>
    tpu.vector_store %arg8[%533, %c0_246, %c0_247], %536 {strides = array<i32>} : memref<9x8x128xf32, #tpu.memory_space<vmem>>, vector<1x8x128xf32>,
    %c4_i32_248 = arith.constant 4 : i32
    %c0_249 = arith.constant 0 : index
    %c0_250 = arith.constant 0 : index
    %537 = vector.load %arg10[%c0_249, %c0_250] : memref<8x128xf32, #tpu.memory_space<vmem>>, vector<8x128xf32>
    %c0_251 = arith.constant 0 : index
    %c0_252 = arith.constant 0 : index
    %538 = vector.load %arg11[%c0_251, %c0_252] : memref<8x128xf32, #tpu.memory_space<vmem>>, vector<8x128xf32>
    %539 = arith.index_cast %c4_i32_248 : i32 to index
    %c0_253 = arith.constant 0 : index
    %c0_254 = arith.constant 0 : index
    %540 = vector.load %arg9[%539, %c0_253, %c0_254] : memref<9x8x512xf32, #tpu.memory_space<vmem>>, vector<1x8x512xf32>
    %541 = vector.shape_cast %540 : vector<1x8x512xf32> to vector<8x512xf32>
    %542 = arith.truncf %537 : vector<8x128xf32> to vector<8x128xbf16>
    %cst_255 = arith.constant dense<0.000000e+00> : vector<8x512xf32>
    %543 = tpu.matmul %542, %367, %cst_255 {dimension_numbers = #tpu.dot_dimension_numbers<[1], [0], [0], [1], [0, 0, 1, 1], [], []>} : vector<8x128xbf16>, vector<128x512xbf16>, vector<8x512xf32> -> vector<8x512xf32>
    %544 = arith.addf %541, %543 : vector<8x512xf32>
    %545 = vector.extract_strided_slice %544 {offsets = [0, 0], sizes = [8, 128], strides = [1, 1]} : vector<8x512xf32> to vector<8x128xf32>
    %546 = arith.negf %545 : vector<8x128xf32>
    %547 = math.exp %546 : vector<8x128xf32>
    %cst_256 = arith.constant 1.000000e+00 : f32
    %548 = vector.broadcast %cst_256 : f32 to vector<8x128xf32>
    %549 = arith.addf %548, %547 : vector<8x128xf32>
    %550 = arith.divf %548, %549 : vector<8x128xf32>
    %551 = vector.extract_strided_slice %544 {offsets = [0, 128], sizes = [8, 128], strides = [1, 1]} : vector<8x512xf32> to vector<8x128xf32>
    %552 = arith.negf %551 : vector<8x128xf32>
    %553 = math.exp %552 : vector<8x128xf32>
    %cst_257 = arith.constant 1.000000e+00 : f32
    %554 = vector.broadcast %cst_257 : f32 to vector<8x128xf32>
    %555 = arith.addf %554, %553 : vector<8x128xf32>
    %556 = arith.divf %554, %555 : vector<8x128xf32>
    %557 = vector.extract_strided_slice %544 {offsets = [0, 256], sizes = [8, 128], strides = [1, 1]} : vector<8x512xf32> to vector<8x128xf32>
    %558 = math.tanh %557 : vector<8x128xf32>
    %559 = vector.extract_strided_slice %544 {offsets = [0, 384], sizes = [8, 128], strides = [1, 1]} : vector<8x512xf32> to vector<8x128xf32>
    %560 = arith.negf %559 : vector<8x128xf32>
    %561 = math.exp %560 : vector<8x128xf32>
    %cst_258 = arith.constant 1.000000e+00 : f32
    %562 = vector.broadcast %cst_258 : f32 to vector<8x128xf32>
    %563 = arith.addf %562, %561 : vector<8x128xf32>
    %564 = arith.divf %562, %563 : vector<8x128xf32>
    %565 = arith.mulf %556, %538 : vector<8x128xf32>
    %566 = arith.mulf %550, %558 : vector<8x128xf32>
    %567 = arith.addf %565, %566 : vector<8x128xf32>
    %568 = math.tanh %567 : vector<8x128xf32>
    %569 = arith.mulf %564, %568 : vector<8x128xf32>
    %c0_259 = arith.constant 0 : index
    %c0_260 = arith.constant 0 : index
    %570 = vector.load %arg11[%c0_259, %c0_260] : memref<8x128xf32, #tpu.memory_space<vmem>>, vector<8x128xf32>
    tpu.vector_store %arg11[%c0_259, %c0_260], %567 {strides = array<i32>} : memref<8x128xf32, #tpu.memory_space<vmem>>, vector<8x128xf32>,
    %c0_261 = arith.constant 0 : index
    %c0_262 = arith.constant 0 : index
    %571 = vector.load %arg10[%c0_261, %c0_262] : memref<8x128xf32, #tpu.memory_space<vmem>>, vector<8x128xf32>
    tpu.vector_store %arg10[%c0_261, %c0_262], %569 {strides = array<i32>} : memref<8x128xf32, #tpu.memory_space<vmem>>, vector<8x128xf32>,
    %572 = arith.index_cast %c4_i32_248 : i32 to index
    %c0_263 = arith.constant 0 : index
    %c0_264 = arith.constant 0 : index
    %573 = vector.load %arg8[%572, %c0_263, %c0_264] : memref<9x8x128xf32, #tpu.memory_space<vmem>>, vector<1x8x128xf32>
    %574 = vector.shape_cast %573 : vector<1x8x128xf32> to vector<8x128xf32>
    %575 = vector.shape_cast %569 : vector<8x128xf32> to vector<1x8x128xf32>
    tpu.vector_store %arg8[%572, %c0_263, %c0_264], %575 {strides = array<i32>} : memref<9x8x128xf32, #tpu.memory_space<vmem>>, vector<1x8x128xf32>,
    %c5_i32_265 = arith.constant 5 : i32
    %c0_266 = arith.constant 0 : index
    %c0_267 = arith.constant 0 : index
    %576 = vector.load %arg10[%c0_266, %c0_267] : memref<8x128xf32, #tpu.memory_space<vmem>>, vector<8x128xf32>
    %c0_268 = arith.constant 0 : index
    %c0_269 = arith.constant 0 : index
    %577 = vector.load %arg11[%c0_268, %c0_269] : memref<8x128xf32, #tpu.memory_space<vmem>>, vector<8x128xf32>
    %578 = arith.index_cast %c5_i32_265 : i32 to index
    %c0_270 = arith.constant 0 : index
    %c0_271 = arith.constant 0 : index
    %579 = vector.load %arg9[%578, %c0_270, %c0_271] : memref<9x8x512xf32, #tpu.memory_space<vmem>>, vector<1x8x512xf32>
    %580 = vector.shape_cast %579 : vector<1x8x512xf32> to vector<8x512xf32>
    %581 = arith.truncf %576 : vector<8x128xf32> to vector<8x128xbf16>
    %cst_272 = arith.constant dense<0.000000e+00> : vector<8x512xf32>
    %582 = tpu.matmul %581, %367, %cst_272 {dimension_numbers = #tpu.dot_dimension_numbers<[1], [0], [0], [1], [0, 0, 1, 1], [], []>} : vector<8x128xbf16>, vector<128x512xbf16>, vector<8x512xf32> -> vector<8x512xf32>
    %583 = arith.addf %580, %582 : vector<8x512xf32>
    %584 = vector.extract_strided_slice %583 {offsets = [0, 0], sizes = [8, 128], strides = [1, 1]} : vector<8x512xf32> to vector<8x128xf32>
    %585 = arith.negf %584 : vector<8x128xf32>
    %586 = math.exp %585 : vector<8x128xf32>
    %cst_273 = arith.constant 1.000000e+00 : f32
    %587 = vector.broadcast %cst_273 : f32 to vector<8x128xf32>
    %588 = arith.addf %587, %586 : vector<8x128xf32>
    %589 = arith.divf %587, %588 : vector<8x128xf32>
    %590 = vector.extract_strided_slice %583 {offsets = [0, 128], sizes = [8, 128], strides = [1, 1]} : vector<8x512xf32> to vector<8x128xf32>
    %591 = arith.negf %590 : vector<8x128xf32>
    %592 = math.exp %591 : vector<8x128xf32>
    %cst_274 = arith.constant 1.000000e+00 : f32
    %593 = vector.broadcast %cst_274 : f32 to vector<8x128xf32>
    %594 = arith.addf %593, %592 : vector<8x128xf32>
    %595 = arith.divf %593, %594 : vector<8x128xf32>
    %596 = vector.extract_strided_slice %583 {offsets = [0, 256], sizes = [8, 128], strides = [1, 1]} : vector<8x512xf32> to vector<8x128xf32>
    %597 = math.tanh %596 : vector<8x128xf32>
    %598 = vector.extract_strided_slice %583 {offsets = [0, 384], sizes = [8, 128], strides = [1, 1]} : vector<8x512xf32> to vector<8x128xf32>
    %599 = arith.negf %598 : vector<8x128xf32>
    %600 = math.exp %599 : vector<8x128xf32>
    %cst_275 = arith.constant 1.000000e+00 : f32
    %601 = vector.broadcast %cst_275 : f32 to vector<8x128xf32>
    %602 = arith.addf %601, %600 : vector<8x128xf32>
    %603 = arith.divf %601, %602 : vector<8x128xf32>
    %604 = arith.mulf %595, %577 : vector<8x128xf32>
    %605 = arith.mulf %589, %597 : vector<8x128xf32>
    %606 = arith.addf %604, %605 : vector<8x128xf32>
    %607 = math.tanh %606 : vector<8x128xf32>
    %608 = arith.mulf %603, %607 : vector<8x128xf32>
    %c0_276 = arith.constant 0 : index
    %c0_277 = arith.constant 0 : index
    %609 = vector.load %arg11[%c0_276, %c0_277] : memref<8x128xf32, #tpu.memory_space<vmem>>, vector<8x128xf32>
    tpu.vector_store %arg11[%c0_276, %c0_277], %606 {strides = array<i32>} : memref<8x128xf32, #tpu.memory_space<vmem>>, vector<8x128xf32>,
    %c0_278 = arith.constant 0 : index
    %c0_279 = arith.constant 0 : index
    %610 = vector.load %arg10[%c0_278, %c0_279] : memref<8x128xf32, #tpu.memory_space<vmem>>, vector<8x128xf32>
    tpu.vector_store %arg10[%c0_278, %c0_279], %608 {strides = array<i32>} : memref<8x128xf32, #tpu.memory_space<vmem>>, vector<8x128xf32>,
    %611 = arith.index_cast %c5_i32_265 : i32 to index
    %c0_280 = arith.constant 0 : index
    %c0_281 = arith.constant 0 : index
    %612 = vector.load %arg8[%611, %c0_280, %c0_281] : memref<9x8x128xf32, #tpu.memory_space<vmem>>, vector<1x8x128xf32>
    %613 = vector.shape_cast %612 : vector<1x8x128xf32> to vector<8x128xf32>
    %614 = vector.shape_cast %608 : vector<8x128xf32> to vector<1x8x128xf32>
    tpu.vector_store %arg8[%611, %c0_280, %c0_281], %614 {strides = array<i32>} : memref<9x8x128xf32, #tpu.memory_space<vmem>>, vector<1x8x128xf32>,
    %c6_i32_282 = arith.constant 6 : i32
    %c0_283 = arith.constant 0 : index
    %c0_284 = arith.constant 0 : index
    %615 = vector.load %arg10[%c0_283, %c0_284] : memref<8x128xf32, #tpu.memory_space<vmem>>, vector<8x128xf32>
    %c0_285 = arith.constant 0 : index
    %c0_286 = arith.constant 0 : index
    %616 = vector.load %arg11[%c0_285, %c0_286] : memref<8x128xf32, #tpu.memory_space<vmem>>, vector<8x128xf32>
    %617 = arith.index_cast %c6_i32_282 : i32 to index
    %c0_287 = arith.constant 0 : index
    %c0_288 = arith.constant 0 : index
    %618 = vector.load %arg9[%617, %c0_287, %c0_288] : memref<9x8x512xf32, #tpu.memory_space<vmem>>, vector<1x8x512xf32>
    %619 = vector.shape_cast %618 : vector<1x8x512xf32> to vector<8x512xf32>
    %620 = arith.truncf %615 : vector<8x128xf32> to vector<8x128xbf16>
    %cst_289 = arith.constant dense<0.000000e+00> : vector<8x512xf32>
    %621 = tpu.matmul %620, %367, %cst_289 {dimension_numbers = #tpu.dot_dimension_numbers<[1], [0], [0], [1], [0, 0, 1, 1], [], []>} : vector<8x128xbf16>, vector<128x512xbf16>, vector<8x512xf32> -> vector<8x512xf32>
    %622 = arith.addf %619, %621 : vector<8x512xf32>
    %623 = vector.extract_strided_slice %622 {offsets = [0, 0], sizes = [8, 128], strides = [1, 1]} : vector<8x512xf32> to vector<8x128xf32>
    %624 = arith.negf %623 : vector<8x128xf32>
    %625 = math.exp %624 : vector<8x128xf32>
    %cst_290 = arith.constant 1.000000e+00 : f32
    %626 = vector.broadcast %cst_290 : f32 to vector<8x128xf32>
    %627 = arith.addf %626, %625 : vector<8x128xf32>
    %628 = arith.divf %626, %627 : vector<8x128xf32>
    %629 = vector.extract_strided_slice %622 {offsets = [0, 128], sizes = [8, 128], strides = [1, 1]} : vector<8x512xf32> to vector<8x128xf32>
    %630 = arith.negf %629 : vector<8x128xf32>
    %631 = math.exp %630 : vector<8x128xf32>
    %cst_291 = arith.constant 1.000000e+00 : f32
    %632 = vector.broadcast %cst_291 : f32 to vector<8x128xf32>
    %633 = arith.addf %632, %631 : vector<8x128xf32>
    %634 = arith.divf %632, %633 : vector<8x128xf32>
    %635 = vector.extract_strided_slice %622 {offsets = [0, 256], sizes = [8, 128], strides = [1, 1]} : vector<8x512xf32> to vector<8x128xf32>
    %636 = math.tanh %635 : vector<8x128xf32>
    %637 = vector.extract_strided_slice %622 {offsets = [0, 384], sizes = [8, 128], strides = [1, 1]} : vector<8x512xf32> to vector<8x128xf32>
    %638 = arith.negf %637 : vector<8x128xf32>
    %639 = math.exp %638 : vector<8x128xf32>
    %cst_292 = arith.constant 1.000000e+00 : f32
    %640 = vector.broadcast %cst_292 : f32 to vector<8x128xf32>
    %641 = arith.addf %640, %639 : vector<8x128xf32>
    %642 = arith.divf %640, %641 : vector<8x128xf32>
    %643 = arith.mulf %634, %616 : vector<8x128xf32>
    %644 = arith.mulf %628, %636 : vector<8x128xf32>
    %645 = arith.addf %643, %644 : vector<8x128xf32>
    %646 = math.tanh %645 : vector<8x128xf32>
    %647 = arith.mulf %642, %646 : vector<8x128xf32>
    %c0_293 = arith.constant 0 : index
    %c0_294 = arith.constant 0 : index
    %648 = vector.load %arg11[%c0_293, %c0_294] : memref<8x128xf32, #tpu.memory_space<vmem>>, vector<8x128xf32>
    tpu.vector_store %arg11[%c0_293, %c0_294], %645 {strides = array<i32>} : memref<8x128xf32, #tpu.memory_space<vmem>>, vector<8x128xf32>,
    %c0_295 = arith.constant 0 : index
    %c0_296 = arith.constant 0 : index
    %649 = vector.load %arg10[%c0_295, %c0_296] : memref<8x128xf32, #tpu.memory_space<vmem>>, vector<8x128xf32>
    tpu.vector_store %arg10[%c0_295, %c0_296], %647 {strides = array<i32>} : memref<8x128xf32, #tpu.memory_space<vmem>>, vector<8x128xf32>,
    %650 = arith.index_cast %c6_i32_282 : i32 to index
    %c0_297 = arith.constant 0 : index
    %c0_298 = arith.constant 0 : index
    %651 = vector.load %arg8[%650, %c0_297, %c0_298] : memref<9x8x128xf32, #tpu.memory_space<vmem>>, vector<1x8x128xf32>
    %652 = vector.shape_cast %651 : vector<1x8x128xf32> to vector<8x128xf32>
    %653 = vector.shape_cast %647 : vector<8x128xf32> to vector<1x8x128xf32>
    tpu.vector_store %arg8[%650, %c0_297, %c0_298], %653 {strides = array<i32>} : memref<9x8x128xf32, #tpu.memory_space<vmem>>, vector<1x8x128xf32>,
    %c7_i32_299 = arith.constant 7 : i32
    %c0_300 = arith.constant 0 : index
    %c0_301 = arith.constant 0 : index
    %654 = vector.load %arg10[%c0_300, %c0_301] : memref<8x128xf32, #tpu.memory_space<vmem>>, vector<8x128xf32>
    %c0_302 = arith.constant 0 : index
    %c0_303 = arith.constant 0 : index
    %655 = vector.load %arg11[%c0_302, %c0_303] : memref<8x128xf32, #tpu.memory_space<vmem>>, vector<8x128xf32>
    %656 = arith.index_cast %c7_i32_299 : i32 to index
    %c0_304 = arith.constant 0 : index
    %c0_305 = arith.constant 0 : index
    %657 = vector.load %arg9[%656, %c0_304, %c0_305] : memref<9x8x512xf32, #tpu.memory_space<vmem>>, vector<1x8x512xf32>
    %658 = vector.shape_cast %657 : vector<1x8x512xf32> to vector<8x512xf32>
    %659 = arith.truncf %654 : vector<8x128xf32> to vector<8x128xbf16>
    %cst_306 = arith.constant dense<0.000000e+00> : vector<8x512xf32>
    %660 = tpu.matmul %659, %367, %cst_306 {dimension_numbers = #tpu.dot_dimension_numbers<[1], [0], [0], [1], [0, 0, 1, 1], [], []>} : vector<8x128xbf16>, vector<128x512xbf16>, vector<8x512xf32> -> vector<8x512xf32>
    %661 = arith.addf %658, %660 : vector<8x512xf32>
    %662 = vector.extract_strided_slice %661 {offsets = [0, 0], sizes = [8, 128], strides = [1, 1]} : vector<8x512xf32> to vector<8x128xf32>
    %663 = arith.negf %662 : vector<8x128xf32>
    %664 = math.exp %663 : vector<8x128xf32>
    %cst_307 = arith.constant 1.000000e+00 : f32
    %665 = vector.broadcast %cst_307 : f32 to vector<8x128xf32>
    %666 = arith.addf %665, %664 : vector<8x128xf32>
    %667 = arith.divf %665, %666 : vector<8x128xf32>
    %668 = vector.extract_strided_slice %661 {offsets = [0, 128], sizes = [8, 128], strides = [1, 1]} : vector<8x512xf32> to vector<8x128xf32>
    %669 = arith.negf %668 : vector<8x128xf32>
    %670 = math.exp %669 : vector<8x128xf32>
    %cst_308 = arith.constant 1.000000e+00 : f32
    %671 = vector.broadcast %cst_308 : f32 to vector<8x128xf32>
    %672 = arith.addf %671, %670 : vector<8x128xf32>
    %673 = arith.divf %671, %672 : vector<8x128xf32>
    %674 = vector.extract_strided_slice %661 {offsets = [0, 256], sizes = [8, 128], strides = [1, 1]} : vector<8x512xf32> to vector<8x128xf32>
    %675 = math.tanh %674 : vector<8x128xf32>
    %676 = vector.extract_strided_slice %661 {offsets = [0, 384], sizes = [8, 128], strides = [1, 1]} : vector<8x512xf32> to vector<8x128xf32>
    %677 = arith.negf %676 : vector<8x128xf32>
    %678 = math.exp %677 : vector<8x128xf32>
    %cst_309 = arith.constant 1.000000e+00 : f32
    %679 = vector.broadcast %cst_309 : f32 to vector<8x128xf32>
    %680 = arith.addf %679, %678 : vector<8x128xf32>
    %681 = arith.divf %679, %680 : vector<8x128xf32>
    %682 = arith.mulf %673, %655 : vector<8x128xf32>
    %683 = arith.mulf %667, %675 : vector<8x128xf32>
    %684 = arith.addf %682, %683 : vector<8x128xf32>
    %685 = math.tanh %684 : vector<8x128xf32>
    %686 = arith.mulf %681, %685 : vector<8x128xf32>
    %c0_310 = arith.constant 0 : index
    %c0_311 = arith.constant 0 : index
    %687 = vector.load %arg11[%c0_310, %c0_311] : memref<8x128xf32, #tpu.memory_space<vmem>>, vector<8x128xf32>
    tpu.vector_store %arg11[%c0_310, %c0_311], %684 {strides = array<i32>} : memref<8x128xf32, #tpu.memory_space<vmem>>, vector<8x128xf32>,
    %c0_312 = arith.constant 0 : index
    %c0_313 = arith.constant 0 : index
    %688 = vector.load %arg10[%c0_312, %c0_313] : memref<8x128xf32, #tpu.memory_space<vmem>>, vector<8x128xf32>
    tpu.vector_store %arg10[%c0_312, %c0_313], %686 {strides = array<i32>} : memref<8x128xf32, #tpu.memory_space<vmem>>, vector<8x128xf32>,
    %689 = arith.index_cast %c7_i32_299 : i32 to index
    %c0_314 = arith.constant 0 : index
    %c0_315 = arith.constant 0 : index
    %690 = vector.load %arg8[%689, %c0_314, %c0_315] : memref<9x8x128xf32, #tpu.memory_space<vmem>>, vector<1x8x128xf32>
    %691 = vector.shape_cast %690 : vector<1x8x128xf32> to vector<8x128xf32>
    %692 = vector.shape_cast %686 : vector<8x128xf32> to vector<1x8x128xf32>
    tpu.vector_store %arg8[%689, %c0_314, %c0_315], %692 {strides = array<i32>} : memref<9x8x128xf32, #tpu.memory_space<vmem>>, vector<1x8x128xf32>,
    %c8_i32_316 = arith.constant 8 : i32
    %c0_317 = arith.constant 0 : index
    %c0_318 = arith.constant 0 : index
    %693 = vector.load %arg10[%c0_317, %c0_318] : memref<8x128xf32, #tpu.memory_space<vmem>>, vector<8x128xf32>
    %c0_319 = arith.constant 0 : index
    %c0_320 = arith.constant 0 : index
    %694 = vector.load %arg11[%c0_319, %c0_320] : memref<8x128xf32, #tpu.memory_space<vmem>>, vector<8x128xf32>
    %695 = arith.index_cast %c8_i32_316 : i32 to index
    %c0_321 = arith.constant 0 : index
    %c0_322 = arith.constant 0 : index
    %696 = vector.load %arg9[%695, %c0_321, %c0_322] : memref<9x8x512xf32, #tpu.memory_space<vmem>>, vector<1x8x512xf32>
    %697 = vector.shape_cast %696 : vector<1x8x512xf32> to vector<8x512xf32>
    %698 = arith.truncf %693 : vector<8x128xf32> to vector<8x128xbf16>
    %cst_323 = arith.constant dense<0.000000e+00> : vector<8x512xf32>
    %699 = tpu.matmul %698, %367, %cst_323 {dimension_numbers = #tpu.dot_dimension_numbers<[1], [0], [0], [1], [0, 0, 1, 1], [], []>} : vector<8x128xbf16>, vector<128x512xbf16>, vector<8x512xf32> -> vector<8x512xf32>
    %700 = arith.addf %697, %699 : vector<8x512xf32>
    %701 = vector.extract_strided_slice %700 {offsets = [0, 0], sizes = [8, 128], strides = [1, 1]} : vector<8x512xf32> to vector<8x128xf32>
    %702 = arith.negf %701 : vector<8x128xf32>
    %703 = math.exp %702 : vector<8x128xf32>
    %cst_324 = arith.constant 1.000000e+00 : f32
    %704 = vector.broadcast %cst_324 : f32 to vector<8x128xf32>
    %705 = arith.addf %704, %703 : vector<8x128xf32>
    %706 = arith.divf %704, %705 : vector<8x128xf32>
    %707 = vector.extract_strided_slice %700 {offsets = [0, 128], sizes = [8, 128], strides = [1, 1]} : vector<8x512xf32> to vector<8x128xf32>
    %708 = arith.negf %707 : vector<8x128xf32>
    %709 = math.exp %708 : vector<8x128xf32>
    %cst_325 = arith.constant 1.000000e+00 : f32
    %710 = vector.broadcast %cst_325 : f32 to vector<8x128xf32>
    %711 = arith.addf %710, %709 : vector<8x128xf32>
    %712 = arith.divf %710, %711 : vector<8x128xf32>
    %713 = vector.extract_strided_slice %700 {offsets = [0, 256], sizes = [8, 128], strides = [1, 1]} : vector<8x512xf32> to vector<8x128xf32>
    %714 = math.tanh %713 : vector<8x128xf32>
    %715 = vector.extract_strided_slice %700 {offsets = [0, 384], sizes = [8, 128], strides = [1, 1]} : vector<8x512xf32> to vector<8x128xf32>
    %716 = arith.negf %715 : vector<8x128xf32>
    %717 = math.exp %716 : vector<8x128xf32>
    %cst_326 = arith.constant 1.000000e+00 : f32
    %718 = vector.broadcast %cst_326 : f32 to vector<8x128xf32>
    %719 = arith.addf %718, %717 : vector<8x128xf32>
    %720 = arith.divf %718, %719 : vector<8x128xf32>
    %721 = arith.mulf %712, %694 : vector<8x128xf32>
    %722 = arith.mulf %706, %714 : vector<8x128xf32>
    %723 = arith.addf %721, %722 : vector<8x128xf32>
    %724 = math.tanh %723 : vector<8x128xf32>
    %725 = arith.mulf %720, %724 : vector<8x128xf32>
    %c0_327 = arith.constant 0 : index
    %c0_328 = arith.constant 0 : index
    %726 = vector.load %arg11[%c0_327, %c0_328] : memref<8x128xf32, #tpu.memory_space<vmem>>, vector<8x128xf32>
    tpu.vector_store %arg11[%c0_327, %c0_328], %723 {strides = array<i32>} : memref<8x128xf32, #tpu.memory_space<vmem>>, vector<8x128xf32>,
    %c0_329 = arith.constant 0 : index
    %c0_330 = arith.constant 0 : index
    %727 = vector.load %arg10[%c0_329, %c0_330] : memref<8x128xf32, #tpu.memory_space<vmem>>, vector<8x128xf32>
    tpu.vector_store %arg10[%c0_329, %c0_330], %725 {strides = array<i32>} : memref<8x128xf32, #tpu.memory_space<vmem>>, vector<8x128xf32>,
    %728 = arith.index_cast %c8_i32_316 : i32 to index
    %c0_331 = arith.constant 0 : index
    %c0_332 = arith.constant 0 : index
    %729 = vector.load %arg8[%728, %c0_331, %c0_332] : memref<9x8x128xf32, #tpu.memory_space<vmem>>, vector<1x8x128xf32>
    %730 = vector.shape_cast %729 : vector<1x8x128xf32> to vector<8x128xf32>
    %731 = vector.shape_cast %725 : vector<8x128xf32> to vector<1x8x128xf32>
    tpu.vector_store %arg8[%728, %c0_331, %c0_332], %731 {strides = array<i32>} : memref<9x8x128xf32, #tpu.memory_space<vmem>>, vector<1x8x128xf32>,
    %c9_i32_333 = arith.constant 9 : i32
    return
  }
  func.func @transform_0(%arg0: i32) -> (i32, i32, i32) {
    %c0_i32 = arith.constant 0 : i32
    %c0_i32_0 = arith.constant 0 : i32
    %c0_i32_1 = arith.constant 0 : i32
    return %c0_i32, %arg0, %c0_i32_0 : i32, i32, i32
  }
  func.func @transform_1(%arg0: i32) -> (i32, i32) {
    %c0_i32 = arith.constant 0 : i32
    %c0_i32_0 = arith.constant 0 : i32
    %c0_i32_1 = arith.constant 0 : i32
    return %c0_i32, %c0_i32_0 : i32, i32
  }
  func.func @transform_2(%arg0: i32) -> (i32, i32) {
    %c0_i32 = arith.constant 0 : i32
    %c0_i32_0 = arith.constant 0 : i32
    %c0_i32_1 = arith.constant 0 : i32
    return %c0_i32, %c0_i32_0 : i32, i32
  }
  func.func @transform_3(%arg0: i32) -> (i32, i32) {
    %c0_i32 = arith.constant 0 : i32
    %c0_i32_0 = arith.constant 0 : i32
    %c0_i32_1 = arith.constant 0 : i32
    return %c0_i32, %c0_i32_0 : i32, i32
  }
  func.func @transform_4(%arg0: i32) -> (i32, i32) {
    %c0_i32 = arith.constant 0 : i32
    %c0_i32_0 = arith.constant 0 : i32
    %c0_i32_1 = arith.constant 0 : i32
    return %c0_i32, %c0_i32_0 : i32, i32
  }
  func.func @transform_5(%arg0: i32) -> (i32, i32) {
    %c0_i32 = arith.constant 0 : i32
    %c0_i32_0 = arith.constant 0 : i32
    %c0_i32_1 = arith.constant 0 : i32
    return %c0_i32, %c0_i32_0 : i32, i32
  }
  func.func @transform_6(%arg0: i32) -> (i32, i32) {
    %c0_i32 = arith.constant 0 : i32
    %c0_i32_0 = arith.constant 0 : i32
    %c0_i32_1 = arith.constant 0 : i32
    return %c0_i32, %c0_i32_0 : i32, i32
  }
  func.func @transform_7(%arg0: i32) -> (i32, i32, i32) {
    %c0_i32 = arith.constant 0 : i32
    %c0_i32_0 = arith.constant 0 : i32
    %c0_i32_1 = arith.constant 0 : i32
    return %c0_i32, %arg0, %c0_i32_0 : i32, i32, i32
  }
}

</mosaic_0001>

<llo_original>
// kernel: tpu_custom_call.1
$region0: #{tpu_custom_call.1}
  #allocation0 [shape = 'u32[]', space=smem, size = 0x4, offset = 0x4, fixed_abs, tag = 'smem constant byte address 0x4 - core index']
  #allocation1 [shape = 'u32[144,128]{1,0:T(1,128)}', space=vmem, size = 0x12000, scoped, tag = 'internal scratch']
  #allocation2 [shape = 'f32[9,8,512]{2,1,0:T(8,128)}', space=vmem, size = 0x24000, scoped, tag = 'scratch operand']
  #allocation3 [shape = 'f32[8,128]{1,0:T(8,128)}', space=vmem, size = 0x1000, scoped, tag = 'scratch operand']
  #allocation4 [shape = 'f32[8,128]{1,0:T(8,128)}', space=vmem, size = 0x1000, scoped, tag = 'scratch operand']
  %s0 = inlined_call_operand.hbm [shape: f32[9,8,32], index: 0, kind: input, shape index: {}]
  %s1 = inlined_call_operand.hbm [shape: bf16[32,512], index: 1, kind: input, shape index: {}]
  %s2 = inlined_call_operand.hbm [shape: bf16[128,512], index: 2, kind: input, shape index: {}]
  %s3 = inlined_call_operand.hbm [shape: f32[1,512], index: 3, kind: input, shape index: {}]
  %s4 = inlined_call_operand.hbm [shape: bf16[128,512], index: 4, kind: input, shape index: {}]
  %s5 = inlined_call_operand.hbm [shape: bf16[128,512], index: 5, kind: input, shape index: {}]
  %s6 = inlined_call_operand.hbm [shape: f32[1,512], index: 6, kind: input, shape index: {}]
  %s7 = inlined_call_operand.hbm [shape: f32[9,8,128], index: 7, kind: output, shape index: {}]
  %s8 = sld [smem:[#allocation0]]
  $region66: #{tpu_custom_call.1} parent=0
    _
  %s10 = ssub.s32 1, %s8
  %s11 = scalar_select 0, %s10, %s8
  $region1: #{tpu_custom_call.1} parent=0
    #allocation5 [shape = 'u8[36864]{0}', space=vmem, size = 0x9000, scoped, tag = 'input window, operand 0, single buffered']
    #allocation6 [shape = 's32[1]{0}', space=sflag, size = 0x4, scoped, tag = 'scoped memory for tpu_custom_call.1']
    #allocation7 [shape = 's32[1]{0}', space=sflag, size = 0x4, scoped, tag = 'scoped memory for tpu_custom_call.1']
    #allocation8 [shape = 'u8[32768]{0}', space=vmem, size = 0x8000, scoped, tag = 'input window, operand 1, single buffered']
    #allocation9 [shape = 's32[1]{0}', space=sflag, size = 0x4, scoped, tag = 'scoped memory for tpu_custom_call.1']
    #allocation10 [shape = 'u8[131072]{0}', space=vmem, size = 0x20000, scoped, tag = 'input window, operand 2, single buffered']
    #allocation11 [shape = 'u8[2048]{0}', space=vmem, size = 0x800, scoped, tag = 'input window, operand 3, single buffered']
    #allocation12 [shape = 's32[1]{0}', space=sflag, size = 0x4, scoped, tag = 'scoped memory for tpu_custom_call.1']
    #allocation13 [shape = 'u8[131072]{0}', space=vmem, size = 0x20000, scoped, tag = 'input window, operand 4, single buffered']
    #allocation14 [shape = 'u8[131072]{0}', space=vmem, size = 0x20000, scoped, tag = 'input window, operand 5, single buffered']
    #allocation15 [shape = 's32[1]{0}', space=sflag, size = 0x4, scoped, tag = 'scoped memory for tpu_custom_call.1']
    #allocation16 [shape = 'u8[2048]{0}', space=vmem, size = 0x800, scoped, tag = 'input window, operand 6, single buffered']
    #allocation17 [shape = 'u8[36864]{0}', space=vmem, size = 0x9000, scoped, tag = 'output window, operand 0, single buffered']
    %12 = vsyncpa [#allocation6], 0
    %13 = vsyncpa [#allocation9], 0
    %14 = vsyncpa [#allocation12], 0
    %15 = vsyncpa [#allocation15], 0
    %16 = vsyncpa [#allocation7], 0
    // Predicated region
    $region2: #{tpu_custom_call.1} parent=1 // pred_check
      _
    $region3: #{tpu_custom_call.1} parent=1 // pred_check_branch
      %18 = sbr.rel (0) target = $region5
    $region4: #{tpu_custom_call.1} parent=1 // pred_region
      %s20 = ssub.s32 1152, 1152
      %21 = vsyncadd [#allocation6], %s20
      %s22 = sshll.u32 [#allocation5], 4
      %s23 = int_to_ptr.vmem [resolvable:$true] %s22
      %28 = dma.hbm_to_vmem [thread:$0]  %s0, 1152, %s23, [#allocation6], 128, 128, 8
    $region5: #{tpu_custom_call.1} parent=1 // pred_fallthru
      _
    // Predicated region
    $region6: #{tpu_custom_call.1} parent=1 // pred_check
      _
    $region7: #{tpu_custom_call.1} parent=1 // pred_check_branch
      %30 = sbr.rel (0) target = $region9
    $region8: #{tpu_custom_call.1} parent=1 // pred_region
      %s32 = ssub.s32 1024, 1024
      %33 = vsyncadd [#allocation9], %s32
      %s34 = sshll.u32 [#allocation8], 4
      %s35 = int_to_ptr.vmem [resolvable:$true] %s34
      %40 = dma.hbm_to_vmem [thread:$0]  %s1, 1024, %s35, [#allocation9], 256, 256, 16
    $region9: #{tpu_custom_call.1} parent=1 // pred_fallthru
      _
    // Predicated region
    $region10: #{tpu_custom_call.1} parent=1 // pred_check
      _
    $region11: #{tpu_custom_call.1} parent=1 // pred_check_branch
      %42 = sbr.rel (0) target = $region13
    $region12: #{tpu_custom_call.1} parent=1 // pred_region
      %s44 = ssub.s32 4096, 4096
      %45 = vsyncadd [#allocation9], %s44
      %s46 = sshll.u32 [#allocation10], 4
      %s47 = int_to_ptr.vmem [resolvable:$true] %s46
      %52 = dma.hbm_to_vmem [thread:$0]  %s2, 4096, %s47, [#allocation9], 256, 256, 16
    $region13: #{tpu_custom_call.1} parent=1 // pred_fallthru
      _
    // Predicated region
    $region14: #{tpu_custom_call.1} parent=1 // pred_check
      _
    $region15: #{tpu_custom_call.1} parent=1 // pred_check_branch
      %54 = sbr.rel (0) target = $region17
    $region16: #{tpu_custom_call.1} parent=1 // pred_region
      %s56 = ssub.s32 64, 64
      %57 = vsyncadd [#allocation12], %s56
      %s59 = sshll.u32 [#allocation11], 4
      %s60 = int_to_ptr.vmem [resolvable:$true] %s59
      %62 = dma.hbm_to_vmem [thread:$0]  %s3, 64, %s60, [#allocation12]
    $region17: #{tpu_custom_call.1} parent=1 // pred_fallthru
      _
    // Predicated region
    $region18: #{tpu_custom_call.1} parent=1 // pred_check
      _
    $region19: #{tpu_custom_call.1} parent=1 // pred_check_branch
      %64 = sbr.rel (0) target = $region21
    $region20: #{tpu_custom_call.1} parent=1 // pred_region
      %s66 = ssub.s32 4096, 4096
      %67 = vsyncadd [#allocation12], %s66
      %s68 = sshll.u32 [#allocation13], 4
      %s69 = int_to_ptr.vmem [resolvable:$true] %s68
      %74 = dma.hbm_to_vmem [thread:$0]  %s4, 4096, %s69, [#allocation12], 256, 256, 16
    $region21: #{tpu_custom_call.1} parent=1 // pred_fallthru
      _
    // Predicated region
    $region22: #{tpu_custom_call.1} parent=1 // pred_check
      _
    $region23: #{tpu_custom_call.1} parent=1 // pred_check_branch
      %76 = sbr.rel (0) target = $region25
    $region24: #{tpu_custom_call.1} parent=1 // pred_region
      %s78 = ssub.s32 4096, 4096
      %79 = vsyncadd [#allocation15], %s78
      %s80 = sshll.u32 [#allocation14], 4
      %s81 = int_to_ptr.vmem [resolvable:$true] %s80
      %86 = dma.hbm_to_vmem [thread:$0]  %s5, 4096, %s81, [#allocation15], 256, 256, 16
    $region25: #{tpu_custom_call.1} parent=1 // pred_fallthru
      _
    // Predicated region
    $region26: #{tpu_custom_call.1} parent=1 // pred_check
      _
    $region27: #{tpu_custom_call.1} parent=1 // pred_check_branch
      %88 = sbr.rel (0) target = $region29
    $region28: #{tpu_custom_call.1} parent=1 // pred_region
      %s90 = ssub.s32 64, 64
      %91 = vsyncadd [#allocation15], %s90
      %s93 = sshll.u32 [#allocation16], 4
      %s94 = int_to_ptr.vmem [resolvable:$true] %s93
      %96 = dma.hbm_to_vmem [thread:$0]  %s6, 64, %s94, [#allocation15]
    $region29: #{tpu_custom_call.1} parent=1 // pred_fallthru
      _
    // Predicated region
    $region30: #{tpu_custom_call.1} parent=1 // pred_check
      _
    $region31: #{tpu_custom_call.1} parent=1 // pred_check_branch
      %98 = sbr.rel (0) target = $region33
    $region32: #{tpu_custom_call.1} parent=1 // pred_region
      %99 = dma.done [#allocation6], 1152
    $region33: #{tpu_custom_call.1} parent=1 // pred_fallthru
      _
    // Predicated region
    $region34: #{tpu_custom_call.1} parent=1 // pred_check
      _
    $region35: #{tpu_custom_call.1} parent=1 // pred_check_branch
      %101 = sbr.rel (0) target = $region37
    $region36: #{tpu_custom_call.1} parent=1 // pred_region
      %102 = dma.done [#allocation9], 1024
    $region37: #{tpu_custom_call.1} parent=1 // pred_fallthru
      _
    // Predicated region
    $region38: #{tpu_custom_call.1} parent=1 // pred_check
      _
    $region39: #{tpu_custom_call.1} parent=1 // pred_check_branch
      %104 = sbr.rel (0) target = $region41
    $region40: #{tpu_custom_call.1} parent=1 // pred_region
      %105 = dma.done [#allocation9], 4096
    $region41: #{tpu_custom_call.1} parent=1 // pred_fallthru
      _
    // Predicated region
    $region42: #{tpu_custom_call.1} parent=1 // pred_check
      _
    $region43: #{tpu_custom_call.1} parent=1 // pred_check_branch
      %107 = sbr.rel (0) target = $region45
    $region44: #{tpu_custom_call.1} parent=1 // pred_region
      %108 = dma.done [#allocation12], 64
    $region45: #{tpu_custom_call.1} parent=1 // pred_fallthru
      _
    // Predicated region
    $region46: #{tpu_custom_call.1} parent=1 // pred_check
      _
    $region47: #{tpu_custom_call.1} parent=1 // pred_check_branch
      %110 = sbr.rel (0) target = $region49
    $region48: #{tpu_custom_call.1} parent=1 // pred_region
      %111 = dma.done [#allocation12], 4096
    $region49: #{tpu_custom_call.1} parent=1 // pred_fallthru
      _
    // Predicated region
    $region50: #{tpu_custom_call.1} parent=1 // pred_check
      _
    $region51: #{tpu_custom_call.1} parent=1 // pred_check_branch
      %113 = sbr.rel (0) target = $region53
    $region52: #{tpu_custom_call.1} parent=1 // pred_region
      %114 = dma.done [#allocation15], 4096
    $region53: #{tpu_custom_call.1} parent=1 // pred_fallthru
      _
    // Predicated region
    $region54: #{tpu_custom_call.1} parent=1 // pred_check
      _
    $region55: #{tpu_custom_call.1} parent=1 // pred_check_branch
      %116 = sbr.rel (0) target = $region57
    $region56: #{tpu_custom_call.1} parent=1 // pred_region
      %117 = dma.done [#allocation15], 64
    $region57: #{tpu_custom_call.1} parent=1 // pred_fallthru
      _
    %v119 = vld [vmem:[#allocation8] sm:$0xff]
    %v120 = vld [vmem:[#allocation8 + $0x8] sm:$0xff]
    %v121 = vld [vmem:[#allocation8 + $0x10] sm:$0xff]
    %v122 = vld [vmem:[#allocation8 + $0x18] sm:$0xff]
    %v123 = vld [vmem:[#allocation8 + $0x20] sm:$0xff]
    %v124 = vld [vmem:[#allocation8 + $0x28] sm:$0xff]
    %v125 = vld [vmem:[#allocation8 + $0x30] sm:$0xff]
    %v126 = vld [vmem:[#allocation8 + $0x38] sm:$0xff]
    %v127 = vld [vmem:[#allocation10] sm:$0xff]
    %v128 = vld [vmem:[#allocation10 + $0x8] sm:$0xff]
    %v129 = vld [vmem:[#allocation10 + $0x10] sm:$0xff]
    %v130 = vld [vmem:[#allocation10 + $0x18] sm:$0xff]
    %v131 = vld [vmem:[#allocation10 + $0x20] sm:$0xff]
    %v132 = vld [vmem:[#allocation10 + $0x28] sm:$0xff]
    %v133 = vld [vmem:[#allocation10 + $0x30] sm:$0xff]
    %v134 = vld [vmem:[#allocation10 + $0x38] sm:$0xff]
    %v135 = vld [vmem:[#allocation10 + $0x40] sm:$0xff]
    %v136 = vld [vmem:[#allocation10 + $0x48] sm:$0xff]
    %v137 = vld [vmem:[#allocation10 + $0x50] sm:$0xff]
    %v138 = vld [vmem:[#allocation10 + $0x58] sm:$0xff]
    %v139 = vld [vmem:[#allocation10 + $0x60] sm:$0xff]
    %v140 = vld [vmem:[#allocation10 + $0x68] sm:$0xff]
    %v141 = vld [vmem:[#allocation10 + $0x70] sm:$0xff]
    %v142 = vld [vmem:[#allocation10 + $0x78] sm:$0xff]
    %v143 = vld [vmem:[#allocation10 + $0x80] sm:$0xff]
    %v144 = vld [vmem:[#allocation10 + $0x88] sm:$0xff]
    %v145 = vld [vmem:[#allocation10 + $0x90] sm:$0xff]
    %v146 = vld [vmem:[#allocation10 + $0x98] sm:$0xff]
    %v147 = vld [vmem:[#allocation10 + $0xa0] sm:$0xff]
    %v148 = vld [vmem:[#allocation10 + $0xa8] sm:$0xff]
    %v149 = vld [vmem:[#allocation10 + $0xb0] sm:$0xff]
    %v150 = vld [vmem:[#allocation10 + $0xb8] sm:$0xff]
    %v151 = vld [vmem:[#allocation10 + $0xc0] sm:$0xff]
    %v152 = vld [vmem:[#allocation10 + $0xc8] sm:$0xff]
    %v153 = vld [vmem:[#allocation10 + $0xd0] sm:$0xff]
    %v154 = vld [vmem:[#allocation10 + $0xd8] sm:$0xff]
    %v155 = vld [vmem:[#allocation10 + $0xe0] sm:$0xff]
    %v156 = vld [vmem:[#allocation10 + $0xe8] sm:$0xff]
    %v157 = vld [vmem:[#allocation10 + $0xf0] sm:$0xff]
    %v158 = vld [vmem:[#allocation10 + $0xf8] sm:$0xff]
    %v159 = vld [vmem:[#allocation11] sm:$0xf]
    %v160 = vld [vmem:[#allocation5] sm:$0xff]
    %v161 = vld [vmem:[#allocation5 + $0x8] sm:$0xff]
    %v162 = vld [vmem:[#allocation5 + $0x10] sm:$0xff]
    %v163 = vld [vmem:[#allocation5 + $0x18] sm:$0xff]
    %v164 = vld [vmem:[#allocation5 + $0x20] sm:$0xff]
    %v165 = vld [vmem:[#allocation5 + $0x28] sm:$0xff]
    %v166 = vld [vmem:[#allocation5 + $0x30] sm:$0xff]
    %v167 = vld [vmem:[#allocation5 + $0x38] sm:$0xff]
    %v168 = vld [vmem:[#allocation5 + $0x40] sm:$0xff]
    %v169 = vpack.c.bf16 %v161, %v160
    %v170 = vpack.c.bf16 %v163, %v162
    %v171 = vpack.c.bf16 %v165, %v164
    %v172 = vpack.c.bf16 %v167, %v166
    %v173 = vpack.c.bf16 %v168, %v168
    %v175 = vlaneseq
    %v176 = vshrl.u32 %v175, 7
    %v177 = vsub.s32 0, %v176
    %v178 = vrot.slane %v159, %v177
    %v179 = vlaneseq
    %v180 = vshrl.u32 %v179, 7
    %v181 = vsub.s32 1, %v180
    %v182 = vrot.slane %v159, %v181
    %v183 = vlaneseq
    %v184 = vshrl.u32 %v183, 7
    %v185 = vsub.s32 2, %v184
    %v186 = vrot.slane %v159, %v185
    %v187 = vlaneseq
    %v188 = vshrl.u32 %v187, 7
    %v189 = vsub.s32 3, %v188
    %v190 = vrot.slane %v159, %v189
    %v203 = vunpack.c.l.b16 %v119
    %v204 = vunpack.c.h.b16 %v119
    %v205 = vunpack.c.l.b16 %v120
    %v206 = vunpack.c.h.b16 %v120
    %v207 = vunpack.c.l.b16 %v121
    %v208 = vunpack.c.h.b16 %v121
    %v209 = vunpack.c.l.b16 %v122
    %v210 = vunpack.c.h.b16 %v122
    %v211 = vunpack.c.l.b16 %v123
    %v212 = vunpack.c.h.b16 %v123
    %v213 = vunpack.c.l.b16 %v124
    %v214 = vunpack.c.h.b16 %v124
    %v215 = vunpack.c.l.b16 %v125
    %v216 = vunpack.c.h.b16 %v125
    %v217 = vunpack.c.l.b16 %v126
    %v218 = vunpack.c.h.b16 %v126
    %v219 = vpack.c.b16 %v207, %v203
    %v220 = vpack.c.b16 %v208, %v204
    %v221 = vpack.c.b16 %v209, %v205
    %v222 = vpack.c.b16 %v210, %v206
    %v223 = vpack.c.b16 %v215, %v211
    %v224 = vpack.c.b16 %v216, %v212
    %v225 = vpack.c.b16 %v217, %v213
    %v226 = vpack.c.b16 %v218, %v214
    %vm235 = vcmask 261120
    %v237 = vsel %vm235, %v169, 0
    %v240 = vsel %vm235, %v170, 0
    %v243 = vsel %vm235, %v171, 0
    %v246 = vsel %vm235, %v172, 0
    %v249 = vsel %vm235, %v173, 0
    %251 = vmatprep.subr.bf16.mxu0 %v220
    %252 = vmatpush1.bf16.msra.mxu0 %v219
    %253 = vmatprep.subr.bf16.mxu0 %v224
    %254 = vmatpush1.bf16.msra.mxu0 %v223
    %255 = vmatprep.subr.bf16.mxu0 0
    %256 = vmatpush1.bf16.msra.mxu0 0
    %257 = vmatprep.subr.bf16.mxu0 0
    %258 = vmatpush1.bf16.msra.mxu0 0
    %259 = vmatprep.subr.bf16.mxu0 0
    %260 = vmatpush1.bf16.msra.mxu0 0
    %261 = vmatprep.subr.bf16.mxu0 0
    %262 = vmatpush1.bf16.msra.mxu0 0
    %263 = vmatprep.subr.bf16.mxu0 0
    %264 = vmatpush1.bf16.msra.mxu0 0
    %265 = vmatprep.subr.bf16.mxu0 0
    %266 = vmatpush1.bf16.msra.mxu0 0
    %267 = vmatprep.subr.bf16.mxu0 0
    %268 = vmatpush1.bf16.msra.mxu0 0
    %269 = vmatprep.subr.bf16.mxu0 0
    %270 = vmatpush1.bf16.msra.mxu0 0
    %271 = vmatprep.subr.bf16.mxu0 0
    %272 = vmatpush1.bf16.msra.mxu0 0
    %273 = vmatprep.subr.bf16.mxu0 0
    %274 = vmatpush1.bf16.msra.mxu0 0
    %275 = vmatprep.subr.bf16.mxu0 0
    %276 = vmatpush1.bf16.msra.mxu0 0
    %277 = vmatprep.subr.bf16.mxu0 0
    %278 = vmatpush1.bf16.msra.mxu0 0
    %279 = vmatprep.subr.bf16.mxu0 0
    %280 = vmatpush1.bf16.msra.mxu0 0
    %281 = vmatprep.subr.bf16.mxu0 0
    %282 = vmatpush1.bf16.msra.mxu0 0
    %283 = vmatprep.mubr.bf16.mxu0 0
    %284 = vmatmul.mubr.bf16.gmra.mrb[0].mxu0 %v237
    %v285 = vpop.f32.mrb[0].mxu0
    %v286 = vadd.f32 %v178, %v285
    %v287 = vpop.f32.mrb[0].mxu0
    %v288 = vadd.f32 %v182, %v287
    %v289 = vpop.f32.mrb[0].mxu0
    %v290 = vadd.f32 %v178, %v289
    %v291 = vpop.f32.mrb[0].mxu0
    %v292 = vadd.f32 %v182, %v291
    %293 = vmatprep.mubr.bf16.mxu0 0
    %294 = vmatmul.mubr.bf16.gmra.mrb[0].mxu0 %v240
    %v295 = vpop.f32.mrb[0].mxu0
    %v296 = vadd.f32 %v178, %v295
    %v297 = vpop.f32.mrb[0].mxu0
    %v298 = vadd.f32 %v182, %v297
    %v299 = vpop.f32.mrb[0].mxu0
    %v300 = vadd.f32 %v178, %v299
    %v301 = vpop.f32.mrb[0].mxu0
    %v302 = vadd.f32 %v182, %v301
    %303 = vmatprep.mubr.bf16.mxu0 0
    %304 = vmatmul.mubr.bf16.gmra.mrb[0].mxu0 %v243
    %v305 = vpop.f32.mrb[0].mxu0
    %v306 = vadd.f32 %v178, %v305
    %v307 = vpop.f32.mrb[0].mxu0
    %v308 = vadd.f32 %v182, %v307
    %v309 = vpop.f32.mrb[0].mxu0
    %v310 = vadd.f32 %v178, %v309
    %v311 = vpop.f32.mrb[0].mxu0
    %v312 = vadd.f32 %v182, %v311
    %313 = vmatprep.mubr.bf16.mxu0 0
    %314 = vmatmul.mubr.bf16.gmra.mrb[0].mxu0 %v246
    %v315 = vpop.f32.mrb[0].mxu0
    %v316 = vadd.f32 %v178, %v315
    %v317 = vpop.f32.mrb[0].mxu0
    %v318 = vadd.f32 %v182, %v317
    %v319 = vpop.f32.mrb[0].mxu0
    %v320 = vadd.f32 %v178, %v319
    %v321 = vpop.f32.mrb[0].mxu0
    %v322 = vadd.f32 %v182, %v321
    %323 = vmatprep.mubr.bf16.mxu0 0
    %324 = vmatmul.mubr.bf16.gmra.mrb[0].mxu0 %v249
    %v325 = vpop.f32.mrb[0].mxu0
    %v326 = vadd.f32 %v178, %v325
    %v327 = vpop.f32.mrb[0].mxu0
    %v328 = vadd.f32 %v182, %v327
    %v329 = vpop.f32.mrb[0].mxu0
    %v330 = vpop.f32.mrb[0].mxu0
    %331 = vdwg.mxu0
    %332 = vmatprep.subr.bf16.mxu0 %v222
    %333 = vmatpush1.bf16.msra.mxu0 %v221
    %334 = vmatprep.subr.bf16.mxu0 %v226
    %335 = vmatpush1.bf16.msra.mxu0 %v225
    %336 = vmatprep.subr.bf16.mxu0 0
    %337 = vmatpush1.bf16.msra.mxu0 0
    %338 = vmatprep.subr.bf16.mxu0 0
    %339 = vmatpush1.bf16.msra.mxu0 0
    %340 = vmatprep.subr.bf16.mxu0 0
    %341 = vmatpush1.bf16.msra.mxu0 0
    %342 = vmatprep.subr.bf16.mxu0 0
    %343 = vmatpush1.bf16.msra.mxu0 0
    %344 = vmatprep.subr.bf16.mxu0 0
    %345 = vmatpush1.bf16.msra.mxu0 0
    %346 = vmatprep.subr.bf16.mxu0 0
    %347 = vmatpush1.bf16.msra.mxu0 0
    %348 = vmatprep.subr.bf16.mxu0 0
    %349 = vmatpush1.bf16.msra.mxu0 0
    %350 = vmatprep.subr.bf16.mxu0 0
    %351 = vmatpush1.bf16.msra.mxu0 0
    %352 = vmatprep.subr.bf16.mxu0 0
    %353 = vmatpush1.bf16.msra.mxu0 0
    %354 = vmatprep.subr.bf16.mxu0 0
    %355 = vmatpush1.bf16.msra.mxu0 0
    %356 = vmatprep.subr.bf16.mxu0 0
    %357 = vmatpush1.bf16.msra.mxu0 0
    %358 = vmatprep.subr.bf16.mxu0 0
    %359 = vmatpush1.bf16.msra.mxu0 0
    %360 = vmatprep.subr.bf16.mxu0 0
    %361 = vmatpush1.bf16.msra.mxu0 0
    %362 = vmatprep.subr.bf16.mxu0 0
    %363 = vmatpush1.bf16.msra.mxu0 0
    %364 = vmatprep.mubr.bf16.mxu0 0
    %365 = vmatmul.mubr.bf16.gmra.mrb[0].mxu0 %v237
    %v366 = vpop.f32.mrb[0].mxu0
    %v367 = vadd.f32 %v186, %v366
    %v368 = vpop.f32.mrb[0].mxu0
    %v369 = vadd.f32 %v190, %v368
    %v370 = vpop.f32.mrb[0].mxu0
    %v371 = vadd.f32 %v186, %v370
    %v372 = vpop.f32.mrb[0].mxu0
    %v373 = vadd.f32 %v190, %v372
    %374 = vmatprep.mubr.bf16.mxu0 0
    %375 = vmatmul.mubr.bf16.gmra.mrb[0].mxu0 %v240
    %v376 = vpop.f32.mrb[0].mxu0
    %v377 = vadd.f32 %v186, %v376
    %v378 = vpop.f32.mrb[0].mxu0
    %v379 = vadd.f32 %v190, %v378
    %v380 = vpop.f32.mrb[0].mxu0
    %v381 = vadd.f32 %v186, %v380
    %v382 = vpop.f32.mrb[0].mxu0
    %v383 = vadd.f32 %v190, %v382
    %384 = vmatprep.mubr.bf16.mxu0 0
    %385 = vmatmul.mubr.bf16.gmra.mrb[0].mxu0 %v243
    %v386 = vpop.f32.mrb[0].mxu0
    %v387 = vadd.f32 %v186, %v386
    %v388 = vpop.f32.mrb[0].mxu0
    %v389 = vadd.f32 %v190, %v388
    %v390 = vpop.f32.mrb[0].mxu0
    %v391 = vadd.f32 %v186, %v390
    %v392 = vpop.f32.mrb[0].mxu0
    %v393 = vadd.f32 %v190, %v392
    %394 = vmatprep.mubr.bf16.mxu0 0
    %395 = vmatmul.mubr.bf16.gmra.mrb[0].mxu0 %v246
    %v396 = vpop.f32.mrb[0].mxu0
    %v397 = vadd.f32 %v186, %v396
    %v398 = vpop.f32.mrb[0].mxu0
    %v399 = vadd.f32 %v190, %v398
    %v400 = vpop.f32.mrb[0].mxu0
    %v401 = vadd.f32 %v186, %v400
    %v402 = vpop.f32.mrb[0].mxu0
    %v403 = vadd.f32 %v190, %v402
    %404 = vmatprep.mubr.bf16.mxu0 0
    %405 = vmatmul.mubr.bf16.gmra.mrb[0].mxu0 %v249
    %v406 = vpop.f32.mrb[0].mxu0
    %v407 = vadd.f32 %v186, %v406
    %v408 = vpop.f32.mrb[0].mxu0
    %v409 = vadd.f32 %v190, %v408
    %v410 = vpop.f32.mrb[0].mxu0
    %v411 = vpop.f32.mrb[0].mxu0
    %412 = vdwg.mxu0
    %413 = vst [vmem:[#allocation2] sm:$0xff] %v286
    %414 = vst [vmem:[#allocation2 + $0x8] sm:$0xff] %v288
    %415 = vst [vmem:[#allocation2 + $0x10] sm:$0xff] %v367
    %416 = vst [vmem:[#allocation2 + $0x18] sm:$0xff] %v369
    %417 = vst [vmem:[#allocation2 + $0x20] sm:$0xff] %v290
    %418 = vst [vmem:[#allocation2 + $0x28] sm:$0xff] %v292
    %419 = vst [vmem:[#allocation2 + $0x30] sm:$0xff] %v371
    %420 = vst [vmem:[#allocation2 + $0x38] sm:$0xff] %v373
    %421 = vst [vmem:[#allocation2 + $0x40] sm:$0xff] %v296
    %422 = vst [vmem:[#allocation2 + $0x48] sm:$0xff] %v298
    %423 = vst [vmem:[#allocation2 + $0x50] sm:$0xff] %v377
    %424 = vst [vmem:[#allocation2 + $0x58] sm:$0xff] %v379
    %425 = vst [vmem:[#allocation2 + $0x60] sm:$0xff] %v300
    %426 = vst [vmem:[#allocation2 + $0x68] sm:$0xff] %v302
    %427 = vst [vmem:[#allocation2 + $0x70] sm:$0xff] %v381
    %428 = vst [vmem:[#allocation2 + $0x78] sm:$0xff] %v383
    %429 = vst [vmem:[#allocation2 + $0x80] sm:$0xff] %v306
    %430 = vst [vmem:[#allocation2 + $0x88] sm:$0xff] %v308
    %431 = vst [vmem:[#allocation2 + $0x90] sm:$0xff] %v387
    %432 = vst [vmem:[#allocation2 + $0x98] sm:$0xff] %v389
    %433 = vst [vmem:[#allocation2 + $0xa0] sm:$0xff] %v310
    %434 = vst [vmem:[#allocation2 + $0xa8] sm:$0xff] %v312
    %435 = vst [vmem:[#allocation2 + $0xb0] sm:$0xff] %v391
    %436 = vst [vmem:[#allocation2 + $0xb8] sm:$0xff] %v393
    %437 = vst [vmem:[#allocation2 + $0xc0] sm:$0xff] %v316
    %438 = vst [vmem:[#allocation2 + $0xc8] sm:$0xff] %v318
    %439 = vst [vmem:[#allocation2 + $0xd0] sm:$0xff] %v397
    %440 = vst [vmem:[#allocation2 + $0xd8] sm:$0xff] %v399
    %441 = vst [vmem:[#allocation2 + $0xe0] sm:$0xff] %v320
    %442 = vst [vmem:[#allocation2 + $0xe8] sm:$0xff] %v322
    %443 = vst [vmem:[#allocation2 + $0xf0] sm:$0xff] %v401
    %444 = vst [vmem:[#allocation2 + $0xf8] sm:$0xff] %v403
    %445 = vst [vmem:[#allocation2 + $0x100] sm:$0xff] %v326
    %446 = vst [vmem:[#allocation2 + $0x108] sm:$0xff] %v328
    %447 = vst [vmem:[#allocation2 + $0x110] sm:$0xff] %v407
    %448 = vst [vmem:[#allocation2 + $0x118] sm:$0xff] %v409
    %449 = vst [vmem:[#allocation3] sm:$0xff] 0.0
    %450 = vst [vmem:[#allocation4] sm:$0xff] 0.0
    %v451 = vld [vmem:[#allocation3] sm:$0xff]
    %v452 = vld [vmem:[#allocation4] sm:$0xff]
    %v453 = vld [vmem:[#allocation2] sm:$0xff]
    %v454 = vld [vmem:[#allocation2 + $0x8] sm:$0xff]
    %v455 = vld [vmem:[#allocation2 + $0x10] sm:$0xff]
    %v456 = vld [vmem:[#allocation2 + $0x18] sm:$0xff]
    %v457 = vpack.c.bf16 %v451, %v451
    %v490 = vunpack.c.l.b16 %v127
    %v491 = vunpack.c.h.b16 %v127
    %v492 = vunpack.c.l.b16 %v128
    %v493 = vunpack.c.h.b16 %v128
    %v494 = vunpack.c.l.b16 %v129
    %v495 = vunpack.c.h.b16 %v129
    %v496 = vunpack.c.l.b16 %v130
    %v497 = vunpack.c.h.b16 %v130
    %v498 = vunpack.c.l.b16 %v131
    %v499 = vunpack.c.h.b16 %v131
    %v500 = vunpack.c.l.b16 %v132
    %v501 = vunpack.c.h.b16 %v132
    %v502 = vunpack.c.l.b16 %v133
    %v503 = vunpack.c.h.b16 %v133
    %v504 = vunpack.c.l.b16 %v134
    %v505 = vunpack.c.h.b16 %v134
    %v506 = vunpack.c.l.b16 %v135
    %v507 = vunpack.c.h.b16 %v135
    %v508 = vunpack.c.l.b16 %v136
    %v509 = vunpack.c.h.b16 %v136
    %v510 = vunpack.c.l.b16 %v137
    %v511 = vunpack.c.h.b16 %v137
    %v512 = vunpack.c.l.b16 %v138
    %v513 = vunpack.c.h.b16 %v138
    %v514 = vunpack.c.l.b16 %v139
    %v515 = vunpack.c.h.b16 %v139
    %v516 = vunpack.c.l.b16 %v140
    %v517 = vunpack.c.h.b16 %v140
    %v518 = vunpack.c.l.b16 %v141
    %v519 = vunpack.c.h.b16 %v141
    %v520 = vunpack.c.l.b16 %v142
    %v521 = vunpack.c.h.b16 %v142
    %v522 = vunpack.c.l.b16 %v143
    %v523 = vunpack.c.h.b16 %v143
    %v524 = vunpack.c.l.b16 %v144
    %v525 = vunpack.c.h.b16 %v144
    %v526 = vunpack.c.l.b16 %v145
    %v527 = vunpack.c.h.b16 %v145
    %v528 = vunpack.c.l.b16 %v146
    %v529 = vunpack.c.h.b16 %v146
    %v530 = vunpack.c.l.b16 %v147
    %v531 = vunpack.c.h.b16 %v147
    %v532 = vunpack.c.l.b16 %v148
    %v533 = vunpack.c.h.b16 %v148
    %v534 = vunpack.c.l.b16 %v149
    %v535 = vunpack.c.h.b16 %v149
    %v536 = vunpack.c.l.b16 %v150
    %v537 = vunpack.c.h.b16 %v150
    %v538 = vunpack.c.l.b16 %v151
    %v539 = vunpack.c.h.b16 %v151
    %v540 = vunpack.c.l.b16 %v152
    %v541 = vunpack.c.h.b16 %v152
    %v542 = vunpack.c.l.b16 %v153
    %v543 = vunpack.c.h.b16 %v153
    %v544 = vunpack.c.l.b16 %v154
    %v545 = vunpack.c.h.b16 %v154
    %v546 = vunpack.c.l.b16 %v155
    %v547 = vunpack.c.h.b16 %v155
    %v548 = vunpack.c.l.b16 %v156
    %v549 = vunpack.c.h.b16 %v156
    %v550 = vunpack.c.l.b16 %v157
    %v551 = vunpack.c.h.b16 %v157
    %v552 = vunpack.c.l.b16 %v158
    %v553 = vunpack.c.h.b16 %v158
    %v554 = vpack.c.b16 %v494, %v490
    %v555 = vpack.c.b16 %v495, %v491
    %v556 = vpack.c.b16 %v496, %v492
    %v557 = vpack.c.b16 %v497, %v493
    %v558 = vpack.c.b16 %v502, %v498
    %v559 = vpack.c.b16 %v503, %v499
    %v560 = vpack.c.b16 %v504, %v500
    %v561 = vpack.c.b16 %v505, %v501
    %v562 = vpack.c.b16 %v510, %v506
    %v563 = vpack.c.b16 %v511, %v507
    %v564 = vpack.c.b16 %v512, %v508
    %v565 = vpack.c.b16 %v513, %v509
    %v566 = vpack.c.b16 %v518, %v514
    %v567 = vpack.c.b16 %v519, %v515
    %v568 = vpack.c.b16 %v520, %v516
    %v569 = vpack.c.b16 %v521, %v517
    %v570 = vpack.c.b16 %v526, %v522
    %v571 = vpack.c.b16 %v527, %v523
    %v572 = vpack.c.b16 %v528, %v524
    %v573 = vpack.c.b16 %v529, %v525
    %v574 = vpack.c.b16 %v534, %v530
    %v575 = vpack.c.b16 %v535, %v531
    %v576 = vpack.c.b16 %v536, %v532
    %v577 = vpack.c.b16 %v537, %v533
    %v578 = vpack.c.b16 %v542, %v538
    %v579 = vpack.c.b16 %v543, %v539
    %v580 = vpack.c.b16 %v544, %v540
    %v581 = vpack.c.b16 %v545, %v541
    %v582 = vpack.c.b16 %v550, %v546
    %v583 = vpack.c.b16 %v551, %v547
    %v584 = vpack.c.b16 %v552, %v548
    %v585 = vpack.c.b16 %v553, %v549
    %618 = vmatprep.subr.bf16.mxu0 %v555
    %619 = vmatpush1.bf16.msra.mxu0 %v554
    %620 = vmatprep.subr.bf16.mxu0 %v559
    %621 = vmatpush1.bf16.msra.mxu0 %v558
    %622 = vmatprep.subr.bf16.mxu0 %v563
    %623 = vmatpush1.bf16.msra.mxu0 %v562
    %624 = vmatprep.subr.bf16.mxu0 %v567
    %625 = vmatpush1.bf16.msra.mxu0 %v566
    %626 = vmatprep.subr.bf16.mxu0 %v571
    %627 = vmatpush1.bf16.msra.mxu0 %v570
    %628 = vmatprep.subr.bf16.mxu0 %v575
    %629 = vmatpush1.bf16.msra.mxu0 %v574
    %630 = vmatprep.subr.bf16.mxu0 %v579
    %631 = vmatpush1.bf16.msra.mxu0 %v578
    %632 = vmatprep.subr.bf16.mxu0 %v583
    %633 = vmatpush1.bf16.msra.mxu0 %v582
    %634 = vmatprep.subr.bf16.mxu0 0
    %635 = vmatpush1.bf16.msra.mxu0 0
    %636 = vmatprep.subr.bf16.mxu0 0
    %637 = vmatpush1.bf16.msra.mxu0 0
    %638 = vmatprep.subr.bf16.mxu0 0
    %639 = vmatpush1.bf16.msra.mxu0 0
    %640 = vmatprep.subr.bf16.mxu0 0
    %641 = vmatpush1.bf16.msra.mxu0 0
    %642 = vmatprep.subr.bf16.mxu0 0
    %643 = vmatpush1.bf16.msra.mxu0 0
    %644 = vmatprep.subr.bf16.mxu0 0
    %645 = vmatpush1.bf16.msra.mxu0 0
    %646 = vmatprep.subr.bf16.mxu0 0
    %647 = vmatpush1.bf16.msra.mxu0 0
    %648 = vmatprep.subr.bf16.mxu0 0
    %649 = vmatpush1.bf16.msra.mxu0 0
    %650 = vmatprep.mubr.bf16.mxu0 0
    %651 = vmatmul.mubr.bf16.gmra.mrb[0].mxu0 %v457
    %v652 = vpop.f32.mrb[0].mxu0
    %v653 = vadd.f32 0.0, %v652
    %v654 = vpop.f32.mrb[0].mxu0
    %v655 = vadd.f32 0.0, %v654
    %v656 = vpop.f32.mrb[0].mxu0
    %v657 = vpop.f32.mrb[0].mxu0
    %658 = vdwg.mxu0
    %659 = vmatprep.subr.bf16.mxu0 %v557
    %660 = vmatpush1.bf16.msra.mxu0 %v556
    %661 = vmatprep.subr.bf16.mxu0 %v561
    %662 = vmatpush1.bf16.msra.mxu0 %v560
    %663 = vmatprep.subr.bf16.mxu0 %v565
    %664 = vmatpush1.bf16.msra.mxu0 %v564
    %665 = vmatprep.subr.bf16.mxu0 %v569
    %666 = vmatpush1.bf16.msra.mxu0 %v568
    %667 = vmatprep.subr.bf16.mxu0 %v573
    %668 = vmatpush1.bf16.msra.mxu0 %v572
    %669 = vmatprep.subr.bf16.mxu0 %v577
    %670 = vmatpush1.bf16.msra.mxu0 %v576
    %671 = vmatprep.subr.bf16.mxu0 %v581
    %672 = vmatpush1.bf16.msra.mxu0 %v580
    %673 = vmatprep.subr.bf16.mxu0 %v585
    %674 = vmatpush1.bf16.msra.mxu0 %v584
    %675 = vmatprep.subr.bf16.mxu0 0
    %676 = vmatpush1.bf16.msra.mxu0 0
    %677 = vmatprep.subr.bf16.mxu0 0
    %678 = vmatpush1.bf16.msra.mxu0 0
    %679 = vmatprep.subr.bf16.mxu0 0
    %680 = vmatpush1.bf16.msra.mxu0 0
    %681 = vmatprep.subr.bf16.mxu0 0
    %682 = vmatpush1.bf16.msra.mxu0 0
    %683 = vmatprep.subr.bf16.mxu0 0
    %684 = vmatpush1.bf16.msra.mxu0 0
    %685 = vmatprep.subr.bf16.mxu0 0
    %686 = vmatpush1.bf16.msra.mxu0 0
    %687 = vmatprep.subr.bf16.mxu0 0
    %688 = vmatpush1.bf16.msra.mxu0 0
    %689 = vmatprep.subr.bf16.mxu0 0
    %690 = vmatpush1.bf16.msra.mxu0 0
    %691 = vmatprep.mubr.bf16.mxu0 0
    %692 = vmatmul.mubr.bf16.gmra.mrb[0].mxu0 %v457
    %v693 = vpop.f32.mrb[0].mxu0
    %v694 = vadd.f32 0.0, %v693
    %v695 = vpop.f32.mrb[0].mxu0
    %v696 = vadd.f32 0.0, %v695
    %v697 = vpop.f32.mrb[0].mxu0
    %v698 = vpop.f32.mrb[0].mxu0
    %699 = vdwg.mxu0
    %v700 = vadd.f32 %v453, %v653
    %v701 = vadd.f32 %v454, %v655
    %v702 = vadd.f32 %v455, %v694
    %v703 = vadd.f32 %v456, %v696
    %v704 = vxor.u32 %v700, 2147483648
    %v705 = vmul.f32 %v704, 1.442695
    %v706 = vpow.pop %v705
    %v707 = vadd.f32 %v706, 1.0
    %v708 = vrcp.pop %v707
    %v709 = vmul.f32 1.0, %v708
    %v710 = vxor.u32 %v701, 2147483648
    %v711 = vmul.f32 %v710, 1.442695
    %v712 = vpow.pop %v711
    %v713 = vadd.f32 %v712, 1.0
    %v714 = vrcp.pop %v713
    %v715 = vmul.f32 1.0, %v714
    %v716 = vtanh.pop %v702
    %v717 = vxor.u32 %v703, 2147483648
    %v718 = vmul.f32 %v717, 1.442695
    %v719 = vpow.pop %v718
    %v720 = vadd.f32 %v719, 1.0
    %v721 = vrcp.pop %v720
    %v722 = vmul.f32 1.0, %v721
    %v723 = vmul.f32 %v715, %v452
    %v724 = vmul.f32 %v709, %v716
    %v725 = vadd.f32 %v723, %v724
    %v726 = vtanh.pop %v725
    %v727 = vmul.f32 %v722, %v726
    %728 = vst [vmem:[#allocation4] sm:$0xff] %v725
    %729 = vst [vmem:[#allocation3] sm:$0xff] %v727
    %730 = vst [vmem:[#allocation17] sm:$0xff] %v727
    %v731 = vld [vmem:[#allocation3] sm:$0xff]
    %v732 = vld [vmem:[#allocation4] sm:$0xff]
    %s733 = scalar_lea.vmem [#allocation2], 32
    %v734 = vld [vmem:[%s733] sm:$0xff]
    %v735 = vld [vmem:[%s733 + $0x8] sm:$0xff]
    %v736 = vld [vmem:[%s733 + $0x10] sm:$0xff]
    %v737 = vld [vmem:[%s733 + $0x18] sm:$0xff]
    %v738 = vpack.c.bf16 %v731, %v731
    %739 = vmatprep.subr.bf16.mxu0 %v555
    %740 = vmatpush1.bf16.msra.mxu0 %v554
    %741 = vmatprep.subr.bf16.mxu0 %v559
    %742 = vmatpush1.bf16.msra.mxu0 %v558
    %743 = vmatprep.subr.bf16.mxu0 %v563
    %744 = vmatpush1.bf16.msra.mxu0 %v562
    %745 = vmatprep.subr.bf16.mxu0 %v567
    %746 = vmatpush1.bf16.msra.mxu0 %v566
    %747 = vmatprep.subr.bf16.mxu0 %v571
    %748 = vmatpush1.bf16.msra.mxu0 %v570
    %749 = vmatprep.subr.bf16.mxu0 %v575
    %750 = vmatpush1.bf16.msra.mxu0 %v574
    %751 = vmatprep.subr.bf16.mxu0 %v579
    %752 = vmatpush1.bf16.msra.mxu0 %v578
    %753 = vmatprep.subr.bf16.mxu0 %v583
    %754 = vmatpush1.bf16.msra.mxu0 %v582
    %755 = vmatprep.subr.bf16.mxu0 0
    %756 = vmatpush1.bf16.msra.mxu0 0
    %757 = vmatprep.subr.bf16.mxu0 0
    %758 = vmatpush1.bf16.msra.mxu0 0
    %759 = vmatprep.subr.bf16.mxu0 0
    %760 = vmatpush1.bf16.msra.mxu0 0
    %761 = vmatprep.subr.bf16.mxu0 0
    %762 = vmatpush1.bf16.msra.mxu0 0
    %763 = vmatprep.subr.bf16.mxu0 0
    %764 = vmatpush1.bf16.msra.mxu0 0
    %765 = vmatprep.subr.bf16.mxu0 0
    %766 = vmatpush1.bf16.msra.mxu0 0
    %767 = vmatprep.subr.bf16.mxu0 0
    %768 = vmatpush1.bf16.msra.mxu0 0
    %769 = vmatprep.subr.bf16.mxu0 0
    %770 = vmatpush1.bf16.msra.mxu0 0
    %771 = vmatprep.mubr.bf16.mxu0 0
    %772 = vmatmul.mubr.bf16.gmra.mrb[0].mxu0 %v738
    %v773 = vpop.f32.mrb[0].mxu0
    %v774 = vadd.f32 0.0, %v773
    %v775 = vpop.f32.mrb[0].mxu0
    %v776 = vadd.f32 0.0, %v775
    %v777 = vpop.f32.mrb[0].mxu0
    %v778 = vpop.f32.mrb[0].mxu0
    %779 = vdwg.mxu0
    %780 = vmatprep.subr.bf16.mxu0 %v557
    %781 = vmatpush1.bf16.msra.mxu0 %v556
    %782 = vmatprep.subr.bf16.mxu0 %v561
    %783 = vmatpush1.bf16.msra.mxu0 %v560
    %784 = vmatprep.subr.bf16.mxu0 %v565
    %785 = vmatpush1.bf16.msra.mxu0 %v564
    %786 = vmatprep.subr.bf16.mxu0 %v569
    %787 = vmatpush1.bf16.msra.mxu0 %v568
    %788 = vmatprep.subr.bf16.mxu0 %v573
    %789 = vmatpush1.bf16.msra.mxu0 %v572
    %790 = vmatprep.subr.bf16.mxu0 %v577
    %791 = vmatpush1.bf16.msra.mxu0 %v576
    %792 = vmatprep.subr.bf16.mxu0 %v581
    %793 = vmatpush1.bf16.msra.mxu0 %v580
    %794 = vmatprep.subr.bf16.mxu0 %v585
    %795 = vmatpush1.bf16.msra.mxu0 %v584
    %796 = vmatprep.subr.bf16.mxu0 0
    %797 = vmatpush1.bf16.msra.mxu0 0
    %798 = vmatprep.subr.bf16.mxu0 0
    %799 = vmatpush1.bf16.msra.mxu0 0
    %800 = vmatprep.subr.bf16.mxu0 0
    %801 = vmatpush1.bf16.msra.mxu0 0
    %802 = vmatprep.subr.bf16.mxu0 0
    %803 = vmatpush1.bf16.msra.mxu0 0
    %804 = vmatprep.subr.bf16.mxu0 0
    %805 = vmatpush1.bf16.msra.mxu0 0
    %806 = vmatprep.subr.bf16.mxu0 0
    %807 = vmatpush1.bf16.msra.mxu0 0
    %808 = vmatprep.subr.bf16.mxu0 0
    %809 = vmatpush1.bf16.msra.mxu0 0
    %810 = vmatprep.subr.bf16.mxu0 0
    %811 = vmatpush1.bf16.msra.mxu0 0
    %812 = vmatprep.mubr.bf16.mxu0 0
    %813 = vmatmul.mubr.bf16.gmra.mrb[0].mxu0 %v738
    %v814 = vpop.f32.mrb[0].mxu0
    %v815 = vadd.f32 0.0, %v814
    %v816 = vpop.f32.mrb[0].mxu0
    %v817 = vadd.f32 0.0, %v816
    %v818 = vpop.f32.mrb[0].mxu0
    %v819 = vpop.f32.mrb[0].mxu0
    %820 = vdwg.mxu0
    %v821 = vadd.f32 %v734, %v774
    %v822 = vadd.f32 %v735, %v776
    %v823 = vadd.f32 %v736, %v815
    %v824 = vadd.f32 %v737, %v817
    %v825 = vxor.u32 %v821, 2147483648
    %v826 = vmul.f32 %v825, 1.442695
    %v827 = vpow.pop %v826
    %v828 = vadd.f32 %v827, 1.0
    %v829 = vrcp.pop %v828
    %v830 = vmul.f32 1.0, %v829
    %v831 = vxor.u32 %v822, 2147483648
    %v832 = vmul.f32 %v831, 1.442695
    %v833 = vpow.pop %v832
    %v834 = vadd.f32 %v833, 1.0
    %v835 = vrcp.pop %v834
    %v836 = vmul.f32 1.0, %v835
    %v837 = vtanh.pop %v823
    %v838 = vxor.u32 %v824, 2147483648
    %v839 = vmul.f32 %v838, 1.442695
    %v840 = vpow.pop %v839
    %v841 = vadd.f32 %v840, 1.0
    %v842 = vrcp.pop %v841
    %v843 = vmul.f32 1.0, %v842
    %v844 = vmul.f32 %v836, %v732
    %v845 = vmul.f32 %v830, %v837
    %v846 = vadd.f32 %v844, %v845
    %v847 = vtanh.pop %v846
    %v848 = vmul.f32 %v843, %v847
    %849 = vst [vmem:[#allocation4] sm:$0xff] %v846
    %850 = vst [vmem:[#allocation3] sm:$0xff] %v848
    %s851 = scalar_lea.vmem [#allocation17], 8
    %852 = vst [vmem:[%s851] sm:$0xff] %v848
    %v853 = vld [vmem:[#allocation3] sm:$0xff]
    %v854 = vld [vmem:[#allocation4] sm:$0xff]
    %s855 = scalar_lea.vmem [#allocation2], 64
    %v856 = vld [vmem:[%s855] sm:$0xff]
    %v857 = vld [vmem:[%s855 + $0x8] sm:$0xff]
    %v858 = vld [vmem:[%s855 + $0x10] sm:$0xff]
    %v859 = vld [vmem:[%s855 + $0x18] sm:$0xff]
    %v860 = vpack.c.bf16 %v853, %v853
    %861 = vmatprep.subr.bf16.mxu0 %v555
    %862 = vmatpush1.bf16.msra.mxu0 %v554
    %863 = vmatprep.subr.bf16.mxu0 %v559
    %864 = vmatpush1.bf16.msra.mxu0 %v558
    %865 = vmatprep.subr.bf16.mxu0 %v563
    %866 = vmatpush1.bf16.msra.mxu0 %v562
    %867 = vmatprep.subr.bf16.mxu0 %v567
    %868 = vmatpush1.bf16.msra.mxu0 %v566
    %869 = vmatprep.subr.bf16.mxu0 %v571
    %870 = vmatpush1.bf16.msra.mxu0 %v570
    %871 = vmatprep.subr.bf16.mxu0 %v575
    %872 = vmatpush1.bf16.msra.mxu0 %v574
    %873 = vmatprep.subr.bf16.mxu0 %v579
    %874 = vmatpush1.bf16.msra.mxu0 %v578
    %875 = vmatprep.subr.bf16.mxu0 %v583
    %876 = vmatpush1.bf16.msra.mxu0 %v582
    %877 = vmatprep.subr.bf16.mxu0 0
    %878 = vmatpush1.bf16.msra.mxu0 0
    %879 = vmatprep.subr.bf16.mxu0 0
    %880 = vmatpush1.bf16.msra.mxu0 0
    %881 = vmatprep.subr.bf16.mxu0 0
    %882 = vmatpush1.bf16.msra.mxu0 0
    %883 = vmatprep.subr.bf16.mxu0 0
    %884 = vmatpush1.bf16.msra.mxu0 0
    %885 = vmatprep.subr.bf16.mxu0 0
    %886 = vmatpush1.bf16.msra.mxu0 0
    %887 = vmatprep.subr.bf16.mxu0 0
    %888 = vmatpush1.bf16.msra.mxu0 0
    %889 = vmatprep.subr.bf16.mxu0 0
    %890 = vmatpush1.bf16.msra.mxu0 0
    %891 = vmatprep.subr.bf16.mxu0 0
    %892 = vmatpush1.bf16.msra.mxu0 0
    %893 = vmatprep.mubr.bf16.mxu0 0
    %894 = vmatmul.mubr.bf16.gmra.mrb[0].mxu0 %v860
    %v895 = vpop.f32.mrb[0].mxu0
    %v896 = vadd.f32 0.0, %v895
    %v897 = vpop.f32.mrb[0].mxu0
    %v898 = vadd.f32 0.0, %v897
    %v899 = vpop.f32.mrb[0].mxu0
    %v900 = vpop.f32.mrb[0].mxu0
    %901 = vdwg.mxu0
    %902 = vmatprep.subr.bf16.mxu0 %v557
    %903 = vmatpush1.bf16.msra.mxu0 %v556
    %904 = vmatprep.subr.bf16.mxu0 %v561
    %905 = vmatpush1.bf16.msra.mxu0 %v560
    %906 = vmatprep.subr.bf16.mxu0 %v565
    %907 = vmatpush1.bf16.msra.mxu0 %v564
    %908 = vmatprep.subr.bf16.mxu0 %v569
    %909 = vmatpush1.bf16.msra.mxu0 %v568
    %910 = vmatprep.subr.bf16.mxu0 %v573
    %911 = vmatpush1.bf16.msra.mxu0 %v572
    %912 = vmatprep.subr.bf16.mxu0 %v577
    %913 = vmatpush1.bf16.msra.mxu0 %v576
    %914 = vmatprep.subr.bf16.mxu0 %v581
    %915 = vmatpush1.bf16.msra.mxu0 %v580
    %916 = vmatprep.subr.bf16.mxu0 %v585
    %917 = vmatpush1.bf16.msra.mxu0 %v584
    %918 = vmatprep.subr.bf16.mxu0 0
    %919 = vmatpush1.bf16.msra.mxu0 0
    %920 = vmatprep.subr.bf16.mxu0 0
    %921 = vmatpush1.bf16.msra.mxu0 0
    %922 = vmatprep.subr.bf16.mxu0 0
    %923 = vmatpush1.bf16.msra.mxu0 0
    %924 = vmatprep.subr.bf16.mxu0 0
    %925 = vmatpush1.bf16.msra.mxu0 0
    %926 = vmatprep.subr.bf16.mxu0 0
    %927 = vmatpush1.bf16.msra.mxu0 0
    %928 = vmatprep.subr.bf16.mxu0 0
    %929 = vmatpush1.bf16.msra.mxu0 0
    %930 = vmatprep.subr.bf16.mxu0 0
    %931 = vmatpush1.bf16.msra.mxu0 0
    %932 = vmatprep.subr.bf16.mxu0 0
    %933 = vmatpush1.bf16.msra.mxu0 0
    %934 = vmatprep.mubr.bf16.mxu0 0
    %935 = vmatmul.mubr.bf16.gmra.mrb[0].mxu0 %v860
    %v936 = vpop.f32.mrb[0].mxu0
    %v937 = vadd.f32 0.0, %v936
    %v938 = vpop.f32.mrb[0].mxu0
    %v939 = vadd.f32 0.0, %v938
    %v940 = vpop.f32.mrb[0].mxu0
    %v941 = vpop.f32.mrb[0].mxu0
    %942 = vdwg.mxu0
    %v943 = vadd.f32 %v856, %v896
    %v944 = vadd.f32 %v857, %v898
    %v945 = vadd.f32 %v858, %v937
    %v946 = vadd.f32 %v859, %v939
    %v947 = vxor.u32 %v943, 2147483648
    %v948 = vmul.f32 %v947, 1.442695
    %v949 = vpow.pop %v948
    %v950 = vadd.f32 %v949, 1.0
    %v951 = vrcp.pop %v950
    %v952 = vmul.f32 1.0, %v951
    %v953 = vxor.u32 %v944, 2147483648
    %v954 = vmul.f32 %v953, 1.442695
    %v955 = vpow.pop %v954
    %v956 = vadd.f32 %v955, 1.0
    %v957 = vrcp.pop %v956
    %v958 = vmul.f32 1.0, %v957
    %v959 = vtanh.pop %v945
    %v960 = vxor.u32 %v946, 2147483648
    %v961 = vmul.f32 %v960, 1.442695
    %v962 = vpow.pop %v961
    %v963 = vadd.f32 %v962, 1.0
    %v964 = vrcp.pop %v963
    %v965 = vmul.f32 1.0, %v964
    %v966 = vmul.f32 %v958, %v854
    %v967 = vmul.f32 %v952, %v959
    %v968 = vadd.f32 %v966, %v967
    %v969 = vtanh.pop %v968
    %v970 = vmul.f32 %v965, %v969
    %971 = vst [vmem:[#allocation4] sm:$0xff] %v968
    %972 = vst [vmem:[#allocation3] sm:$0xff] %v970
    %s973 = scalar_lea.vmem [#allocation17], 16
    %974 = vst [vmem:[%s973] sm:$0xff] %v970
    %v975 = vld [vmem:[#allocation3] sm:$0xff]
    %v976 = vld [vmem:[#allocation4] sm:$0xff]
    %s977 = scalar_lea.vmem [#allocation2], 96
    %v978 = vld [vmem:[%s977] sm:$0xff]
    %v979 = vld [vmem:[%s977 + $0x8] sm:$0xff]
    %v980 = vld [vmem:[%s977 + $0x10] sm:$0xff]
    %v981 = vld [vmem:[%s977 + $0x18] sm:$0xff]
    %v982 = vpack.c.bf16 %v975, %v975
    %983 = vmatprep.subr.bf16.mxu0 %v555
    %984 = vmatpush1.bf16.msra.mxu0 %v554
    %985 = vmatprep.subr.bf16.mxu0 %v559
    %986 = vmatpush1.bf16.msra.mxu0 %v558
    %987 = vmatprep.subr.bf16.mxu0 %v563
    %988 = vmatpush1.bf16.msra.mxu0 %v562
    %989 = vmatprep.subr.bf16.mxu0 %v567
    %990 = vmatpush1.bf16.msra.mxu0 %v566
    %991 = vmatprep.subr.bf16.mxu0 %v571
    %992 = vmatpush1.bf16.msra.mxu0 %v570
    %993 = vmatprep.subr.bf16.mxu0 %v575
    %994 = vmatpush1.bf16.msra.mxu0 %v574
    %995 = vmatprep.subr.bf16.mxu0 %v579
    %996 = vmatpush1.bf16.msra.mxu0 %v578
    %997 = vmatprep.subr.bf16.mxu0 %v583
    %998 = vmatpush1.bf16.msra.mxu0 %v582
    %999 = vmatprep.subr.bf16.mxu0 0
    %1000 = vmatpush1.bf16.msra.mxu0 0
    %1001 = vmatprep.subr.bf16.mxu0 0
    %1002 = vmatpush1.bf16.msra.mxu0 0
    %1003 = vmatprep.subr.bf16.mxu0 0
    %1004 = vmatpush1.bf16.msra.mxu0 0
    %1005 = vmatprep.subr.bf16.mxu0 0
    %1006 = vmatpush1.bf16.msra.mxu0 0
    %1007 = vmatprep.subr.bf16.mxu0 0
    %1008 = vmatpush1.bf16.msra.mxu0 0
    %1009 = vmatprep.subr.bf16.mxu0 0
    %1010 = vmatpush1.bf16.msra.mxu0 0
    %1011 = vmatprep.subr.bf16.mxu0 0
    %1012 = vmatpush1.bf16.msra.mxu0 0
    %1013 = vmatprep.subr.bf16.mxu0 0
    %1014 = vmatpush1.bf16.msra.mxu0 0
    %1015 = vmatprep.mubr.bf16.mxu0 0
    %1016 = vmatmul.mubr.bf16.gmra.mrb[0].mxu0 %v982
    %v1017 = vpop.f32.mrb[0].mxu0
    %v1018 = vadd.f32 0.0, %v1017
    %v1019 = vpop.f32.mrb[0].mxu0
    %v1020 = vadd.f32 0.0, %v1019
    %v1021 = vpop.f32.mrb[0].mxu0
    %v1022 = vpop.f32.mrb[0].mxu0
    %1023 = vdwg.mxu0
    %1024 = vmatprep.subr.bf16.mxu0 %v557
    %1025 = vmatpush1.bf16.msra.mxu0 %v556
    %1026 = vmatprep.subr.bf16.mxu0 %v561
    %1027 = vmatpush1.bf16.msra.mxu0 %v560
    %1028 = vmatprep.subr.bf16.mxu0 %v565
    %1029 = vmatpush1.bf16.msra.mxu0 %v564
    %1030 = vmatprep.subr.bf16.mxu0 %v569
    %1031 = vmatpush1.bf16.msra.mxu0 %v568
    %1032 = vmatprep.subr.bf16.mxu0 %v573
    %1033 = vmatpush1.bf16.msra.mxu0 %v572
    %1034 = vmatprep.subr.bf16.mxu0 %v577
    %1035 = vmatpush1.bf16.msra.mxu0 %v576
    %1036 = vmatprep.subr.bf16.mxu0 %v581
    %1037 = vmatpush1.bf16.msra.mxu0 %v580
    %1038 = vmatprep.subr.bf16.mxu0 %v585
    %1039 = vmatpush1.bf16.msra.mxu0 %v584
    %1040 = vmatprep.subr.bf16.mxu0 0
    %1041 = vmatpush1.bf16.msra.mxu0 0
    %1042 = vmatprep.subr.bf16.mxu0 0
    %1043 = vmatpush1.bf16.msra.mxu0 0
    %1044 = vmatprep.subr.bf16.mxu0 0
    %1045 = vmatpush1.bf16.msra.mxu0 0
    %1046 = vmatprep.subr.bf16.mxu0 0
    %1047 = vmatpush1.bf16.msra.mxu0 0
    %1048 = vmatprep.subr.bf16.mxu0 0
    %1049 = vmatpush1.bf16.msra.mxu0 0
    %1050 = vmatprep.subr.bf16.mxu0 0
    %1051 = vmatpush1.bf16.msra.mxu0 0
    %1052 = vmatprep.subr.bf16.mxu0 0
    %1053 = vmatpush1.bf16.msra.mxu0 0
    %1054 = vmatprep.subr.bf16.mxu0 0
    %1055 = vmatpush1.bf16.msra.mxu0 0
    %1056 = vmatprep.mubr.bf16.mxu0 0
    %1057 = vmatmul.mubr.bf16.gmra.mrb[0].mxu0 %v982
    %v1058 = vpop.f32.mrb[0].mxu0
    %v1059 = vadd.f32 0.0, %v1058
    %v1060 = vpop.f32.mrb[0].mxu0
    %v1061 = vadd.f32 0.0, %v1060
    %v1062 = vpop.f32.mrb[0].mxu0
    %v1063 = vpop.f32.mrb[0].mxu0
    %1064 = vdwg.mxu0
    %v1065 = vadd.f32 %v978, %v1018
    %v1066 = vadd.f32 %v979, %v1020
    %v1067 = vadd.f32 %v980, %v1059
    %v1068 = vadd.f32 %v981, %v1061
    %v1069 = vxor.u32 %v1065, 2147483648
    %v1070 = vmul.f32 %v1069, 1.442695
    %v1071 = vpow.pop %v1070
    %v1072 = vadd.f32 %v1071, 1.0
    %v1073 = vrcp.pop %v1072
    %v1074 = vmul.f32 1.0, %v1073
    %v1075 = vxor.u32 %v1066, 2147483648
    %v1076 = vmul.f32 %v1075, 1.442695
    %v1077 = vpow.pop %v1076
    %v1078 = vadd.f32 %v1077, 1.0
    %v1079 = vrcp.pop %v1078
    %v1080 = vmul.f32 1.0, %v1079
    %v1081 = vtanh.pop %v1067
    %v1082 = vxor.u32 %v1068, 2147483648
    %v1083 = vmul.f32 %v1082, 1.442695
    %v1084 = vpow.pop %v1083
    %v1085 = vadd.f32 %v1084, 1.0
    %v1086 = vrcp.pop %v1085
    %v1087 = vmul.f32 1.0, %v1086
    %v1088 = vmul.f32 %v1080, %v976
    %v1089 = vmul.f32 %v1074, %v1081
    %v1090 = vadd.f32 %v1088, %v1089
    %v1091 = vtanh.pop %v1090
    %v1092 = vmul.f32 %v1087, %v1091
    %1093 = vst [vmem:[#allocation4] sm:$0xff] %v1090
    %1094 = vst [vmem:[#allocation3] sm:$0xff] %v1092
    %s1095 = scalar_lea.vmem [#allocation17], 24
    %1096 = vst [vmem:[%s1095] sm:$0xff] %v1092
    %v1097 = vld [vmem:[#allocation3] sm:$0xff]
    %v1098 = vld [vmem:[#allocation4] sm:$0xff]
    %s1099 = scalar_lea.vmem [#allocation2], 128
    %v1100 = vld [vmem:[%s1099] sm:$0xff]
    %v1101 = vld [vmem:[%s1099 + $0x8] sm:$0xff]
    %v1102 = vld [vmem:[%s1099 + $0x10] sm:$0xff]
    %v1103 = vld [vmem:[%s1099 + $0x18] sm:$0xff]
    %v1104 = vpack.c.bf16 %v1097, %v1097
    %1105 = vmatprep.subr.bf16.mxu0 %v555
    %1106 = vmatpush1.bf16.msra.mxu0 %v554
    %1107 = vmatprep.subr.bf16.mxu0 %v559
    %1108 = vmatpush1.bf16.msra.mxu0 %v558
    %1109 = vmatprep.subr.bf16.mxu0 %v563
    %1110 = vmatpush1.bf16.msra.mxu0 %v562
    %1111 = vmatprep.subr.bf16.mxu0 %v567
    %1112 = vmatpush1.bf16.msra.mxu0 %v566
    %1113 = vmatprep.subr.bf16.mxu0 %v571
    %1114 = vmatpush1.bf16.msra.mxu0 %v570
    %1115 = vmatprep.subr.bf16.mxu0 %v575
    %1116 = vmatpush1.bf16.msra.mxu0 %v574
    %1117 = vmatprep.subr.bf16.mxu0 %v579
    %1118 = vmatpush1.bf16.msra.mxu0 %v578
    %1119 = vmatprep.subr.bf16.mxu0 %v583
    %1120 = vmatpush1.bf16.msra.mxu0 %v582
    %1121 = vmatprep.subr.bf16.mxu0 0
    %1122 = vmatpush1.bf16.msra.mxu0 0
    %1123 = vmatprep.subr.bf16.mxu0 0
    %1124 = vmatpush1.bf16.msra.mxu0 0
    %1125 = vmatprep.subr.bf16.mxu0 0
    %1126 = vmatpush1.bf16.msra.mxu0 0
    %1127 = vmatprep.subr.bf16.mxu0 0
    %1128 = vmatpush1.bf16.msra.mxu0 0
    %1129 = vmatprep.subr.bf16.mxu0 0
    %1130 = vmatpush1.bf16.msra.mxu0 0
    %1131 = vmatprep.subr.bf16.mxu0 0
    %1132 = vmatpush1.bf16.msra.mxu0 0
    %1133 = vmatprep.subr.bf16.mxu0 0
    %1134 = vmatpush1.bf16.msra.mxu0 0
    %1135 = vmatprep.subr.bf16.mxu0 0
    %1136 = vmatpush1.bf16.msra.mxu0 0
    %1137 = vmatprep.mubr.bf16.mxu0 0
    %1138 = vmatmul.mubr.bf16.gmra.mrb[0].mxu0 %v1104
    %v1139 = vpop.f32.mrb[0].mxu0
    %v1140 = vadd.f32 0.0, %v1139
    %v1141 = vpop.f32.mrb[0].mxu0
    %v1142 = vadd.f32 0.0, %v1141
    %v1143 = vpop.f32.mrb[0].mxu0
    %v1144 = vpop.f32.mrb[0].mxu0
    %1145 = vdwg.mxu0
    %1146 = vmatprep.subr.bf16.mxu0 %v557
    %1147 = vmatpush1.bf16.msra.mxu0 %v556
    %1148 = vmatprep.subr.bf16.mxu0 %v561
    %1149 = vmatpush1.bf16.msra.mxu0 %v560
    %1150 = vmatprep.subr.bf16.mxu0 %v565
    %1151 = vmatpush1.bf16.msra.mxu0 %v564
    %1152 = vmatprep.subr.bf16.mxu0 %v569
    %1153 = vmatpush1.bf16.msra.mxu0 %v568
    %1154 = vmatprep.subr.bf16.mxu0 %v573
    %1155 = vmatpush1.bf16.msra.mxu0 %v572
    %1156 = vmatprep.subr.bf16.mxu0 %v577
    %1157 = vmatpush1.bf16.msra.mxu0 %v576
    %1158 = vmatprep.subr.bf16.mxu0 %v581
    %1159 = vmatpush1.bf16.msra.mxu0 %v580
    %1160 = vmatprep.subr.bf16.mxu0 %v585
    %1161 = vmatpush1.bf16.msra.mxu0 %v584
    %1162 = vmatprep.subr.bf16.mxu0 0
    %1163 = vmatpush1.bf16.msra.mxu0 0
    %1164 = vmatprep.subr.bf16.mxu0 0
    %1165 = vmatpush1.bf16.msra.mxu0 0
    %1166 = vmatprep.subr.bf16.mxu0 0
    %1167 = vmatpush1.bf16.msra.mxu0 0
    %1168 = vmatprep.subr.bf16.mxu0 0
    %1169 = vmatpush1.bf16.msra.mxu0 0
    %1170 = vmatprep.subr.bf16.mxu0 0
    %1171 = vmatpush1.bf16.msra.mxu0 0
    %1172 = vmatprep.subr.bf16.mxu0 0
    %1173 = vmatpush1.bf16.msra.mxu0 0
    %1174 = vmatprep.subr.bf16.mxu0 0
    %1175 = vmatpush1.bf16.msra.mxu0 0
    %1176 = vmatprep.subr.bf16.mxu0 0
    %1177 = vmatpush1.bf16.msra.mxu0 0
    %1178 = vmatprep.mubr.bf16.mxu0 0
    %1179 = vmatmul.mubr.bf16.gmra.mrb[0].mxu0 %v1104
    %v1180 = vpop.f32.mrb[0].mxu0
    %v1181 = vadd.f32 0.0, %v1180
    %v1182 = vpop.f32.mrb[0].mxu0
    %v1183 = vadd.f32 0.0, %v1182
    %v1184 = vpop.f32.mrb[0].mxu0
    %v1185 = vpop.f32.mrb[0].mxu0
    %1186 = vdwg.mxu0
    %v1187 = vadd.f32 %v1100, %v1140
    %v1188 = vadd.f32 %v1101, %v1142
    %v1189 = vadd.f32 %v1102, %v1181
    %v1190 = vadd.f32 %v1103, %v1183
    %v1191 = vxor.u32 %v1187, 2147483648
    %v1192 = vmul.f32 %v1191, 1.442695
    %v1193 = vpow.pop %v1192
    %v1194 = vadd.f32 %v1193, 1.0
    %v1195 = vrcp.pop %v1194
    %v1196 = vmul.f32 1.0, %v1195
    %v1197 = vxor.u32 %v1188, 2147483648
    %v1198 = vmul.f32 %v1197, 1.442695
    %v1199 = vpow.pop %v1198
    %v1200 = vadd.f32 %v1199, 1.0
    %v1201 = vrcp.pop %v1200
    %v1202 = vmul.f32 1.0, %v1201
    %v1203 = vtanh.pop %v1189
    %v1204 = vxor.u32 %v1190, 2147483648
    %v1205 = vmul.f32 %v1204, 1.442695
    %v1206 = vpow.pop %v1205
    %v1207 = vadd.f32 %v1206, 1.0
    %v1208 = vrcp.pop %v1207
    %v1209 = vmul.f32 1.0, %v1208
    %v1210 = vmul.f32 %v1202, %v1098
    %v1211 = vmul.f32 %v1196, %v1203
    %v1212 = vadd.f32 %v1210, %v1211
    %v1213 = vtanh.pop %v1212
    %v1214 = vmul.f32 %v1209, %v1213
    %1215 = vst [vmem:[#allocation4] sm:$0xff] %v1212
    %1216 = vst [vmem:[#allocation3] sm:$0xff] %v1214
    %s1217 = scalar_lea.vmem [#allocation17], 32
    %1218 = vst [vmem:[%s1217] sm:$0xff] %v1214
    %v1219 = vld [vmem:[#allocation3] sm:$0xff]
    %v1220 = vld [vmem:[#allocation4] sm:$0xff]
    %s1221 = scalar_lea.vmem [#allocation2], 160
    %v1222 = vld [vmem:[%s1221] sm:$0xff]
    %v1223 = vld [vmem:[%s1221 + $0x8] sm:$0xff]
    %v1224 = vld [vmem:[%s1221 + $0x10] sm:$0xff]
    %v1225 = vld [vmem:[%s1221 + $0x18] sm:$0xff]
    %v1226 = vpack.c.bf16 %v1219, %v1219
    %1227 = vmatprep.subr.bf16.mxu0 %v555
    %1228 = vmatpush1.bf16.msra.mxu0 %v554
    %1229 = vmatprep.subr.bf16.mxu0 %v559
    %1230 = vmatpush1.bf16.msra.mxu0 %v558
    %1231 = vmatprep.subr.bf16.mxu0 %v563
    %1232 = vmatpush1.bf16.msra.mxu0 %v562
    %1233 = vmatprep.subr.bf16.mxu0 %v567
    %1234 = vmatpush1.bf16.msra.mxu0 %v566
    %1235 = vmatprep.subr.bf16.mxu0 %v571
    %1236 = vmatpush1.bf16.msra.mxu0 %v570
    %1237 = vmatprep.subr.bf16.mxu0 %v575
    %1238 = vmatpush1.bf16.msra.mxu0 %v574
    %1239 = vmatprep.subr.bf16.mxu0 %v579
    %1240 = vmatpush1.bf16.msra.mxu0 %v578
    %1241 = vmatprep.subr.bf16.mxu0 %v583
    %1242 = vmatpush1.bf16.msra.mxu0 %v582
    %1243 = vmatprep.subr.bf16.mxu0 0
    %1244 = vmatpush1.bf16.msra.mxu0 0
    %1245 = vmatprep.subr.bf16.mxu0 0
    %1246 = vmatpush1.bf16.msra.mxu0 0
    %1247 = vmatprep.subr.bf16.mxu0 0
    %1248 = vmatpush1.bf16.msra.mxu0 0
    %1249 = vmatprep.subr.bf16.mxu0 0
    %1250 = vmatpush1.bf16.msra.mxu0 0
    %1251 = vmatprep.subr.bf16.mxu0 0
    %1252 = vmatpush1.bf16.msra.mxu0 0
    %1253 = vmatprep.subr.bf16.mxu0 0
    %1254 = vmatpush1.bf16.msra.mxu0 0
    %1255 = vmatprep.subr.bf16.mxu0 0
    %1256 = vmatpush1.bf16.msra.mxu0 0
    %1257 = vmatprep.subr.bf16.mxu0 0
    %1258 = vmatpush1.bf16.msra.mxu0 0
    %1259 = vmatprep.mubr.bf16.mxu0 0
    %1260 = vmatmul.mubr.bf16.gmra.mrb[0].mxu0 %v1226
    %v1261 = vpop.f32.mrb[0].mxu0
    %v1262 = vadd.f32 0.0, %v1261
    %v1263 = vpop.f32.mrb[0].mxu0
    %v1264 = vadd.f32 0.0, %v1263
    %v1265 = vpop.f32.mrb[0].mxu0
    %v1266 = vpop.f32.mrb[0].mxu0
    %1267 = vdwg.mxu0
    %1268 = vmatprep.subr.bf16.mxu0 %v557
    %1269 = vmatpush1.bf16.msra.mxu0 %v556
    %1270 = vmatprep.subr.bf16.mxu0 %v561
    %1271 = vmatpush1.bf16.msra.mxu0 %v560
    %1272 = vmatprep.subr.bf16.mxu0 %v565
    %1273 = vmatpush1.bf16.msra.mxu0 %v564
    %1274 = vmatprep.subr.bf16.mxu0 %v569
    %1275 = vmatpush1.bf16.msra.mxu0 %v568
    %1276 = vmatprep.subr.bf16.mxu0 %v573
    %1277 = vmatpush1.bf16.msra.mxu0 %v572
    %1278 = vmatprep.subr.bf16.mxu0 %v577
    %1279 = vmatpush1.bf16.msra.mxu0 %v576
    %1280 = vmatprep.subr.bf16.mxu0 %v581
    %1281 = vmatpush1.bf16.msra.mxu0 %v580
    %1282 = vmatprep.subr.bf16.mxu0 %v585
    %1283 = vmatpush1.bf16.msra.mxu0 %v584
    %1284 = vmatprep.subr.bf16.mxu0 0
    %1285 = vmatpush1.bf16.msra.mxu0 0
    %1286 = vmatprep.subr.bf16.mxu0 0
    %1287 = vmatpush1.bf16.msra.mxu0 0
    %1288 = vmatprep.subr.bf16.mxu0 0
    %1289 = vmatpush1.bf16.msra.mxu0 0
    %1290 = vmatprep.subr.bf16.mxu0 0
    %1291 = vmatpush1.bf16.msra.mxu0 0
    %1292 = vmatprep.subr.bf16.mxu0 0
    %1293 = vmatpush1.bf16.msra.mxu0 0
    %1294 = vmatprep.subr.bf16.mxu0 0
    %1295 = vmatpush1.bf16.msra.mxu0 0
    %1296 = vmatprep.subr.bf16.mxu0 0
    %1297 = vmatpush1.bf16.msra.mxu0 0
    %1298 = vmatprep.subr.bf16.mxu0 0
    %1299 = vmatpush1.bf16.msra.mxu0 0
    %1300 = vmatprep.mubr.bf16.mxu0 0
    %1301 = vmatmul.mubr.bf16.gmra.mrb[0].mxu0 %v1226
    %v1302 = vpop.f32.mrb[0].mxu0
    %v1303 = vadd.f32 0.0, %v1302
    %v1304 = vpop.f32.mrb[0].mxu0
    %v1305 = vadd.f32 0.0, %v1304
    %v1306 = vpop.f32.mrb[0].mxu0
    %v1307 = vpop.f32.mrb[0].mxu0
    %1308 = vdwg.mxu0
    %v1309 = vadd.f32 %v1222, %v1262
    %v1310 = vadd.f32 %v1223, %v1264
    %v1311 = vadd.f32 %v1224, %v1303
    %v1312 = vadd.f32 %v1225, %v1305
    %v1313 = vxor.u32 %v1309, 2147483648
    %v1314 = vmul.f32 %v1313, 1.442695
    %v1315 = vpow.pop %v1314
    %v1316 = vadd.f32 %v1315, 1.0
    %v1317 = vrcp.pop %v1316
    %v1318 = vmul.f32 1.0, %v1317
    %v1319 = vxor.u32 %v1310, 2147483648
    %v1320 = vmul.f32 %v1319, 1.442695
    %v1321 = vpow.pop %v1320
    %v1322 = vadd.f32 %v1321, 1.0
    %v1323 = vrcp.pop %v1322
    %v1324 = vmul.f32 1.0, %v1323
    %v1325 = vtanh.pop %v1311
    %v1326 = vxor.u32 %v1312, 2147483648
    %v1327 = vmul.f32 %v1326, 1.442695
    %v1328 = vpow.pop %v1327
    %v1329 = vadd.f32 %v1328, 1.0
    %v1330 = vrcp.pop %v1329
    %v1331 = vmul.f32 1.0, %v1330
    %v1332 = vmul.f32 %v1324, %v1220
    %v1333 = vmul.f32 %v1318, %v1325
    %v1334 = vadd.f32 %v1332, %v1333
    %v1335 = vtanh.pop %v1334
    %v1336 = vmul.f32 %v1331, %v1335
    %1337 = vst [vmem:[#allocation4] sm:$0xff] %v1334
    %1338 = vst [vmem:[#allocation3] sm:$0xff] %v1336
    %s1339 = scalar_lea.vmem [#allocation17], 40
    %1340 = vst [vmem:[%s1339] sm:$0xff] %v1336
    %v1341 = vld [vmem:[#allocation3] sm:$0xff]
    %v1342 = vld [vmem:[#allocation4] sm:$0xff]
    %s1343 = scalar_lea.vmem [#allocation2], 192
    %v1344 = vld [vmem:[%s1343] sm:$0xff]
    %v1345 = vld [vmem:[%s1343 + $0x8] sm:$0xff]
    %v1346 = vld [vmem:[%s1343 + $0x10] sm:$0xff]
    %v1347 = vld [vmem:[%s1343 + $0x18] sm:$0xff]
    %v1348 = vpack.c.bf16 %v1341, %v1341
    %1349 = vmatprep.subr.bf16.mxu0 %v555
    %1350 = vmatpush1.bf16.msra.mxu0 %v554
    %1351 = vmatprep.subr.bf16.mxu0 %v559
    %1352 = vmatpush1.bf16.msra.mxu0 %v558
    %1353 = vmatprep.subr.bf16.mxu0 %v563
    %1354 = vmatpush1.bf16.msra.mxu0 %v562
    %1355 = vmatprep.subr.bf16.mxu0 %v567
    %1356 = vmatpush1.bf16.msra.mxu0 %v566
    %1357 = vmatprep.subr.bf16.mxu0 %v571
    %1358 = vmatpush1.bf16.msra.mxu0 %v570
    %1359 = vmatprep.subr.bf16.mxu0 %v575
    %1360 = vmatpush1.bf16.msra.mxu0 %v574
    %1361 = vmatprep.subr.bf16.mxu0 %v579
    %1362 = vmatpush1.bf16.msra.mxu0 %v578
    %1363 = vmatprep.subr.bf16.mxu0 %v583
    %1364 = vmatpush1.bf16.msra.mxu0 %v582
    %1365 = vmatprep.subr.bf16.mxu0 0
    %1366 = vmatpush1.bf16.msra.mxu0 0
    %1367 = vmatprep.subr.bf16.mxu0 0
    %1368 = vmatpush1.bf16.msra.mxu0 0
    %1369 = vmatprep.subr.bf16.mxu0 0
    %1370 = vmatpush1.bf16.msra.mxu0 0
    %1371 = vmatprep.subr.bf16.mxu0 0
    %1372 = vmatpush1.bf16.msra.mxu0 0
    %1373 = vmatprep.subr.bf16.mxu0 0
    %1374 = vmatpush1.bf16.msra.mxu0 0
    %1375 = vmatprep.subr.bf16.mxu0 0
    %1376 = vmatpush1.bf16.msra.mxu0 0
    %1377 = vmatprep.subr.bf16.mxu0 0
    %1378 = vmatpush1.bf16.msra.mxu0 0
    %1379 = vmatprep.subr.bf16.mxu0 0
    %1380 = vmatpush1.bf16.msra.mxu0 0
    %1381 = vmatprep.mubr.bf16.mxu0 0
    %1382 = vmatmul.mubr.bf16.gmra.mrb[0].mxu0 %v1348
    %v1383 = vpop.f32.mrb[0].mxu0
    %v1384 = vadd.f32 0.0, %v1383
    %v1385 = vpop.f32.mrb[0].mxu0
    %v1386 = vadd.f32 0.0, %v1385
    %v1387 = vpop.f32.mrb[0].mxu0
    %v1388 = vpop.f32.mrb[0].mxu0
    %1389 = vdwg.mxu0
    %1390 = vmatprep.subr.bf16.mxu0 %v557
    %1391 = vmatpush1.bf16.msra.mxu0 %v556
    %1392 = vmatprep.subr.bf16.mxu0 %v561
    %1393 = vmatpush1.bf16.msra.mxu0 %v560
    %1394 = vmatprep.subr.bf16.mxu0 %v565
    %1395 = vmatpush1.bf16.msra.mxu0 %v564
    %1396 = vmatprep.subr.bf16.mxu0 %v569
    %1397 = vmatpush1.bf16.msra.mxu0 %v568
    %1398 = vmatprep.subr.bf16.mxu0 %v573
    %1399 = vmatpush1.bf16.msra.mxu0 %v572
    %1400 = vmatprep.subr.bf16.mxu0 %v577
    %1401 = vmatpush1.bf16.msra.mxu0 %v576
    %1402 = vmatprep.subr.bf16.mxu0 %v581
    %1403 = vmatpush1.bf16.msra.mxu0 %v580
    %1404 = vmatprep.subr.bf16.mxu0 %v585
    %1405 = vmatpush1.bf16.msra.mxu0 %v584
    %1406 = vmatprep.subr.bf16.mxu0 0
    %1407 = vmatpush1.bf16.msra.mxu0 0
    %1408 = vmatprep.subr.bf16.mxu0 0
    %1409 = vmatpush1.bf16.msra.mxu0 0
    %1410 = vmatprep.subr.bf16.mxu0 0
    %1411 = vmatpush1.bf16.msra.mxu0 0
    %1412 = vmatprep.subr.bf16.mxu0 0
    %1413 = vmatpush1.bf16.msra.mxu0 0
    %1414 = vmatprep.subr.bf16.mxu0 0
    %1415 = vmatpush1.bf16.msra.mxu0 0
    %1416 = vmatprep.subr.bf16.mxu0 0
    %1417 = vmatpush1.bf16.msra.mxu0 0
    %1418 = vmatprep.subr.bf16.mxu0 0
    %1419 = vmatpush1.bf16.msra.mxu0 0
    %1420 = vmatprep.subr.bf16.mxu0 0
    %1421 = vmatpush1.bf16.msra.mxu0 0
    %1422 = vmatprep.mubr.bf16.mxu0 0
    %1423 = vmatmul.mubr.bf16.gmra.mrb[0].mxu0 %v1348
    %v1424 = vpop.f32.mrb[0].mxu0
    %v1425 = vadd.f32 0.0, %v1424
    %v1426 = vpop.f32.mrb[0].mxu0
    %v1427 = vadd.f32 0.0, %v1426
    %v1428 = vpop.f32.mrb[0].mxu0
    %v1429 = vpop.f32.mrb[0].mxu0
    %1430 = vdwg.mxu0
    %v1431 = vadd.f32 %v1344, %v1384
    %v1432 = vadd.f32 %v1345, %v1386
    %v1433 = vadd.f32 %v1346, %v1425
    %v1434 = vadd.f32 %v1347, %v1427
    %v1435 = vxor.u32 %v1431, 2147483648
    %v1436 = vmul.f32 %v1435, 1.442695
    %v1437 = vpow.pop %v1436
    %v1438 = vadd.f32 %v1437, 1.0
    %v1439 = vrcp.pop %v1438
    %v1440 = vmul.f32 1.0, %v1439
    %v1441 = vxor.u32 %v1432, 2147483648
    %v1442 = vmul.f32 %v1441, 1.442695
    %v1443 = vpow.pop %v1442
    %v1444 = vadd.f32 %v1443, 1.0
    %v1445 = vrcp.pop %v1444
    %v1446 = vmul.f32 1.0, %v1445
    %v1447 = vtanh.pop %v1433
    %v1448 = vxor.u32 %v1434, 2147483648
    %v1449 = vmul.f32 %v1448, 1.442695
    %v1450 = vpow.pop %v1449
    %v1451 = vadd.f32 %v1450, 1.0
    %v1452 = vrcp.pop %v1451
    %v1453 = vmul.f32 1.0, %v1452
    %v1454 = vmul.f32 %v1446, %v1342
    %v1455 = vmul.f32 %v1440, %v1447
    %v1456 = vadd.f32 %v1454, %v1455
    %v1457 = vtanh.pop %v1456
    %v1458 = vmul.f32 %v1453, %v1457
    %1459 = vst [vmem:[#allocation4] sm:$0xff] %v1456
    %1460 = vst [vmem:[#allocation3] sm:$0xff] %v1458
    %s1461 = scalar_lea.vmem [#allocation17], 48
    %1462 = vst [vmem:[%s1461] sm:$0xff] %v1458
    %v1463 = vld [vmem:[#allocation3] sm:$0xff]
    %v1464 = vld [vmem:[#allocation4] sm:$0xff]
    %s1465 = scalar_lea.vmem [#allocation2], 224
    %v1466 = vld [vmem:[%s1465] sm:$0xff]
    %v1467 = vld [vmem:[%s1465 + $0x8] sm:$0xff]
    %v1468 = vld [vmem:[%s1465 + $0x10] sm:$0xff]
    %v1469 = vld [vmem:[%s1465 + $0x18] sm:$0xff]
    %v1470 = vpack.c.bf16 %v1463, %v1463
    %1471 = vmatprep.subr.bf16.mxu0 %v555
    %1472 = vmatpush1.bf16.msra.mxu0 %v554
    %1473 = vmatprep.subr.bf16.mxu0 %v559
    %1474 = vmatpush1.bf16.msra.mxu0 %v558
    %1475 = vmatprep.subr.bf16.mxu0 %v563
    %1476 = vmatpush1.bf16.msra.mxu0 %v562
    %1477 = vmatprep.subr.bf16.mxu0 %v567
    %1478 = vmatpush1.bf16.msra.mxu0 %v566
    %1479 = vmatprep.subr.bf16.mxu0 %v571
    %1480 = vmatpush1.bf16.msra.mxu0 %v570
    %1481 = vmatprep.subr.bf16.mxu0 %v575
    %1482 = vmatpush1.bf16.msra.mxu0 %v574
    %1483 = vmatprep.subr.bf16.mxu0 %v579
    %1484 = vmatpush1.bf16.msra.mxu0 %v578
    %1485 = vmatprep.subr.bf16.mxu0 %v583
    %1486 = vmatpush1.bf16.msra.mxu0 %v582
    %1487 = vmatprep.subr.bf16.mxu0 0
    %1488 = vmatpush1.bf16.msra.mxu0 0
    %1489 = vmatprep.subr.bf16.mxu0 0
    %1490 = vmatpush1.bf16.msra.mxu0 0
    %1491 = vmatprep.subr.bf16.mxu0 0
    %1492 = vmatpush1.bf16.msra.mxu0 0
    %1493 = vmatprep.subr.bf16.mxu0 0
    %1494 = vmatpush1.bf16.msra.mxu0 0
    %1495 = vmatprep.subr.bf16.mxu0 0
    %1496 = vmatpush1.bf16.msra.mxu0 0
    %1497 = vmatprep.subr.bf16.mxu0 0
    %1498 = vmatpush1.bf16.msra.mxu0 0
    %1499 = vmatprep.subr.bf16.mxu0 0
    %1500 = vmatpush1.bf16.msra.mxu0 0
    %1501 = vmatprep.subr.bf16.mxu0 0
    %1502 = vmatpush1.bf16.msra.mxu0 0
    %1503 = vmatprep.mubr.bf16.mxu0 0
    %1504 = vmatmul.mubr.bf16.gmra.mrb[0].mxu0 %v1470
    %v1505 = vpop.f32.mrb[0].mxu0
    %v1506 = vadd.f32 0.0, %v1505
    %v1507 = vpop.f32.mrb[0].mxu0
    %v1508 = vadd.f32 0.0, %v1507
    %v1509 = vpop.f32.mrb[0].mxu0
    %v1510 = vpop.f32.mrb[0].mxu0
    %1511 = vdwg.mxu0
    %1512 = vmatprep.subr.bf16.mxu0 %v557
    %1513 = vmatpush1.bf16.msra.mxu0 %v556
    %1514 = vmatprep.subr.bf16.mxu0 %v561
    %1515 = vmatpush1.bf16.msra.mxu0 %v560
    %1516 = vmatprep.subr.bf16.mxu0 %v565
    %1517 = vmatpush1.bf16.msra.mxu0 %v564
    %1518 = vmatprep.subr.bf16.mxu0 %v569
    %1519 = vmatpush1.bf16.msra.mxu0 %v568
    %1520 = vmatprep.subr.bf16.mxu0 %v573
    %1521 = vmatpush1.bf16.msra.mxu0 %v572
    %1522 = vmatprep.subr.bf16.mxu0 %v577
    %1523 = vmatpush1.bf16.msra.mxu0 %v576
    %1524 = vmatprep.subr.bf16.mxu0 %v581
    %1525 = vmatpush1.bf16.msra.mxu0 %v580
    %1526 = vmatprep.subr.bf16.mxu0 %v585
    %1527 = vmatpush1.bf16.msra.mxu0 %v584
    %1528 = vmatprep.subr.bf16.mxu0 0
    %1529 = vmatpush1.bf16.msra.mxu0 0
    %1530 = vmatprep.subr.bf16.mxu0 0
    %1531 = vmatpush1.bf16.msra.mxu0 0
    %1532 = vmatprep.subr.bf16.mxu0 0
    %1533 = vmatpush1.bf16.msra.mxu0 0
    %1534 = vmatprep.subr.bf16.mxu0 0
    %1535 = vmatpush1.bf16.msra.mxu0 0
    %1536 = vmatprep.subr.bf16.mxu0 0
    %1537 = vmatpush1.bf16.msra.mxu0 0
    %1538 = vmatprep.subr.bf16.mxu0 0
    %1539 = vmatpush1.bf16.msra.mxu0 0
    %1540 = vmatprep.subr.bf16.mxu0 0
    %1541 = vmatpush1.bf16.msra.mxu0 0
    %1542 = vmatprep.subr.bf16.mxu0 0
    %1543 = vmatpush1.bf16.msra.mxu0 0
    %1544 = vmatprep.mubr.bf16.mxu0 0
    %1545 = vmatmul.mubr.bf16.gmra.mrb[0].mxu0 %v1470
    %v1546 = vpop.f32.mrb[0].mxu0
    %v1547 = vadd.f32 0.0, %v1546
    %v1548 = vpop.f32.mrb[0].mxu0
    %v1549 = vadd.f32 0.0, %v1548
    %v1550 = vpop.f32.mrb[0].mxu0
    %v1551 = vpop.f32.mrb[0].mxu0
    %1552 = vdwg.mxu0
    %v1553 = vadd.f32 %v1466, %v1506
    %v1554 = vadd.f32 %v1467, %v1508
    %v1555 = vadd.f32 %v1468, %v1547
    %v1556 = vadd.f32 %v1469, %v1549
    %v1557 = vxor.u32 %v1553, 2147483648
    %v1558 = vmul.f32 %v1557, 1.442695
    %v1559 = vpow.pop %v1558
    %v1560 = vadd.f32 %v1559, 1.0
    %v1561 = vrcp.pop %v1560
    %v1562 = vmul.f32 1.0, %v1561
    %v1563 = vxor.u32 %v1554, 2147483648
    %v1564 = vmul.f32 %v1563, 1.442695
    %v1565 = vpow.pop %v1564
    %v1566 = vadd.f32 %v1565, 1.0
    %v1567 = vrcp.pop %v1566
    %v1568 = vmul.f32 1.0, %v1567
    %v1569 = vtanh.pop %v1555
    %v1570 = vxor.u32 %v1556, 2147483648
    %v1571 = vmul.f32 %v1570, 1.442695
    %v1572 = vpow.pop %v1571
    %v1573 = vadd.f32 %v1572, 1.0
    %v1574 = vrcp.pop %v1573
    %v1575 = vmul.f32 1.0, %v1574
    %v1576 = vmul.f32 %v1568, %v1464
    %v1577 = vmul.f32 %v1562, %v1569
    %v1578 = vadd.f32 %v1576, %v1577
    %v1579 = vtanh.pop %v1578
    %v1580 = vmul.f32 %v1575, %v1579
    %1581 = vst [vmem:[#allocation4] sm:$0xff] %v1578
    %1582 = vst [vmem:[#allocation3] sm:$0xff] %v1580
    %s1583 = scalar_lea.vmem [#allocation17], 56
    %1584 = vst [vmem:[%s1583] sm:$0xff] %v1580
    %v1585 = vld [vmem:[#allocation3] sm:$0xff]
    %v1586 = vld [vmem:[#allocation4] sm:$0xff]
    %s1587 = scalar_lea.vmem [#allocation2], 256
    %v1588 = vld [vmem:[%s1587] sm:$0xff]
    %v1589 = vld [vmem:[%s1587 + $0x8] sm:$0xff]
    %v1590 = vld [vmem:[%s1587 + $0x10] sm:$0xff]
    %v1591 = vld [vmem:[%s1587 + $0x18] sm:$0xff]
    %v1592 = vpack.c.bf16 %v1585, %v1585
    %1593 = vmatprep.subr.bf16.mxu0 %v555
    %1594 = vmatpush1.bf16.msra.mxu0 %v554
    %1595 = vmatprep.subr.bf16.mxu0 %v559
    %1596 = vmatpush1.bf16.msra.mxu0 %v558
    %1597 = vmatprep.subr.bf16.mxu0 %v563
    %1598 = vmatpush1.bf16.msra.mxu0 %v562
    %1599 = vmatprep.subr.bf16.mxu0 %v567
    %1600 = vmatpush1.bf16.msra.mxu0 %v566
    %1601 = vmatprep.subr.bf16.mxu0 %v571
    %1602 = vmatpush1.bf16.msra.mxu0 %v570
    %1603 = vmatprep.subr.bf16.mxu0 %v575
    %1604 = vmatpush1.bf16.msra.mxu0 %v574
    %1605 = vmatprep.subr.bf16.mxu0 %v579
    %1606 = vmatpush1.bf16.msra.mxu0 %v578
    %1607 = vmatprep.subr.bf16.mxu0 %v583
    %1608 = vmatpush1.bf16.msra.mxu0 %v582
    %1609 = vmatprep.subr.bf16.mxu0 0
    %1610 = vmatpush1.bf16.msra.mxu0 0
    %1611 = vmatprep.subr.bf16.mxu0 0
    %1612 = vmatpush1.bf16.msra.mxu0 0
    %1613 = vmatprep.subr.bf16.mxu0 0
    %1614 = vmatpush1.bf16.msra.mxu0 0
    %1615 = vmatprep.subr.bf16.mxu0 0
    %1616 = vmatpush1.bf16.msra.mxu0 0
    %1617 = vmatprep.subr.bf16.mxu0 0
    %1618 = vmatpush1.bf16.msra.mxu0 0
    %1619 = vmatprep.subr.bf16.mxu0 0
    %1620 = vmatpush1.bf16.msra.mxu0 0
    %1621 = vmatprep.subr.bf16.mxu0 0
    %1622 = vmatpush1.bf16.msra.mxu0 0
    %1623 = vmatprep.subr.bf16.mxu0 0
    %1624 = vmatpush1.bf16.msra.mxu0 0
    %1625 = vmatprep.mubr.bf16.mxu0 0
    %1626 = vmatmul.mubr.bf16.gmra.mrb[0].mxu0 %v1592
    %v1627 = vpop.f32.mrb[0].mxu0
    %v1628 = vadd.f32 0.0, %v1627
    %v1629 = vpop.f32.mrb[0].mxu0
    %v1630 = vadd.f32 0.0, %v1629
    %v1631 = vpop.f32.mrb[0].mxu0
    %v1632 = vpop.f32.mrb[0].mxu0
    %1633 = vdwg.mxu0
    %1634 = vmatprep.subr.bf16.mxu0 %v557
    %1635 = vmatpush1.bf16.msra.mxu0 %v556
    %1636 = vmatprep.subr.bf16.mxu0 %v561
    %1637 = vmatpush1.bf16.msra.mxu0 %v560
    %1638 = vmatprep.subr.bf16.mxu0 %v565
    %1639 = vmatpush1.bf16.msra.mxu0 %v564
    %1640 = vmatprep.subr.bf16.mxu0 %v569
    %1641 = vmatpush1.bf16.msra.mxu0 %v568
    %1642 = vmatprep.subr.bf16.mxu0 %v573
    %1643 = vmatpush1.bf16.msra.mxu0 %v572
    %1644 = vmatprep.subr.bf16.mxu0 %v577
    %1645 = vmatpush1.bf16.msra.mxu0 %v576
    %1646 = vmatprep.subr.bf16.mxu0 %v581
    %1647 = vmatpush1.bf16.msra.mxu0 %v580
    %1648 = vmatprep.subr.bf16.mxu0 %v585
    %1649 = vmatpush1.bf16.msra.mxu0 %v584
    %1650 = vmatprep.subr.bf16.mxu0 0
    %1651 = vmatpush1.bf16.msra.mxu0 0
    %1652 = vmatprep.subr.bf16.mxu0 0
    %1653 = vmatpush1.bf16.msra.mxu0 0
    %1654 = vmatprep.subr.bf16.mxu0 0
    %1655 = vmatpush1.bf16.msra.mxu0 0
    %1656 = vmatprep.subr.bf16.mxu0 0
    %1657 = vmatpush1.bf16.msra.mxu0 0
    %1658 = vmatprep.subr.bf16.mxu0 0
    %1659 = vmatpush1.bf16.msra.mxu0 0
    %1660 = vmatprep.subr.bf16.mxu0 0
    %1661 = vmatpush1.bf16.msra.mxu0 0
    %1662 = vmatprep.subr.bf16.mxu0 0
    %1663 = vmatpush1.bf16.msra.mxu0 0
    %1664 = vmatprep.subr.bf16.mxu0 0
    %1665 = vmatpush1.bf16.msra.mxu0 0
    %1666 = vmatprep.mubr.bf16.mxu0 0
    %1667 = vmatmul.mubr.bf16.gmra.mrb[0].mxu0 %v1592
    %v1668 = vpop.f32.mrb[0].mxu0
    %v1669 = vadd.f32 0.0, %v1668
    %v1670 = vpop.f32.mrb[0].mxu0
    %v1671 = vadd.f32 0.0, %v1670
    %v1672 = vpop.f32.mrb[0].mxu0
    %v1673 = vpop.f32.mrb[0].mxu0
    %1674 = vdwg.mxu0
    %v1675 = vadd.f32 %v1588, %v1628
    %v1676 = vadd.f32 %v1589, %v1630
    %v1677 = vadd.f32 %v1590, %v1669
    %v1678 = vadd.f32 %v1591, %v1671
    %v1679 = vxor.u32 %v1675, 2147483648
    %v1680 = vmul.f32 %v1679, 1.442695
    %v1681 = vpow.pop %v1680
    %v1682 = vadd.f32 %v1681, 1.0
    %v1683 = vrcp.pop %v1682
    %v1684 = vmul.f32 1.0, %v1683
    %v1685 = vxor.u32 %v1676, 2147483648
    %v1686 = vmul.f32 %v1685, 1.442695
    %v1687 = vpow.pop %v1686
    %v1688 = vadd.f32 %v1687, 1.0
    %v1689 = vrcp.pop %v1688
    %v1690 = vmul.f32 1.0, %v1689
    %v1691 = vtanh.pop %v1677
    %v1692 = vxor.u32 %v1678, 2147483648
    %v1693 = vmul.f32 %v1692, 1.442695
    %v1694 = vpow.pop %v1693
    %v1695 = vadd.f32 %v1694, 1.0
    %v1696 = vrcp.pop %v1695
    %v1697 = vmul.f32 1.0, %v1696
    %v1698 = vmul.f32 %v1690, %v1586
    %v1699 = vmul.f32 %v1684, %v1691
    %v1700 = vadd.f32 %v1698, %v1699
    %v1701 = vtanh.pop %v1700
    %v1702 = vmul.f32 %v1697, %v1701
    %1703 = vst [vmem:[#allocation4] sm:$0xff] %v1700
    %1704 = vst [vmem:[#allocation3] sm:$0xff] %v1702
    %s1705 = scalar_lea.vmem [#allocation17], 64
    %1706 = vst [vmem:[%s1705] sm:$0xff] %v1702
    %v1707 = vld [vmem:[#allocation13] sm:$0xff]
    %v1708 = vld [vmem:[#allocation13 + $0x8] sm:$0xff]
    %v1709 = vld [vmem:[#allocation13 + $0x10] sm:$0xff]
    %v1710 = vld [vmem:[#allocation13 + $0x18] sm:$0xff]
    %v1711 = vld [vmem:[#allocation13 + $0x20] sm:$0xff]
    %v1712 = vld [vmem:[#allocation13 + $0x28] sm:$0xff]
    %v1713 = vld [vmem:[#allocation13 + $0x30] sm:$0xff]
    %v1714 = vld [vmem:[#allocation13 + $0x38] sm:$0xff]
    %v1715 = vld [vmem:[#allocation13 + $0x40] sm:$0xff]
    %v1716 = vld [vmem:[#allocation13 + $0x48] sm:$0xff]
    %v1717 = vld [vmem:[#allocation13 + $0x50] sm:$0xff]
    %v1718 = vld [vmem:[#allocation13 + $0x58] sm:$0xff]
    %v1719 = vld [vmem:[#allocation13 + $0x60] sm:$0xff]
    %v1720 = vld [vmem:[#allocation13 + $0x68] sm:$0xff]
    %v1721 = vld [vmem:[#allocation13 + $0x70] sm:$0xff]
    %v1722 = vld [vmem:[#allocation13 + $0x78] sm:$0xff]
    %v1723 = vld [vmem:[#allocation13 + $0x80] sm:$0xff]
    %v1724 = vld [vmem:[#allocation13 + $0x88] sm:$0xff]
    %v1725 = vld [vmem:[#allocation13 + $0x90] sm:$0xff]
    %v1726 = vld [vmem:[#allocation13 + $0x98] sm:$0xff]
    %v1727 = vld [vmem:[#allocation13 + $0xa0] sm:$0xff]
    %v1728 = vld [vmem:[#allocation13 + $0xa8] sm:$0xff]
    %v1729 = vld [vmem:[#allocation13 + $0xb0] sm:$0xff]
    %v1730 = vld [vmem:[#allocation13 + $0xb8] sm:$0xff]
    %v1731 = vld [vmem:[#allocation13 + $0xc0] sm:$0xff]
    %v1732 = vld [vmem:[#allocation13 + $0xc8] sm:$0xff]
    %v1733 = vld [vmem:[#allocation13 + $0xd0] sm:$0xff]
    %v1734 = vld [vmem:[#allocation13 + $0xd8] sm:$0xff]
    %v1735 = vld [vmem:[#allocation13 + $0xe0] sm:$0xff]
    %v1736 = vld [vmem:[#allocation13 + $0xe8] sm:$0xff]
    %v1737 = vld [vmem:[#allocation13 + $0xf0] sm:$0xff]
    %v1738 = vld [vmem:[#allocation13 + $0xf8] sm:$0xff]
    %v1739 = vld [vmem:[#allocation14] sm:$0xff]
    %v1740 = vld [vmem:[#allocation14 + $0x8] sm:$0xff]
    %v1741 = vld [vmem:[#allocation14 + $0x10] sm:$0xff]
    %v1742 = vld [vmem:[#allocation14 + $0x18] sm:$0xff]
    %v1743 = vld [vmem:[#allocation14 + $0x20] sm:$0xff]
    %v1744 = vld [vmem:[#allocation14 + $0x28] sm:$0xff]
    %v1745 = vld [vmem:[#allocation14 + $0x30] sm:$0xff]
    %v1746 = vld [vmem:[#allocation14 + $0x38] sm:$0xff]
    %v1747 = vld [vmem:[#allocation14 + $0x40] sm:$0xff]
    %v1748 = vld [vmem:[#allocation14 + $0x48] sm:$0xff]
    %v1749 = vld [vmem:[#allocation14 + $0x50] sm:$0xff]
    %v1750 = vld [vmem:[#allocation14 + $0x58] sm:$0xff]
    %v1751 = vld [vmem:[#allocation14 + $0x60] sm:$0xff]
    %v1752 = vld [vmem:[#allocation14 + $0x68] sm:$0xff]
    %v1753 = vld [vmem:[#allocation14 + $0x70] sm:$0xff]
    %v1754 = vld [vmem:[#allocation14 + $0x78] sm:$0xff]
    %v1755 = vld [vmem:[#allocation14 + $0x80] sm:$0xff]
    %v1756 = vld [vmem:[#allocation14 + $0x88] sm:$0xff]
    %v1757 = vld [vmem:[#allocation14 + $0x90] sm:$0xff]
    %v1758 = vld [vmem:[#allocation14 + $0x98] sm:$0xff]
    %v1759 = vld [vmem:[#allocation14 + $0xa0] sm:$0xff]
    %v1760 = vld [vmem:[#allocation14 + $0xa8] sm:$0xff]
    %v1761 = vld [vmem:[#allocation14 + $0xb0] sm:$0xff]
    %v1762 = vld [vmem:[#allocation14 + $0xb8] sm:$0xff]
    %v1763 = vld [vmem:[#allocation14 + $0xc0] sm:$0xff]
    %v1764 = vld [vmem:[#allocation14 + $0xc8] sm:$0xff]
    %v1765 = vld [vmem:[#allocation14 + $0xd0] sm:$0xff]
    %v1766 = vld [vmem:[#allocation14 + $0xd8] sm:$0xff]
    %v1767 = vld [vmem:[#allocation14 + $0xe0] sm:$0xff]
    %v1768 = vld [vmem:[#allocation14 + $0xe8] sm:$0xff]
    %v1769 = vld [vmem:[#allocation14 + $0xf0] sm:$0xff]
    %v1770 = vld [vmem:[#allocation14 + $0xf8] sm:$0xff]
    %v1771 = vld [vmem:[#allocation16] sm:$0xf]
    %v1772 = vld [vmem:[#allocation17] sm:$0xff]
    %v1773 = vld [vmem:[#allocation17 + $0x8] sm:$0xff]
    %v1774 = vld [vmem:[#allocation17 + $0x10] sm:$0xff]
    %v1775 = vld [vmem:[#allocation17 + $0x18] sm:$0xff]
    %v1776 = vld [vmem:[#allocation17 + $0x20] sm:$0xff]
    %v1777 = vld [vmem:[#allocation17 + $0x28] sm:$0xff]
    %v1778 = vld [vmem:[#allocation17 + $0x30] sm:$0xff]
    %v1779 = vld [vmem:[#allocation17 + $0x38] sm:$0xff]
    %v1780 = vld [vmem:[#allocation17 + $0x40] sm:$0xff]
    %v1781 = vpack.c.bf16 %v1773, %v1772
    %v1782 = vpack.c.bf16 %v1775, %v1774
    %v1783 = vpack.c.bf16 %v1777, %v1776
    %v1784 = vpack.c.bf16 %v1779, %v1778
    %v1785 = vpack.c.bf16 %v1780, %v1780
    %v1787 = vlaneseq
    %v1788 = vshrl.u32 %v1787, 7
    %v1789 = vsub.s32 0, %v1788
    %v1790 = vrot.slane %v1771, %v1789
    %v1791 = vlaneseq
    %v1792 = vshrl.u32 %v1791, 7
    %v1793 = vsub.s32 1, %v1792
    %v1794 = vrot.slane %v1771, %v1793
    %v1795 = vlaneseq
    %v1796 = vshrl.u32 %v1795, 7
    %v1797 = vsub.s32 2, %v1796
    %v1798 = vrot.slane %v1771, %v1797
    %v1799 = vlaneseq
    %v1800 = vshrl.u32 %v1799, 7
    %v1801 = vsub.s32 3, %v1800
    %v1802 = vrot.slane %v1771, %v1801
    %v1839 = vunpack.c.l.b16 %v1707
    %v1840 = vunpack.c.h.b16 %v1707
    %v1841 = vunpack.c.l.b16 %v1708
    %v1842 = vunpack.c.h.b16 %v1708
    %v1843 = vunpack.c.l.b16 %v1709
    %v1844 = vunpack.c.h.b16 %v1709
    %v1845 = vunpack.c.l.b16 %v1710
    %v1846 = vunpack.c.h.b16 %v1710
    %v1847 = vunpack.c.l.b16 %v1711
    %v1848 = vunpack.c.h.b16 %v1711
    %v1849 = vunpack.c.l.b16 %v1712
    %v1850 = vunpack.c.h.b16 %v1712
    %v1851 = vunpack.c.l.b16 %v1713
    %v1852 = vunpack.c.h.b16 %v1713
    %v1853 = vunpack.c.l.b16 %v1714
    %v1854 = vunpack.c.h.b16 %v1714
    %v1855 = vunpack.c.l.b16 %v1715
    %v1856 = vunpack.c.h.b16 %v1715
    %v1857 = vunpack.c.l.b16 %v1716
    %v1858 = vunpack.c.h.b16 %v1716
    %v1859 = vunpack.c.l.b16 %v1717
    %v1860 = vunpack.c.h.b16 %v1717
    %v1861 = vunpack.c.l.b16 %v1718
    %v1862 = vunpack.c.h.b16 %v1718
    %v1863 = vunpack.c.l.b16 %v1719
    %v1864 = vunpack.c.h.b16 %v1719
    %v1865 = vunpack.c.l.b16 %v1720
    %v1866 = vunpack.c.h.b16 %v1720
    %v1867 = vunpack.c.l.b16 %v1721
    %v1868 = vunpack.c.h.b16 %v1721
    %v1869 = vunpack.c.l.b16 %v1722
    %v1870 = vunpack.c.h.b16 %v1722
    %v1871 = vunpack.c.l.b16 %v1723
    %v1872 = vunpack.c.h.b16 %v1723
    %v1873 = vunpack.c.l.b16 %v1724
    %v1874 = vunpack.c.h.b16 %v1724
    %v1875 = vunpack.c.l.b16 %v1725
    %v1876 = vunpack.c.h.b16 %v1725
    %v1877 = vunpack.c.l.b16 %v1726
    %v1878 = vunpack.c.h.b16 %v1726
    %v1879 = vunpack.c.l.b16 %v1727
    %v1880 = vunpack.c.h.b16 %v1727
    %v1881 = vunpack.c.l.b16 %v1728
    %v1882 = vunpack.c.h.b16 %v1728
    %v1883 = vunpack.c.l.b16 %v1729
    %v1884 = vunpack.c.h.b16 %v1729
    %v1885 = vunpack.c.l.b16 %v1730
    %v1886 = vunpack.c.h.b16 %v1730
    %v1887 = vunpack.c.l.b16 %v1731
    %v1888 = vunpack.c.h.b16 %v1731
    %v1889 = vunpack.c.l.b16 %v1732
    %v1890 = vunpack.c.h.b16 %v1732
    %v1891 = vunpack.c.l.b16 %v1733
    %v1892 = vunpack.c.h.b16 %v1733
    %v1893 = vunpack.c.l.b16 %v1734
    %v1894 = vunpack.c.h.b16 %v1734
    %v1895 = vunpack.c.l.b16 %v1735
    %v1896 = vunpack.c.h.b16 %v1735
    %v1897 = vunpack.c.l.b16 %v1736
    %v1898 = vunpack.c.h.b16 %v1736
    %v1899 = vunpack.c.l.b16 %v1737
    %v1900 = vunpack.c.h.b16 %v1737
    %v1901 = vunpack.c.l.b16 %v1738
    %v1902 = vunpack.c.h.b16 %v1738
    %v1903 = vpack.c.b16 %v1843, %v1839
    %v1904 = vpack.c.b16 %v1844, %v1840
    %v1905 = vpack.c.b16 %v1845, %v1841
    %v1906 = vpack.c.b16 %v1846, %v1842
    %v1907 = vpack.c.b16 %v1851, %v1847
    %v1908 = vpack.c.b16 %v1852, %v1848
    %v1909 = vpack.c.b16 %v1853, %v1849
    %v1910 = vpack.c.b16 %v1854, %v1850
    %v1911 = vpack.c.b16 %v1859, %v1855
    %v1912 = vpack.c.b16 %v1860, %v1856
    %v1913 = vpack.c.b16 %v1861, %v1857
    %v1914 = vpack.c.b16 %v1862, %v1858
    %v1915 = vpack.c.b16 %v1867, %v1863
    %v1916 = vpack.c.b16 %v1868, %v1864
    %v1917 = vpack.c.b16 %v1869, %v1865
    %v1918 = vpack.c.b16 %v1870, %v1866
    %v1919 = vpack.c.b16 %v1875, %v1871
    %v1920 = vpack.c.b16 %v1876, %v1872
    %v1921 = vpack.c.b16 %v1877, %v1873
    %v1922 = vpack.c.b16 %v1878, %v1874
    %v1923 = vpack.c.b16 %v1883, %v1879
    %v1924 = vpack.c.b16 %v1884, %v1880
    %v1925 = vpack.c.b16 %v1885, %v1881
    %v1926 = vpack.c.b16 %v1886, %v1882
    %v1927 = vpack.c.b16 %v1891, %v1887
    %v1928 = vpack.c.b16 %v1892, %v1888
    %v1929 = vpack.c.b16 %v1893, %v1889
    %v1930 = vpack.c.b16 %v1894, %v1890
    %v1931 = vpack.c.b16 %v1899, %v1895
    %v1932 = vpack.c.b16 %v1900, %v1896
    %v1933 = vpack.c.b16 %v1901, %v1897
    %v1934 = vpack.c.b16 %v1902, %v1898
    %1967 = vmatprep.subr.bf16.mxu0 %v1904
    %1968 = vmatpush1.bf16.msra.mxu0 %v1903
    %1969 = vmatprep.subr.bf16.mxu0 %v1908
    %1970 = vmatpush1.bf16.msra.mxu0 %v1907
    %1971 = vmatprep.subr.bf16.mxu0 %v1912
    %1972 = vmatpush1.bf16.msra.mxu0 %v1911
    %1973 = vmatprep.subr.bf16.mxu0 %v1916
    %1974 = vmatpush1.bf16.msra.mxu0 %v1915
    %1975 = vmatprep.subr.bf16.mxu0 %v1920
    %1976 = vmatpush1.bf16.msra.mxu0 %v1919
    %1977 = vmatprep.subr.bf16.mxu0 %v1924
    %1978 = vmatpush1.bf16.msra.mxu0 %v1923
    %1979 = vmatprep.subr.bf16.mxu0 %v1928
    %1980 = vmatpush1.bf16.msra.mxu0 %v1927
    %1981 = vmatprep.subr.bf16.mxu0 %v1932
    %1982 = vmatpush1.bf16.msra.mxu0 %v1931
    %1983 = vmatprep.subr.bf16.mxu0 0
    %1984 = vmatpush1.bf16.msra.mxu0 0
    %1985 = vmatprep.subr.bf16.mxu0 0
    %1986 = vmatpush1.bf16.msra.mxu0 0
    %1987 = vmatprep.subr.bf16.mxu0 0
    %1988 = vmatpush1.bf16.msra.mxu0 0
    %1989 = vmatprep.subr.bf16.mxu0 0
    %1990 = vmatpush1.bf16.msra.mxu0 0
    %1991 = vmatprep.subr.bf16.mxu0 0
    %1992 = vmatpush1.bf16.msra.mxu0 0
    %1993 = vmatprep.subr.bf16.mxu0 0
    %1994 = vmatpush1.bf16.msra.mxu0 0
    %1995 = vmatprep.subr.bf16.mxu0 0
    %1996 = vmatpush1.bf16.msra.mxu0 0
    %1997 = vmatprep.subr.bf16.mxu0 0
    %1998 = vmatpush1.bf16.msra.mxu0 0
    %1999 = vmatprep.mubr.bf16.mxu0 0
    %2000 = vmatmul.mubr.bf16.gmra.mrb[0].mxu0 %v1781
    %v2001 = vpop.f32.mrb[0].mxu0
    %v2002 = vadd.f32 %v1790, %v2001
    %v2003 = vpop.f32.mrb[0].mxu0
    %v2004 = vadd.f32 %v1794, %v2003
    %v2005 = vpop.f32.mrb[0].mxu0
    %v2006 = vadd.f32 %v1790, %v2005
    %v2007 = vpop.f32.mrb[0].mxu0
    %v2008 = vadd.f32 %v1794, %v2007
    %2009 = vmatprep.mubr.bf16.mxu0 0
    %2010 = vmatmul.mubr.bf16.gmra.mrb[0].mxu0 %v1782
    %v2011 = vpop.f32.mrb[0].mxu0
    %v2012 = vadd.f32 %v1790, %v2011
    %v2013 = vpop.f32.mrb[0].mxu0
    %v2014 = vadd.f32 %v1794, %v2013
    %v2015 = vpop.f32.mrb[0].mxu0
    %v2016 = vadd.f32 %v1790, %v2015
    %v2017 = vpop.f32.mrb[0].mxu0
    %v2018 = vadd.f32 %v1794, %v2017
    %2019 = vmatprep.mubr.bf16.mxu0 0
    %2020 = vmatmul.mubr.bf16.gmra.mrb[0].mxu0 %v1783
    %v2021 = vpop.f32.mrb[0].mxu0
    %v2022 = vadd.f32 %v1790, %v2021
    %v2023 = vpop.f32.mrb[0].mxu0
    %v2024 = vadd.f32 %v1794, %v2023
    %v2025 = vpop.f32.mrb[0].mxu0
    %v2026 = vadd.f32 %v1790, %v2025
    %v2027 = vpop.f32.mrb[0].mxu0
    %v2028 = vadd.f32 %v1794, %v2027
    %2029 = vmatprep.mubr.bf16.mxu0 0
    %2030 = vmatmul.mubr.bf16.gmra.mrb[0].mxu0 %v1784
    %v2031 = vpop.f32.mrb[0].mxu0
    %v2032 = vadd.f32 %v1790, %v2031
    %v2033 = vpop.f32.mrb[0].mxu0
    %v2034 = vadd.f32 %v1794, %v2033
    %v2035 = vpop.f32.mrb[0].mxu0
    %v2036 = vadd.f32 %v1790, %v2035
    %v2037 = vpop.f32.mrb[0].mxu0
    %v2038 = vadd.f32 %v1794, %v2037
    %2039 = vmatprep.mubr.bf16.mxu0 0
    %2040 = vmatmul.mubr.bf16.gmra.mrb[0].mxu0 %v1785
    %v2041 = vpop.f32.mrb[0].mxu0
    %v2042 = vadd.f32 %v1790, %v2041
    %v2043 = vpop.f32.mrb[0].mxu0
    %v2044 = vadd.f32 %v1794, %v2043
    %v2045 = vpop.f32.mrb[0].mxu0
    %v2046 = vpop.f32.mrb[0].mxu0
    %2047 = vdwg.mxu0
    %2048 = vmatprep.subr.bf16.mxu0 %v1906
    %2049 = vmatpush1.bf16.msra.mxu0 %v1905
    %2050 = vmatprep.subr.bf16.mxu0 %v1910
    %2051 = vmatpush1.bf16.msra.mxu0 %v1909
    %2052 = vmatprep.subr.bf16.mxu0 %v1914
    %2053 = vmatpush1.bf16.msra.mxu0 %v1913
    %2054 = vmatprep.subr.bf16.mxu0 %v1918
    %2055 = vmatpush1.bf16.msra.mxu0 %v1917
    %2056 = vmatprep.subr.bf16.mxu0 %v1922
    %2057 = vmatpush1.bf16.msra.mxu0 %v1921
    %2058 = vmatprep.subr.bf16.mxu0 %v1926
    %2059 = vmatpush1.bf16.msra.mxu0 %v1925
    %2060 = vmatprep.subr.bf16.mxu0 %v1930
    %2061 = vmatpush1.bf16.msra.mxu0 %v1929
    %2062 = vmatprep.subr.bf16.mxu0 %v1934
    %2063 = vmatpush1.bf16.msra.mxu0 %v1933
    %2064 = vmatprep.subr.bf16.mxu0 0
    %2065 = vmatpush1.bf16.msra.mxu0 0
    %2066 = vmatprep.subr.bf16.mxu0 0
    %2067 = vmatpush1.bf16.msra.mxu0 0
    %2068 = vmatprep.subr.bf16.mxu0 0
    %2069 = vmatpush1.bf16.msra.mxu0 0
    %2070 = vmatprep.subr.bf16.mxu0 0
    %2071 = vmatpush1.bf16.msra.mxu0 0
    %2072 = vmatprep.subr.bf16.mxu0 0
    %2073 = vmatpush1.bf16.msra.mxu0 0
    %2074 = vmatprep.subr.bf16.mxu0 0
    %2075 = vmatpush1.bf16.msra.mxu0 0
    %2076 = vmatprep.subr.bf16.mxu0 0
    %2077 = vmatpush1.bf16.msra.mxu0 0
    %2078 = vmatprep.subr.bf16.mxu0 0
    %2079 = vmatpush1.bf16.msra.mxu0 0
    %2080 = vmatprep.mubr.bf16.mxu0 0
    %2081 = vmatmul.mubr.bf16.gmra.mrb[0].mxu0 %v1781
    %v2082 = vpop.f32.mrb[0].mxu0
    %v2083 = vadd.f32 %v1798, %v2082
    %v2084 = vpop.f32.mrb[0].mxu0
    %v2085 = vadd.f32 %v1802, %v2084
    %v2086 = vpop.f32.mrb[0].mxu0
    %v2087 = vadd.f32 %v1798, %v2086
    %v2088 = vpop.f32.mrb[0].mxu0
    %v2089 = vadd.f32 %v1802, %v2088
    %2090 = vmatprep.mubr.bf16.mxu0 0
    %2091 = vmatmul.mubr.bf16.gmra.mrb[0].mxu0 %v1782
    %v2092 = vpop.f32.mrb[0].mxu0
    %v2093 = vadd.f32 %v1798, %v2092
    %v2094 = vpop.f32.mrb[0].mxu0
    %v2095 = vadd.f32 %v1802, %v2094
    %v2096 = vpop.f32.mrb[0].mxu0
    %v2097 = vadd.f32 %v1798, %v2096
    %v2098 = vpop.f32.mrb[0].mxu0
    %v2099 = vadd.f32 %v1802, %v2098
    %2100 = vmatprep.mubr.bf16.mxu0 0
    %2101 = vmatmul.mubr.bf16.gmra.mrb[0].mxu0 %v1783
    %v2102 = vpop.f32.mrb[0].mxu0
    %v2103 = vadd.f32 %v1798, %v2102
    %v2104 = vpop.f32.mrb[0].mxu0
    %v2105 = vadd.f32 %v1802, %v2104
    %v2106 = vpop.f32.mrb[0].mxu0
    %v2107 = vadd.f32 %v1798, %v2106
    %v2108 = vpop.f32.mrb[0].mxu0
    %v2109 = vadd.f32 %v1802, %v2108
    %2110 = vmatprep.mubr.bf16.mxu0 0
    %2111 = vmatmul.mubr.bf16.gmra.mrb[0].mxu0 %v1784
    %v2112 = vpop.f32.mrb[0].mxu0
    %v2113 = vadd.f32 %v1798, %v2112
    %v2114 = vpop.f32.mrb[0].mxu0
    %v2115 = vadd.f32 %v1802, %v2114
    %v2116 = vpop.f32.mrb[0].mxu0
    %v2117 = vadd.f32 %v1798, %v2116
    %v2118 = vpop.f32.mrb[0].mxu0
    %v2119 = vadd.f32 %v1802, %v2118
    %2120 = vmatprep.mubr.bf16.mxu0 0
    %2121 = vmatmul.mubr.bf16.gmra.mrb[0].mxu0 %v1785
    %v2122 = vpop.f32.mrb[0].mxu0
    %v2123 = vadd.f32 %v1798, %v2122
    %v2124 = vpop.f32.mrb[0].mxu0
    %v2125 = vadd.f32 %v1802, %v2124
    %v2126 = vpop.f32.mrb[0].mxu0
    %v2127 = vpop.f32.mrb[0].mxu0
    %2128 = vdwg.mxu0
    %2129 = vst [vmem:[#allocation2] sm:$0xff] %v2002
    %2130 = vst [vmem:[#allocation2 + $0x8] sm:$0xff] %v2004
    %2131 = vst [vmem:[#allocation2 + $0x10] sm:$0xff] %v2083
    %2132 = vst [vmem:[#allocation2 + $0x18] sm:$0xff] %v2085
    %2133 = vst [vmem:[#allocation2 + $0x20] sm:$0xff] %v2006
    %2134 = vst [vmem:[#allocation2 + $0x28] sm:$0xff] %v2008
    %2135 = vst [vmem:[#allocation2 + $0x30] sm:$0xff] %v2087
    %2136 = vst [vmem:[#allocation2 + $0x38] sm:$0xff] %v2089
    %2137 = vst [vmem:[#allocation2 + $0x40] sm:$0xff] %v2012
    %2138 = vst [vmem:[#allocation2 + $0x48] sm:$0xff] %v2014
    %2139 = vst [vmem:[#allocation2 + $0x50] sm:$0xff] %v2093
    %2140 = vst [vmem:[#allocation2 + $0x58] sm:$0xff] %v2095
    %2141 = vst [vmem:[#allocation2 + $0x60] sm:$0xff] %v2016
    %2142 = vst [vmem:[#allocation2 + $0x68] sm:$0xff] %v2018
    %2143 = vst [vmem:[#allocation2 + $0x70] sm:$0xff] %v2097
    %2144 = vst [vmem:[#allocation2 + $0x78] sm:$0xff] %v2099
    %2145 = vst [vmem:[#allocation2 + $0x80] sm:$0xff] %v2022
    %2146 = vst [vmem:[#allocation2 + $0x88] sm:$0xff] %v2024
    %2147 = vst [vmem:[#allocation2 + $0x90] sm:$0xff] %v2103
    %2148 = vst [vmem:[#allocation2 + $0x98] sm:$0xff] %v2105
    %2149 = vst [vmem:[#allocation2 + $0xa0] sm:$0xff] %v2026
    %2150 = vst [vmem:[#allocation2 + $0xa8] sm:$0xff] %v2028
    %2151 = vst [vmem:[#allocation2 + $0xb0] sm:$0xff] %v2107
    %2152 = vst [vmem:[#allocation2 + $0xb8] sm:$0xff] %v2109
    %2153 = vst [vmem:[#allocation2 + $0xc0] sm:$0xff] %v2032
    %2154 = vst [vmem:[#allocation2 + $0xc8] sm:$0xff] %v2034
    %2155 = vst [vmem:[#allocation2 + $0xd0] sm:$0xff] %v2113
    %2156 = vst [vmem:[#allocation2 + $0xd8] sm:$0xff] %v2115
    %2157 = vst [vmem:[#allocation2 + $0xe0] sm:$0xff] %v2036
    %2158 = vst [vmem:[#allocation2 + $0xe8] sm:$0xff] %v2038
    %2159 = vst [vmem:[#allocation2 + $0xf0] sm:$0xff] %v2117
    %2160 = vst [vmem:[#allocation2 + $0xf8] sm:$0xff] %v2119
    %2161 = vst [vmem:[#allocation2 + $0x100] sm:$0xff] %v2042
    %2162 = vst [vmem:[#allocation2 + $0x108] sm:$0xff] %v2044
    %2163 = vst [vmem:[#allocation2 + $0x110] sm:$0xff] %v2123
    %2164 = vst [vmem:[#allocation2 + $0x118] sm:$0xff] %v2125
    %2165 = vst [vmem:[#allocation3] sm:$0xff] 0.0
    %2166 = vst [vmem:[#allocation4] sm:$0xff] 0.0
    %v2167 = vld [vmem:[#allocation3] sm:$0xff]
    %v2168 = vld [vmem:[#allocation4] sm:$0xff]
    %v2169 = vld [vmem:[#allocation2] sm:$0xff]
    %v2170 = vld [vmem:[#allocation2 + $0x8] sm:$0xff]
    %v2171 = vld [vmem:[#allocation2 + $0x10] sm:$0xff]
    %v2172 = vld [vmem:[#allocation2 + $0x18] sm:$0xff]
    %v2173 = vpack.c.bf16 %v2167, %v2167
    %v2206 = vunpack.c.l.b16 %v1739
    %v2207 = vunpack.c.h.b16 %v1739
    %v2208 = vunpack.c.l.b16 %v1740
    %v2209 = vunpack.c.h.b16 %v1740
    %v2210 = vunpack.c.l.b16 %v1741
    %v2211 = vunpack.c.h.b16 %v1741
    %v2212 = vunpack.c.l.b16 %v1742
    %v2213 = vunpack.c.h.b16 %v1742
    %v2214 = vunpack.c.l.b16 %v1743
    %v2215 = vunpack.c.h.b16 %v1743
    %v2216 = vunpack.c.l.b16 %v1744
    %v2217 = vunpack.c.h.b16 %v1744
    %v2218 = vunpack.c.l.b16 %v1745
    %v2219 = vunpack.c.h.b16 %v1745
    %v2220 = vunpack.c.l.b16 %v1746
    %v2221 = vunpack.c.h.b16 %v1746
    %v2222 = vunpack.c.l.b16 %v1747
    %v2223 = vunpack.c.h.b16 %v1747
    %v2224 = vunpack.c.l.b16 %v1748
    %v2225 = vunpack.c.h.b16 %v1748
    %v2226 = vunpack.c.l.b16 %v1749
    %v2227 = vunpack.c.h.b16 %v1749
    %v2228 = vunpack.c.l.b16 %v1750
    %v2229 = vunpack.c.h.b16 %v1750
    %v2230 = vunpack.c.l.b16 %v1751
    %v2231 = vunpack.c.h.b16 %v1751
    %v2232 = vunpack.c.l.b16 %v1752
    %v2233 = vunpack.c.h.b16 %v1752
    %v2234 = vunpack.c.l.b16 %v1753
    %v2235 = vunpack.c.h.b16 %v1753
    %v2236 = vunpack.c.l.b16 %v1754
    %v2237 = vunpack.c.h.b16 %v1754
    %v2238 = vunpack.c.l.b16 %v1755
    %v2239 = vunpack.c.h.b16 %v1755
    %v2240 = vunpack.c.l.b16 %v1756
    %v2241 = vunpack.c.h.b16 %v1756
    %v2242 = vunpack.c.l.b16 %v1757
    %v2243 = vunpack.c.h.b16 %v1757
    %v2244 = vunpack.c.l.b16 %v1758
    %v2245 = vunpack.c.h.b16 %v1758
    %v2246 = vunpack.c.l.b16 %v1759
    %v2247 = vunpack.c.h.b16 %v1759
    %v2248 = vunpack.c.l.b16 %v1760
    %v2249 = vunpack.c.h.b16 %v1760
    %v2250 = vunpack.c.l.b16 %v1761
    %v2251 = vunpack.c.h.b16 %v1761
    %v2252 = vunpack.c.l.b16 %v1762
    %v2253 = vunpack.c.h.b16 %v1762
    %v2254 = vunpack.c.l.b16 %v1763
    %v2255 = vunpack.c.h.b16 %v1763
    %v2256 = vunpack.c.l.b16 %v1764
    %v2257 = vunpack.c.h.b16 %v1764
    %v2258 = vunpack.c.l.b16 %v1765
    %v2259 = vunpack.c.h.b16 %v1765
    %v2260 = vunpack.c.l.b16 %v1766
    %v2261 = vunpack.c.h.b16 %v1766
    %v2262 = vunpack.c.l.b16 %v1767
    %v2263 = vunpack.c.h.b16 %v1767
    %v2264 = vunpack.c.l.b16 %v1768
    %v2265 = vunpack.c.h.b16 %v1768
    %v2266 = vunpack.c.l.b16 %v1769
    %v2267 = vunpack.c.h.b16 %v1769
    %v2268 = vunpack.c.l.b16 %v1770
    %v2269 = vunpack.c.h.b16 %v1770
    %v2270 = vpack.c.b16 %v2210, %v2206
    %v2271 = vpack.c.b16 %v2211, %v2207
    %v2272 = vpack.c.b16 %v2212, %v2208
    %v2273 = vpack.c.b16 %v2213, %v2209
    %v2274 = vpack.c.b16 %v2218, %v2214
    %v2275 = vpack.c.b16 %v2219, %v2215
    %v2276 = vpack.c.b16 %v2220, %v2216
    %v2277 = vpack.c.b16 %v2221, %v2217
    %v2278 = vpack.c.b16 %v2226, %v2222
    %v2279 = vpack.c.b16 %v2227, %v2223
    %v2280 = vpack.c.b16 %v2228, %v2224
    %v2281 = vpack.c.b16 %v2229, %v2225
    %v2282 = vpack.c.b16 %v2234, %v2230
    %v2283 = vpack.c.b16 %v2235, %v2231
    %v2284 = vpack.c.b16 %v2236, %v2232
    %v2285 = vpack.c.b16 %v2237, %v2233
    %v2286 = vpack.c.b16 %v2242, %v2238
    %v2287 = vpack.c.b16 %v2243, %v2239
    %v2288 = vpack.c.b16 %v2244, %v2240
    %v2289 = vpack.c.b16 %v2245, %v2241
    %v2290 = vpack.c.b16 %v2250, %v2246
    %v2291 = vpack.c.b16 %v2251, %v2247
    %v2292 = vpack.c.b16 %v2252, %v2248
    %v2293 = vpack.c.b16 %v2253, %v2249
    %v2294 = vpack.c.b16 %v2258, %v2254
    %v2295 = vpack.c.b16 %v2259, %v2255
    %v2296 = vpack.c.b16 %v2260, %v2256
    %v2297 = vpack.c.b16 %v2261, %v2257
    %v2298 = vpack.c.b16 %v2266, %v2262
    %v2299 = vpack.c.b16 %v2267, %v2263
    %v2300 = vpack.c.b16 %v2268, %v2264
    %v2301 = vpack.c.b16 %v2269, %v2265
    %2334 = vmatprep.subr.bf16.mxu0 %v2271
    %2335 = vmatpush1.bf16.msra.mxu0 %v2270
    %2336 = vmatprep.subr.bf16.mxu0 %v2275
    %2337 = vmatpush1.bf16.msra.mxu0 %v2274
    %2338 = vmatprep.subr.bf16.mxu0 %v2279
    %2339 = vmatpush1.bf16.msra.mxu0 %v2278
    %2340 = vmatprep.subr.bf16.mxu0 %v2283
    %2341 = vmatpush1.bf16.msra.mxu0 %v2282
    %2342 = vmatprep.subr.bf16.mxu0 %v2287
    %2343 = vmatpush1.bf16.msra.mxu0 %v2286
    %2344 = vmatprep.subr.bf16.mxu0 %v2291
    %2345 = vmatpush1.bf16.msra.mxu0 %v2290
    %2346 = vmatprep.subr.bf16.mxu0 %v2295
    %2347 = vmatpush1.bf16.msra.mxu0 %v2294
    %2348 = vmatprep.subr.bf16.mxu0 %v2299
    %2349 = vmatpush1.bf16.msra.mxu0 %v2298
    %2350 = vmatprep.subr.bf16.mxu0 0
    %2351 = vmatpush1.bf16.msra.mxu0 0
    %2352 = vmatprep.subr.bf16.mxu0 0
    %2353 = vmatpush1.bf16.msra.mxu0 0
    %2354 = vmatprep.subr.bf16.mxu0 0
    %2355 = vmatpush1.bf16.msra.mxu0 0
    %2356 = vmatprep.subr.bf16.mxu0 0
    %2357 = vmatpush1.bf16.msra.mxu0 0
    %2358 = vmatprep.subr.bf16.mxu0 0
    %2359 = vmatpush1.bf16.msra.mxu0 0
    %2360 = vmatprep.subr.bf16.mxu0 0
    %2361 = vmatpush1.bf16.msra.mxu0 0
    %2362 = vmatprep.subr.bf16.mxu0 0
    %2363 = vmatpush1.bf16.msra.mxu0 0
    %2364 = vmatprep.subr.bf16.mxu0 0
    %2365 = vmatpush1.bf16.msra.mxu0 0
    %2366 = vmatprep.mubr.bf16.mxu0 0
    %2367 = vmatmul.mubr.bf16.gmra.mrb[0].mxu0 %v2173
    %v2368 = vpop.f32.mrb[0].mxu0
    %v2369 = vadd.f32 0.0, %v2368
    %v2370 = vpop.f32.mrb[0].mxu0
    %v2371 = vadd.f32 0.0, %v2370
    %v2372 = vpop.f32.mrb[0].mxu0
    %v2373 = vpop.f32.mrb[0].mxu0
    %2374 = vdwg.mxu0
    %2375 = vmatprep.subr.bf16.mxu0 %v2273
    %2376 = vmatpush1.bf16.msra.mxu0 %v2272
    %2377 = vmatprep.subr.bf16.mxu0 %v2277
    %2378 = vmatpush1.bf16.msra.mxu0 %v2276
    %2379 = vmatprep.subr.bf16.mxu0 %v2281
    %2380 = vmatpush1.bf16.msra.mxu0 %v2280
    %2381 = vmatprep.subr.bf16.mxu0 %v2285
    %2382 = vmatpush1.bf16.msra.mxu0 %v2284
    %2383 = vmatprep.subr.bf16.mxu0 %v2289
    %2384 = vmatpush1.bf16.msra.mxu0 %v2288
    %2385 = vmatprep.subr.bf16.mxu0 %v2293
    %2386 = vmatpush1.bf16.msra.mxu0 %v2292
    %2387 = vmatprep.subr.bf16.mxu0 %v2297
    %2388 = vmatpush1.bf16.msra.mxu0 %v2296
    %2389 = vmatprep.subr.bf16.mxu0 %v2301
    %2390 = vmatpush1.bf16.msra.mxu0 %v2300
    %2391 = vmatprep.subr.bf16.mxu0 0
    %2392 = vmatpush1.bf16.msra.mxu0 0
    %2393 = vmatprep.subr.bf16.mxu0 0
    %2394 = vmatpush1.bf16.msra.mxu0 0
    %2395 = vmatprep.subr.bf16.mxu0 0
    %2396 = vmatpush1.bf16.msra.mxu0 0
    %2397 = vmatprep.subr.bf16.mxu0 0
    %2398 = vmatpush1.bf16.msra.mxu0 0
    %2399 = vmatprep.subr.bf16.mxu0 0
    %2400 = vmatpush1.bf16.msra.mxu0 0
    %2401 = vmatprep.subr.bf16.mxu0 0
    %2402 = vmatpush1.bf16.msra.mxu0 0
    %2403 = vmatprep.subr.bf16.mxu0 0
    %2404 = vmatpush1.bf16.msra.mxu0 0
    %2405 = vmatprep.subr.bf16.mxu0 0
    %2406 = vmatpush1.bf16.msra.mxu0 0
    %2407 = vmatprep.mubr.bf16.mxu0 0
    %2408 = vmatmul.mubr.bf16.gmra.mrb[0].mxu0 %v2173
    %v2409 = vpop.f32.mrb[0].mxu0
    %v2410 = vadd.f32 0.0, %v2409
    %v2411 = vpop.f32.mrb[0].mxu0
    %v2412 = vadd.f32 0.0, %v2411
    %v2413 = vpop.f32.mrb[0].mxu0
    %v2414 = vpop.f32.mrb[0].mxu0
    %2415 = vdwg.mxu0
    %v2416 = vadd.f32 %v2169, %v2369
    %v2417 = vadd.f32 %v2170, %v2371
    %v2418 = vadd.f32 %v2171, %v2410
    %v2419 = vadd.f32 %v2172, %v2412
    %v2420 = vxor.u32 %v2416, 2147483648
    %v2421 = vmul.f32 %v2420, 1.442695
    %v2422 = vpow.pop %v2421
    %v2423 = vadd.f32 %v2422, 1.0
    %v2424 = vrcp.pop %v2423
    %v2425 = vmul.f32 1.0, %v2424
    %v2426 = vxor.u32 %v2417, 2147483648
    %v2427 = vmul.f32 %v2426, 1.442695
    %v2428 = vpow.pop %v2427
    %v2429 = vadd.f32 %v2428, 1.0
    %v2430 = vrcp.pop %v2429
    %v2431 = vmul.f32 1.0, %v2430
    %v2432 = vtanh.pop %v2418
    %v2433 = vxor.u32 %v2419, 2147483648
    %v2434 = vmul.f32 %v2433, 1.442695
    %v2435 = vpow.pop %v2434
    %v2436 = vadd.f32 %v2435, 1.0
    %v2437 = vrcp.pop %v2436
    %v2438 = vmul.f32 1.0, %v2437
    %v2439 = vmul.f32 %v2431, %v2168
    %v2440 = vmul.f32 %v2425, %v2432
    %v2441 = vadd.f32 %v2439, %v2440
    %v2442 = vtanh.pop %v2441
    %v2443 = vmul.f32 %v2438, %v2442
    %2444 = vst [vmem:[#allocation4] sm:$0xff] %v2441
    %2445 = vst [vmem:[#allocation3] sm:$0xff] %v2443
    %2446 = vst [vmem:[#allocation17] sm:$0xff] %v2443
    %v2447 = vld [vmem:[#allocation3] sm:$0xff]
    %v2448 = vld [vmem:[#allocation4] sm:$0xff]
    %v2449 = vld [vmem:[%s733] sm:$0xff]
    %v2450 = vld [vmem:[%s733 + $0x8] sm:$0xff]
    %v2451 = vld [vmem:[%s733 + $0x10] sm:$0xff]
    %v2452 = vld [vmem:[%s733 + $0x18] sm:$0xff]
    %v2453 = vpack.c.bf16 %v2447, %v2447
    %2454 = vmatprep.subr.bf16.mxu0 %v2271
    %2455 = vmatpush1.bf16.msra.mxu0 %v2270
    %2456 = vmatprep.subr.bf16.mxu0 %v2275
    %2457 = vmatpush1.bf16.msra.mxu0 %v2274
    %2458 = vmatprep.subr.bf16.mxu0 %v2279
    %2459 = vmatpush1.bf16.msra.mxu0 %v2278
    %2460 = vmatprep.subr.bf16.mxu0 %v2283
    %2461 = vmatpush1.bf16.msra.mxu0 %v2282
    %2462 = vmatprep.subr.bf16.mxu0 %v2287
    %2463 = vmatpush1.bf16.msra.mxu0 %v2286
    %2464 = vmatprep.subr.bf16.mxu0 %v2291
    %2465 = vmatpush1.bf16.msra.mxu0 %v2290
    %2466 = vmatprep.subr.bf16.mxu0 %v2295
    %2467 = vmatpush1.bf16.msra.mxu0 %v2294
    %2468 = vmatprep.subr.bf16.mxu0 %v2299
    %2469 = vmatpush1.bf16.msra.mxu0 %v2298
    %2470 = vmatprep.subr.bf16.mxu0 0
    %2471 = vmatpush1.bf16.msra.mxu0 0
    %2472 = vmatprep.subr.bf16.mxu0 0
    %2473 = vmatpush1.bf16.msra.mxu0 0
    %2474 = vmatprep.subr.bf16.mxu0 0
    %2475 = vmatpush1.bf16.msra.mxu0 0
    %2476 = vmatprep.subr.bf16.mxu0 0
    %2477 = vmatpush1.bf16.msra.mxu0 0
    %2478 = vmatprep.subr.bf16.mxu0 0
    %2479 = vmatpush1.bf16.msra.mxu0 0
    %2480 = vmatprep.subr.bf16.mxu0 0
    %2481 = vmatpush1.bf16.msra.mxu0 0
    %2482 = vmatprep.subr.bf16.mxu0 0
    %2483 = vmatpush1.bf16.msra.mxu0 0
    %2484 = vmatprep.subr.bf16.mxu0 0
    %2485 = vmatpush1.bf16.msra.mxu0 0
    %2486 = vmatprep.mubr.bf16.mxu0 0
    %2487 = vmatmul.mubr.bf16.gmra.mrb[0].mxu0 %v2453
    %v2488 = vpop.f32.mrb[0].mxu0
    %v2489 = vadd.f32 0.0, %v2488
    %v2490 = vpop.f32.mrb[0].mxu0
    %v2491 = vadd.f32 0.0, %v2490
    %v2492 = vpop.f32.mrb[0].mxu0
    %v2493 = vpop.f32.mrb[0].mxu0
    %2494 = vdwg.mxu0
    %2495 = vmatprep.subr.bf16.mxu0 %v2273
    %2496 = vmatpush1.bf16.msra.mxu0 %v2272
    %2497 = vmatprep.subr.bf16.mxu0 %v2277
    %2498 = vmatpush1.bf16.msra.mxu0 %v2276
    %2499 = vmatprep.subr.bf16.mxu0 %v2281
    %2500 = vmatpush1.bf16.msra.mxu0 %v2280
    %2501 = vmatprep.subr.bf16.mxu0 %v2285
    %2502 = vmatpush1.bf16.msra.mxu0 %v2284
    %2503 = vmatprep.subr.bf16.mxu0 %v2289
    %2504 = vmatpush1.bf16.msra.mxu0 %v2288
    %2505 = vmatprep.subr.bf16.mxu0 %v2293
    %2506 = vmatpush1.bf16.msra.mxu0 %v2292
    %2507 = vmatprep.subr.bf16.mxu0 %v2297
    %2508 = vmatpush1.bf16.msra.mxu0 %v2296
    %2509 = vmatprep.subr.bf16.mxu0 %v2301
    %2510 = vmatpush1.bf16.msra.mxu0 %v2300
    %2511 = vmatprep.subr.bf16.mxu0 0
    %2512 = vmatpush1.bf16.msra.mxu0 0
    %2513 = vmatprep.subr.bf16.mxu0 0
    %2514 = vmatpush1.bf16.msra.mxu0 0
    %2515 = vmatprep.subr.bf16.mxu0 0
    %2516 = vmatpush1.bf16.msra.mxu0 0
    %2517 = vmatprep.subr.bf16.mxu0 0
    %2518 = vmatpush1.bf16.msra.mxu0 0
    %2519 = vmatprep.subr.bf16.mxu0 0
    %2520 = vmatpush1.bf16.msra.mxu0 0
    %2521 = vmatprep.subr.bf16.mxu0 0
    %2522 = vmatpush1.bf16.msra.mxu0 0
    %2523 = vmatprep.subr.bf16.mxu0 0
    %2524 = vmatpush1.bf16.msra.mxu0 0
    %2525 = vmatprep.subr.bf16.mxu0 0
    %2526 = vmatpush1.bf16.msra.mxu0 0
    %2527 = vmatprep.mubr.bf16.mxu0 0
    %2528 = vmatmul.mubr.bf16.gmra.mrb[0].mxu0 %v2453
    %v2529 = vpop.f32.mrb[0].mxu0
    %v2530 = vadd.f32 0.0, %v2529
    %v2531 = vpop.f32.mrb[0].mxu0
    %v2532 = vadd.f32 0.0, %v2531
    %v2533 = vpop.f32.mrb[0].mxu0
    %v2534 = vpop.f32.mrb[0].mxu0
    %2535 = vdwg.mxu0
    %v2536 = vadd.f32 %v2449, %v2489
    %v2537 = vadd.f32 %v2450, %v2491
    %v2538 = vadd.f32 %v2451, %v2530
    %v2539 = vadd.f32 %v2452, %v2532
    %v2540 = vxor.u32 %v2536, 2147483648
    %v2541 = vmul.f32 %v2540, 1.442695
    %v2542 = vpow.pop %v2541
    %v2543 = vadd.f32 %v2542, 1.0
    %v2544 = vrcp.pop %v2543
    %v2545 = vmul.f32 1.0, %v2544
    %v2546 = vxor.u32 %v2537, 2147483648
    %v2547 = vmul.f32 %v2546, 1.442695
    %v2548 = vpow.pop %v2547
    %v2549 = vadd.f32 %v2548, 1.0
    %v2550 = vrcp.pop %v2549
    %v2551 = vmul.f32 1.0, %v2550
    %v2552 = vtanh.pop %v2538
    %v2553 = vxor.u32 %v2539, 2147483648
    %v2554 = vmul.f32 %v2553, 1.442695
    %v2555 = vpow.pop %v2554
    %v2556 = vadd.f32 %v2555, 1.0
    %v2557 = vrcp.pop %v2556
    %v2558 = vmul.f32 1.0, %v2557
    %v2559 = vmul.f32 %v2551, %v2448
    %v2560 = vmul.f32 %v2545, %v2552
    %v2561 = vadd.f32 %v2559, %v2560
    %v2562 = vtanh.pop %v2561
    %v2563 = vmul.f32 %v2558, %v2562
    %2564 = vst [vmem:[#allocation4] sm:$0xff] %v2561
    %2565 = vst [vmem:[#allocation3] sm:$0xff] %v2563
    %2566 = vst [vmem:[%s851] sm:$0xff] %v2563
    %v2567 = vld [vmem:[#allocation3] sm:$0xff]
    %v2568 = vld [vmem:[#allocation4] sm:$0xff]
    %v2569 = vld [vmem:[%s855] sm:$0xff]
    %v2570 = vld [vmem:[%s855 + $0x8] sm:$0xff]
    %v2571 = vld [vmem:[%s855 + $0x10] sm:$0xff]
    %v2572 = vld [vmem:[%s855 + $0x18] sm:$0xff]
    %v2573 = vpack.c.bf16 %v2567, %v2567
    %2574 = vmatprep.subr.bf16.mxu0 %v2271
    %2575 = vmatpush1.bf16.msra.mxu0 %v2270
    %2576 = vmatprep.subr.bf16.mxu0 %v2275
    %2577 = vmatpush1.bf16.msra.mxu0 %v2274
    %2578 = vmatprep.subr.bf16.mxu0 %v2279
    %2579 = vmatpush1.bf16.msra.mxu0 %v2278
    %2580 = vmatprep.subr.bf16.mxu0 %v2283
    %2581 = vmatpush1.bf16.msra.mxu0 %v2282
    %2582 = vmatprep.subr.bf16.mxu0 %v2287
    %2583 = vmatpush1.bf16.msra.mxu0 %v2286
    %2584 = vmatprep.subr.bf16.mxu0 %v2291
    %2585 = vmatpush1.bf16.msra.mxu0 %v2290
    %2586 = vmatprep.subr.bf16.mxu0 %v2295
    %2587 = vmatpush1.bf16.msra.mxu0 %v2294
    %2588 = vmatprep.subr.bf16.mxu0 %v2299
    %2589 = vmatpush1.bf16.msra.mxu0 %v2298
    %2590 = vmatprep.subr.bf16.mxu0 0
    %2591 = vmatpush1.bf16.msra.mxu0 0
    %2592 = vmatprep.subr.bf16.mxu0 0
    %2593 = vmatpush1.bf16.msra.mxu0 0
    %2594 = vmatprep.subr.bf16.mxu0 0
    %2595 = vmatpush1.bf16.msra.mxu0 0
    %2596 = vmatprep.subr.bf16.mxu0 0
    %2597 = vmatpush1.bf16.msra.mxu0 0
    %2598 = vmatprep.subr.bf16.mxu0 0
    %2599 = vmatpush1.bf16.msra.mxu0 0
    %2600 = vmatprep.subr.bf16.mxu0 0
    %2601 = vmatpush1.bf16.msra.mxu0 0
    %2602 = vmatprep.subr.bf16.mxu0 0
    %2603 = vmatpush1.bf16.msra.mxu0 0
    %2604 = vmatprep.subr.bf16.mxu0 0
    %2605 = vmatpush1.bf16.msra.mxu0 0
    %2606 = vmatprep.mubr.bf16.mxu0 0
    %2607 = vmatmul.mubr.bf16.gmra.mrb[0].mxu0 %v2573
    %v2608 = vpop.f32.mrb[0].mxu0
    %v2609 = vadd.f32 0.0, %v2608
    %v2610 = vpop.f32.mrb[0].mxu0
    %v2611 = vadd.f32 0.0, %v2610
    %v2612 = vpop.f32.mrb[0].mxu0
    %v2613 = vpop.f32.mrb[0].mxu0
    %2614 = vdwg.mxu0
    %2615 = vmatprep.subr.bf16.mxu0 %v2273
    %2616 = vmatpush1.bf16.msra.mxu0 %v2272
    %2617 = vmatprep.subr.bf16.mxu0 %v2277
    %2618 = vmatpush1.bf16.msra.mxu0 %v2276
    %2619 = vmatprep.subr.bf16.mxu0 %v2281
    %2620 = vmatpush1.bf16.msra.mxu0 %v2280
    %2621 = vmatprep.subr.bf16.mxu0 %v2285
    %2622 = vmatpush1.bf16.msra.mxu0 %v2284
    %2623 = vmatprep.subr.bf16.mxu0 %v2289
    %2624 = vmatpush1.bf16.msra.mxu0 %v2288
    %2625 = vmatprep.subr.bf16.mxu0 %v2293
    %2626 = vmatpush1.bf16.msra.mxu0 %v2292
    %2627 = vmatprep.subr.bf16.mxu0 %v2297
    %2628 = vmatpush1.bf16.msra.mxu0 %v2296
    %2629 = vmatprep.subr.bf16.mxu0 %v2301
    %2630 = vmatpush1.bf16.msra.mxu0 %v2300
    %2631 = vmatprep.subr.bf16.mxu0 0
    %2632 = vmatpush1.bf16.msra.mxu0 0
    %2633 = vmatprep.subr.bf16.mxu0 0
    %2634 = vmatpush1.bf16.msra.mxu0 0
    %2635 = vmatprep.subr.bf16.mxu0 0
    %2636 = vmatpush1.bf16.msra.mxu0 0
    %2637 = vmatprep.subr.bf16.mxu0 0
    %2638 = vmatpush1.bf16.msra.mxu0 0
    %2639 = vmatprep.subr.bf16.mxu0 0
    %2640 = vmatpush1.bf16.msra.mxu0 0
    %2641 = vmatprep.subr.bf16.mxu0 0
    %2642 = vmatpush1.bf16.msra.mxu0 0
    %2643 = vmatprep.subr.bf16.mxu0 0
    %2644 = vmatpush1.bf16.msra.mxu0 0
    %2645 = vmatprep.subr.bf16.mxu0 0
    %2646 = vmatpush1.bf16.msra.mxu0 0
    %2647 = vmatprep.mubr.bf16.mxu0 0
    %2648 = vmatmul.mubr.bf16.gmra.mrb[0].mxu0 %v2573
    %v2649 = vpop.f32.mrb[0].mxu0
    %v2650 = vadd.f32 0.0, %v2649
    %v2651 = vpop.f32.mrb[0].mxu0
    %v2652 = vadd.f32 0.0, %v2651
    %v2653 = vpop.f32.mrb[0].mxu0
    %v2654 = vpop.f32.mrb[0].mxu0
    %2655 = vdwg.mxu0
    %v2656 = vadd.f32 %v2569, %v2609
    %v2657 = vadd.f32 %v2570, %v2611
    %v2658 = vadd.f32 %v2571, %v2650
    %v2659 = vadd.f32 %v2572, %v2652
    %v2660 = vxor.u32 %v2656, 2147483648
    %v2661 = vmul.f32 %v2660, 1.442695
    %v2662 = vpow.pop %v2661
    %v2663 = vadd.f32 %v2662, 1.0
    %v2664 = vrcp.pop %v2663
    %v2665 = vmul.f32 1.0, %v2664
    %v2666 = vxor.u32 %v2657, 2147483648
    %v2667 = vmul.f32 %v2666, 1.442695
    %v2668 = vpow.pop %v2667
    %v2669 = vadd.f32 %v2668, 1.0
    %v2670 = vrcp.pop %v2669
    %v2671 = vmul.f32 1.0, %v2670
    %v2672 = vtanh.pop %v2658
    %v2673 = vxor.u32 %v2659, 2147483648
    %v2674 = vmul.f32 %v2673, 1.442695
    %v2675 = vpow.pop %v2674
    %v2676 = vadd.f32 %v2675, 1.0
    %v2677 = vrcp.pop %v2676
    %v2678 = vmul.f32 1.0, %v2677
    %v2679 = vmul.f32 %v2671, %v2568
    %v2680 = vmul.f32 %v2665, %v2672
    %v2681 = vadd.f32 %v2679, %v2680
    %v2682 = vtanh.pop %v2681
    %v2683 = vmul.f32 %v2678, %v2682
    %2684 = vst [vmem:[#allocation4] sm:$0xff] %v2681
    %2685 = vst [vmem:[#allocation3] sm:$0xff] %v2683
    %2686 = vst [vmem:[%s973] sm:$0xff] %v2683
    %v2687 = vld [vmem:[#allocation3] sm:$0xff]
    %v2688 = vld [vmem:[#allocation4] sm:$0xff]
    %v2689 = vld [vmem:[%s977] sm:$0xff]
    %v2690 = vld [vmem:[%s977 + $0x8] sm:$0xff]
    %v2691 = vld [vmem:[%s977 + $0x10] sm:$0xff]
    %v2692 = vld [vmem:[%s977 + $0x18] sm:$0xff]
    %v2693 = vpack.c.bf16 %v2687, %v2687
    %2694 = vmatprep.subr.bf16.mxu0 %v2271
    %2695 = vmatpush1.bf16.msra.mxu0 %v2270
    %2696 = vmatprep.subr.bf16.mxu0 %v2275
    %2697 = vmatpush1.bf16.msra.mxu0 %v2274
    %2698 = vmatprep.subr.bf16.mxu0 %v2279
    %2699 = vmatpush1.bf16.msra.mxu0 %v2278
    %2700 = vmatprep.subr.bf16.mxu0 %v2283
    %2701 = vmatpush1.bf16.msra.mxu0 %v2282
    %2702 = vmatprep.subr.bf16.mxu0 %v2287
    %2703 = vmatpush1.bf16.msra.mxu0 %v2286
    %2704 = vmatprep.subr.bf16.mxu0 %v2291
    %2705 = vmatpush1.bf16.msra.mxu0 %v2290
    %2706 = vmatprep.subr.bf16.mxu0 %v2295
    %2707 = vmatpush1.bf16.msra.mxu0 %v2294
    %2708 = vmatprep.subr.bf16.mxu0 %v2299
    %2709 = vmatpush1.bf16.msra.mxu0 %v2298
    %2710 = vmatprep.subr.bf16.mxu0 0
    %2711 = vmatpush1.bf16.msra.mxu0 0
    %2712 = vmatprep.subr.bf16.mxu0 0
    %2713 = vmatpush1.bf16.msra.mxu0 0
    %2714 = vmatprep.subr.bf16.mxu0 0
    %2715 = vmatpush1.bf16.msra.mxu0 0
    %2716 = vmatprep.subr.bf16.mxu0 0
    %2717 = vmatpush1.bf16.msra.mxu0 0
    %2718 = vmatprep.subr.bf16.mxu0 0
    %2719 = vmatpush1.bf16.msra.mxu0 0
    %2720 = vmatprep.subr.bf16.mxu0 0
    %2721 = vmatpush1.bf16.msra.mxu0 0
    %2722 = vmatprep.subr.bf16.mxu0 0
    %2723 = vmatpush1.bf16.msra.mxu0 0
    %2724 = vmatprep.subr.bf16.mxu0 0
    %2725 = vmatpush1.bf16.msra.mxu0 0
    %2726 = vmatprep.mubr.bf16.mxu0 0
    %2727 = vmatmul.mubr.bf16.gmra.mrb[0].mxu0 %v2693
    %v2728 = vpop.f32.mrb[0].mxu0
    %v2729 = vadd.f32 0.0, %v2728
    %v2730 = vpop.f32.mrb[0].mxu0
    %v2731 = vadd.f32 0.0, %v2730
    %v2732 = vpop.f32.mrb[0].mxu0
    %v2733 = vpop.f32.mrb[0].mxu0
    %2734 = vdwg.mxu0
    %2735 = vmatprep.subr.bf16.mxu0 %v2273
    %2736 = vmatpush1.bf16.msra.mxu0 %v2272
    %2737 = vmatprep.subr.bf16.mxu0 %v2277
    %2738 = vmatpush1.bf16.msra.mxu0 %v2276
    %2739 = vmatprep.subr.bf16.mxu0 %v2281
    %2740 = vmatpush1.bf16.msra.mxu0 %v2280
    %2741 = vmatprep.subr.bf16.mxu0 %v2285
    %2742 = vmatpush1.bf16.msra.mxu0 %v2284
    %2743 = vmatprep.subr.bf16.mxu0 %v2289
    %2744 = vmatpush1.bf16.msra.mxu0 %v2288
    %2745 = vmatprep.subr.bf16.mxu0 %v2293
    %2746 = vmatpush1.bf16.msra.mxu0 %v2292
    %2747 = vmatprep.subr.bf16.mxu0 %v2297
    %2748 = vmatpush1.bf16.msra.mxu0 %v2296
    %2749 = vmatprep.subr.bf16.mxu0 %v2301
    %2750 = vmatpush1.bf16.msra.mxu0 %v2300
    %2751 = vmatprep.subr.bf16.mxu0 0
    %2752 = vmatpush1.bf16.msra.mxu0 0
    %2753 = vmatprep.subr.bf16.mxu0 0
    %2754 = vmatpush1.bf16.msra.mxu0 0
    %2755 = vmatprep.subr.bf16.mxu0 0
    %2756 = vmatpush1.bf16.msra.mxu0 0
    %2757 = vmatprep.subr.bf16.mxu0 0
    %2758 = vmatpush1.bf16.msra.mxu0 0
    %2759 = vmatprep.subr.bf16.mxu0 0
    %2760 = vmatpush1.bf16.msra.mxu0 0
    %2761 = vmatprep.subr.bf16.mxu0 0
    %2762 = vmatpush1.bf16.msra.mxu0 0
    %2763 = vmatprep.subr.bf16.mxu0 0
    %2764 = vmatpush1.bf16.msra.mxu0 0
    %2765 = vmatprep.subr.bf16.mxu0 0
    %2766 = vmatpush1.bf16.msra.mxu0 0
    %2767 = vmatprep.mubr.bf16.mxu0 0
    %2768 = vmatmul.mubr.bf16.gmra.mrb[0].mxu0 %v2693
    %v2769 = vpop.f32.mrb[0].mxu0
    %v2770 = vadd.f32 0.0, %v2769
    %v2771 = vpop.f32.mrb[0].mxu0
    %v2772 = vadd.f32 0.0, %v2771
    %v2773 = vpop.f32.mrb[0].mxu0
    %v2774 = vpop.f32.mrb[0].mxu0
    %2775 = vdwg.mxu0
    %v2776 = vadd.f32 %v2689, %v2729
    %v2777 = vadd.f32 %v2690, %v2731
    %v2778 = vadd.f32 %v2691, %v2770
    %v2779 = vadd.f32 %v2692, %v2772
    %v2780 = vxor.u32 %v2776, 2147483648
    %v2781 = vmul.f32 %v2780, 1.442695
    %v2782 = vpow.pop %v2781
    %v2783 = vadd.f32 %v2782, 1.0
    %v2784 = vrcp.pop %v2783
    %v2785 = vmul.f32 1.0, %v2784
    %v2786 = vxor.u32 %v2777, 2147483648
    %v2787 = vmul.f32 %v2786, 1.442695
    %v2788 = vpow.pop %v2787
    %v2789 = vadd.f32 %v2788, 1.0
    %v2790 = vrcp.pop %v2789
    %v2791 = vmul.f32 1.0, %v2790
    %v2792 = vtanh.pop %v2778
    %v2793 = vxor.u32 %v2779, 2147483648
    %v2794 = vmul.f32 %v2793, 1.442695
    %v2795 = vpow.pop %v2794
    %v2796 = vadd.f32 %v2795, 1.0
    %v2797 = vrcp.pop %v2796
    %v2798 = vmul.f32 1.0, %v2797
    %v2799 = vmul.f32 %v2791, %v2688
    %v2800 = vmul.f32 %v2785, %v2792
    %v2801 = vadd.f32 %v2799, %v2800
    %v2802 = vtanh.pop %v2801
    %v2803 = vmul.f32 %v2798, %v2802
    %2804 = vst [vmem:[#allocation4] sm:$0xff] %v2801
    %2805 = vst [vmem:[#allocation3] sm:$0xff] %v2803
    %2806 = vst [vmem:[%s1095] sm:$0xff] %v2803
    %v2807 = vld [vmem:[#allocation3] sm:$0xff]
    %v2808 = vld [vmem:[#allocation4] sm:$0xff]
    %v2809 = vld [vmem:[%s1099] sm:$0xff]
    %v2810 = vld [vmem:[%s1099 + $0x8] sm:$0xff]
    %v2811 = vld [vmem:[%s1099 + $0x10] sm:$0xff]
    %v2812 = vld [vmem:[%s1099 + $0x18] sm:$0xff]
    %v2813 = vpack.c.bf16 %v2807, %v2807
    %2814 = vmatprep.subr.bf16.mxu0 %v2271
    %2815 = vmatpush1.bf16.msra.mxu0 %v2270
    %2816 = vmatprep.subr.bf16.mxu0 %v2275
    %2817 = vmatpush1.bf16.msra.mxu0 %v2274
    %2818 = vmatprep.subr.bf16.mxu0 %v2279
    %2819 = vmatpush1.bf16.msra.mxu0 %v2278
    %2820 = vmatprep.subr.bf16.mxu0 %v2283
    %2821 = vmatpush1.bf16.msra.mxu0 %v2282
    %2822 = vmatprep.subr.bf16.mxu0 %v2287
    %2823 = vmatpush1.bf16.msra.mxu0 %v2286
    %2824 = vmatprep.subr.bf16.mxu0 %v2291
    %2825 = vmatpush1.bf16.msra.mxu0 %v2290
    %2826 = vmatprep.subr.bf16.mxu0 %v2295
    %2827 = vmatpush1.bf16.msra.mxu0 %v2294
    %2828 = vmatprep.subr.bf16.mxu0 %v2299
    %2829 = vmatpush1.bf16.msra.mxu0 %v2298
    %2830 = vmatprep.subr.bf16.mxu0 0
    %2831 = vmatpush1.bf16.msra.mxu0 0
    %2832 = vmatprep.subr.bf16.mxu0 0
    %2833 = vmatpush1.bf16.msra.mxu0 0
    %2834 = vmatprep.subr.bf16.mxu0 0
    %2835 = vmatpush1.bf16.msra.mxu0 0
    %2836 = vmatprep.subr.bf16.mxu0 0
    %2837 = vmatpush1.bf16.msra.mxu0 0
    %2838 = vmatprep.subr.bf16.mxu0 0
    %2839 = vmatpush1.bf16.msra.mxu0 0
    %2840 = vmatprep.subr.bf16.mxu0 0
    %2841 = vmatpush1.bf16.msra.mxu0 0
    %2842 = vmatprep.subr.bf16.mxu0 0
    %2843 = vmatpush1.bf16.msra.mxu0 0
    %2844 = vmatprep.subr.bf16.mxu0 0
    %2845 = vmatpush1.bf16.msra.mxu0 0
    %2846 = vmatprep.mubr.bf16.mxu0 0
    %2847 = vmatmul.mubr.bf16.gmra.mrb[0].mxu0 %v2813
    %v2848 = vpop.f32.mrb[0].mxu0
    %v2849 = vadd.f32 0.0, %v2848
    %v2850 = vpop.f32.mrb[0].mxu0
    %v2851 = vadd.f32 0.0, %v2850
    %v2852 = vpop.f32.mrb[0].mxu0
    %v2853 = vpop.f32.mrb[0].mxu0
    %2854 = vdwg.mxu0
    %2855 = vmatprep.subr.bf16.mxu0 %v2273
    %2856 = vmatpush1.bf16.msra.mxu0 %v2272
    %2857 = vmatprep.subr.bf16.mxu0 %v2277
    %2858 = vmatpush1.bf16.msra.mxu0 %v2276
    %2859 = vmatprep.subr.bf16.mxu0 %v2281
    %2860 = vmatpush1.bf16.msra.mxu0 %v2280
    %2861 = vmatprep.subr.bf16.mxu0 %v2285
    %2862 = vmatpush1.bf16.msra.mxu0 %v2284
    %2863 = vmatprep.subr.bf16.mxu0 %v2289
    %2864 = vmatpush1.bf16.msra.mxu0 %v2288
    %2865 = vmatprep.subr.bf16.mxu0 %v2293
    %2866 = vmatpush1.bf16.msra.mxu0 %v2292
    %2867 = vmatprep.subr.bf16.mxu0 %v2297
    %2868 = vmatpush1.bf16.msra.mxu0 %v2296
    %2869 = vmatprep.subr.bf16.mxu0 %v2301
    %2870 = vmatpush1.bf16.msra.mxu0 %v2300
    %2871 = vmatprep.subr.bf16.mxu0 0
    %2872 = vmatpush1.bf16.msra.mxu0 0
    %2873 = vmatprep.subr.bf16.mxu0 0
    %2874 = vmatpush1.bf16.msra.mxu0 0
    %2875 = vmatprep.subr.bf16.mxu0 0
    %2876 = vmatpush1.bf16.msra.mxu0 0
    %2877 = vmatprep.subr.bf16.mxu0 0
    %2878 = vmatpush1.bf16.msra.mxu0 0
    %2879 = vmatprep.subr.bf16.mxu0 0
    %2880 = vmatpush1.bf16.msra.mxu0 0
    %2881 = vmatprep.subr.bf16.mxu0 0
    %2882 = vmatpush1.bf16.msra.mxu0 0
    %2883 = vmatprep.subr.bf16.mxu0 0
    %2884 = vmatpush1.bf16.msra.mxu0 0
    %2885 = vmatprep.subr.bf16.mxu0 0
    %2886 = vmatpush1.bf16.msra.mxu0 0
    %2887 = vmatprep.mubr.bf16.mxu0 0
    %2888 = vmatmul.mubr.bf16.gmra.mrb[0].mxu0 %v2813
    %v2889 = vpop.f32.mrb[0].mxu0
    %v2890 = vadd.f32 0.0, %v2889
    %v2891 = vpop.f32.mrb[0].mxu0
    %v2892 = vadd.f32 0.0, %v2891
    %v2893 = vpop.f32.mrb[0].mxu0
    %v2894 = vpop.f32.mrb[0].mxu0
    %2895 = vdwg.mxu0
    %v2896 = vadd.f32 %v2809, %v2849
    %v2897 = vadd.f32 %v2810, %v2851
    %v2898 = vadd.f32 %v2811, %v2890
    %v2899 = vadd.f32 %v2812, %v2892
    %v2900 = vxor.u32 %v2896, 2147483648
    %v2901 = vmul.f32 %v2900, 1.442695
    %v2902 = vpow.pop %v2901
    %v2903 = vadd.f32 %v2902, 1.0
    %v2904 = vrcp.pop %v2903
    %v2905 = vmul.f32 1.0, %v2904
    %v2906 = vxor.u32 %v2897, 2147483648
    %v2907 = vmul.f32 %v2906, 1.442695
    %v2908 = vpow.pop %v2907
    %v2909 = vadd.f32 %v2908, 1.0
    %v2910 = vrcp.pop %v2909
    %v2911 = vmul.f32 1.0, %v2910
    %v2912 = vtanh.pop %v2898
    %v2913 = vxor.u32 %v2899, 2147483648
    %v2914 = vmul.f32 %v2913, 1.442695
    %v2915 = vpow.pop %v2914
    %v2916 = vadd.f32 %v2915, 1.0
    %v2917 = vrcp.pop %v2916
    %v2918 = vmul.f32 1.0, %v2917
    %v2919 = vmul.f32 %v2911, %v2808
    %v2920 = vmul.f32 %v2905, %v2912
    %v2921 = vadd.f32 %v2919, %v2920
    %v2922 = vtanh.pop %v2921
    %v2923 = vmul.f32 %v2918, %v2922
    %2924 = vst [vmem:[#allocation4] sm:$0xff] %v2921
    %2925 = vst [vmem:[#allocation3] sm:$0xff] %v2923
    %2926 = vst [vmem:[%s1217] sm:$0xff] %v2923
    %v2927 = vld [vmem:[#allocation3] sm:$0xff]
    %v2928 = vld [vmem:[#allocation4] sm:$0xff]
    %v2929 = vld [vmem:[%s1221] sm:$0xff]
    %v2930 = vld [vmem:[%s1221 + $0x8] sm:$0xff]
    %v2931 = vld [vmem:[%s1221 + $0x10] sm:$0xff]
    %v2932 = vld [vmem:[%s1221 + $0x18] sm:$0xff]
    %v2933 = vpack.c.bf16 %v2927, %v2927
    %2934 = vmatprep.subr.bf16.mxu0 %v2271
    %2935 = vmatpush1.bf16.msra.mxu0 %v2270
    %2936 = vmatprep.subr.bf16.mxu0 %v2275
    %2937 = vmatpush1.bf16.msra.mxu0 %v2274
    %2938 = vmatprep.subr.bf16.mxu0 %v2279
    %2939 = vmatpush1.bf16.msra.mxu0 %v2278
    %2940 = vmatprep.subr.bf16.mxu0 %v2283
    %2941 = vmatpush1.bf16.msra.mxu0 %v2282
    %2942 = vmatprep.subr.bf16.mxu0 %v2287
    %2943 = vmatpush1.bf16.msra.mxu0 %v2286
    %2944 = vmatprep.subr.bf16.mxu0 %v2291
    %2945 = vmatpush1.bf16.msra.mxu0 %v2290
    %2946 = vmatprep.subr.bf16.mxu0 %v2295
    %2947 = vmatpush1.bf16.msra.mxu0 %v2294
    %2948 = vmatprep.subr.bf16.mxu0 %v2299
    %2949 = vmatpush1.bf16.msra.mxu0 %v2298
    %2950 = vmatprep.subr.bf16.mxu0 0
    %2951 = vmatpush1.bf16.msra.mxu0 0
    %2952 = vmatprep.subr.bf16.mxu0 0
    %2953 = vmatpush1.bf16.msra.mxu0 0
    %2954 = vmatprep.subr.bf16.mxu0 0
    %2955 = vmatpush1.bf16.msra.mxu0 0
    %2956 = vmatprep.subr.bf16.mxu0 0
    %2957 = vmatpush1.bf16.msra.mxu0 0
    %2958 = vmatprep.subr.bf16.mxu0 0
    %2959 = vmatpush1.bf16.msra.mxu0 0
    %2960 = vmatprep.subr.bf16.mxu0 0
    %2961 = vmatpush1.bf16.msra.mxu0 0
    %2962 = vmatprep.subr.bf16.mxu0 0
    %2963 = vmatpush1.bf16.msra.mxu0 0
    %2964 = vmatprep.subr.bf16.mxu0 0
    %2965 = vmatpush1.bf16.msra.mxu0 0
    %2966 = vmatprep.mubr.bf16.mxu0 0
    %2967 = vmatmul.mubr.bf16.gmra.mrb[0].mxu0 %v2933
    %v2968 = vpop.f32.mrb[0].mxu0
    %v2969 = vadd.f32 0.0, %v2968
    %v2970 = vpop.f32.mrb[0].mxu0
    %v2971 = vadd.f32 0.0, %v2970
    %v2972 = vpop.f32.mrb[0].mxu0
    %v2973 = vpop.f32.mrb[0].mxu0
    %2974 = vdwg.mxu0
    %2975 = vmatprep.subr.bf16.mxu0 %v2273
    %2976 = vmatpush1.bf16.msra.mxu0 %v2272
    %2977 = vmatprep.subr.bf16.mxu0 %v2277
    %2978 = vmatpush1.bf16.msra.mxu0 %v2276
    %2979 = vmatprep.subr.bf16.mxu0 %v2281
    %2980 = vmatpush1.bf16.msra.mxu0 %v2280
    %2981 = vmatprep.subr.bf16.mxu0 %v2285
    %2982 = vmatpush1.bf16.msra.mxu0 %v2284
    %2983 = vmatprep.subr.bf16.mxu0 %v2289
    %2984 = vmatpush1.bf16.msra.mxu0 %v2288
    %2985 = vmatprep.subr.bf16.mxu0 %v2293
    %2986 = vmatpush1.bf16.msra.mxu0 %v2292
    %2987 = vmatprep.subr.bf16.mxu0 %v2297
    %2988 = vmatpush1.bf16.msra.mxu0 %v2296
    %2989 = vmatprep.subr.bf16.mxu0 %v2301
    %2990 = vmatpush1.bf16.msra.mxu0 %v2300
    %2991 = vmatprep.subr.bf16.mxu0 0
    %2992 = vmatpush1.bf16.msra.mxu0 0
    %2993 = vmatprep.subr.bf16.mxu0 0
    %2994 = vmatpush1.bf16.msra.mxu0 0
    %2995 = vmatprep.subr.bf16.mxu0 0
    %2996 = vmatpush1.bf16.msra.mxu0 0
    %2997 = vmatprep.subr.bf16.mxu0 0
    %2998 = vmatpush1.bf16.msra.mxu0 0
    %2999 = vmatprep.subr.bf16.mxu0 0
    %3000 = vmatpush1.bf16.msra.mxu0 0
    %3001 = vmatprep.subr.bf16.mxu0 0
    %3002 = vmatpush1.bf16.msra.mxu0 0
    %3003 = vmatprep.subr.bf16.mxu0 0
    %3004 = vmatpush1.bf16.msra.mxu0 0
    %3005 = vmatprep.subr.bf16.mxu0 0
    %3006 = vmatpush1.bf16.msra.mxu0 0
    %3007 = vmatprep.mubr.bf16.mxu0 0
    %3008 = vmatmul.mubr.bf16.gmra.mrb[0].mxu0 %v2933
    %v3009 = vpop.f32.mrb[0].mxu0
    %v3010 = vadd.f32 0.0, %v3009
    %v3011 = vpop.f32.mrb[0].mxu0
    %v3012 = vadd.f32 0.0, %v3011
    %v3013 = vpop.f32.mrb[0].mxu0
    %v3014 = vpop.f32.mrb[0].mxu0
    %3015 = vdwg.mxu0
    %v3016 = vadd.f32 %v2929, %v2969
    %v3017 = vadd.f32 %v2930, %v2971
    %v3018 = vadd.f32 %v2931, %v3010
    %v3019 = vadd.f32 %v2932, %v3012
    %v3020 = vxor.u32 %v3016, 2147483648
    %v3021 = vmul.f32 %v3020, 1.442695
    %v3022 = vpow.pop %v3021
    %v3023 = vadd.f32 %v3022, 1.0
    %v3024 = vrcp.pop %v3023
    %v3025 = vmul.f32 1.0, %v3024
    %v3026 = vxor.u32 %v3017, 2147483648
    %v3027 = vmul.f32 %v3026, 1.442695
    %v3028 = vpow.pop %v3027
    %v3029 = vadd.f32 %v3028, 1.0
    %v3030 = vrcp.pop %v3029
    %v3031 = vmul.f32 1.0, %v3030
    %v3032 = vtanh.pop %v3018
    %v3033 = vxor.u32 %v3019, 2147483648
    %v3034 = vmul.f32 %v3033, 1.442695
    %v3035 = vpow.pop %v3034
    %v3036 = vadd.f32 %v3035, 1.0
    %v3037 = vrcp.pop %v3036
    %v3038 = vmul.f32 1.0, %v3037
    %v3039 = vmul.f32 %v3031, %v2928
    %v3040 = vmul.f32 %v3025, %v3032
    %v3041 = vadd.f32 %v3039, %v3040
    %v3042 = vtanh.pop %v3041
    %v3043 = vmul.f32 %v3038, %v3042
    %3044 = vst [vmem:[#allocation4] sm:$0xff] %v3041
    %3045 = vst [vmem:[#allocation3] sm:$0xff] %v3043
    %3046 = vst [vmem:[%s1339] sm:$0xff] %v3043
    %v3047 = vld [vmem:[#allocation3] sm:$0xff]
    %v3048 = vld [vmem:[#allocation4] sm:$0xff]
    %v3049 = vld [vmem:[%s1343] sm:$0xff]
    %v3050 = vld [vmem:[%s1343 + $0x8] sm:$0xff]
    %v3051 = vld [vmem:[%s1343 + $0x10] sm:$0xff]
    %v3052 = vld [vmem:[%s1343 + $0x18] sm:$0xff]
    %v3053 = vpack.c.bf16 %v3047, %v3047
    %3054 = vmatprep.subr.bf16.mxu0 %v2271
    %3055 = vmatpush1.bf16.msra.mxu0 %v2270
    %3056 = vmatprep.subr.bf16.mxu0 %v2275
    %3057 = vmatpush1.bf16.msra.mxu0 %v2274
    %3058 = vmatprep.subr.bf16.mxu0 %v2279
    %3059 = vmatpush1.bf16.msra.mxu0 %v2278
    %3060 = vmatprep.subr.bf16.mxu0 %v2283
    %3061 = vmatpush1.bf16.msra.mxu0 %v2282
    %3062 = vmatprep.subr.bf16.mxu0 %v2287
    %3063 = vmatpush1.bf16.msra.mxu0 %v2286
    %3064 = vmatprep.subr.bf16.mxu0 %v2291
    %3065 = vmatpush1.bf16.msra.mxu0 %v2290
    %3066 = vmatprep.subr.bf16.mxu0 %v2295
    %3067 = vmatpush1.bf16.msra.mxu0 %v2294
    %3068 = vmatprep.subr.bf16.mxu0 %v2299
    %3069 = vmatpush1.bf16.msra.mxu0 %v2298
    %3070 = vmatprep.subr.bf16.mxu0 0
    %3071 = vmatpush1.bf16.msra.mxu0 0
    %3072 = vmatprep.subr.bf16.mxu0 0
    %3073 = vmatpush1.bf16.msra.mxu0 0
    %3074 = vmatprep.subr.bf16.mxu0 0
    %3075 = vmatpush1.bf16.msra.mxu0 0
    %3076 = vmatprep.subr.bf16.mxu0 0
    %3077 = vmatpush1.bf16.msra.mxu0 0
    %3078 = vmatprep.subr.bf16.mxu0 0
    %3079 = vmatpush1.bf16.msra.mxu0 0
    %3080 = vmatprep.subr.bf16.mxu0 0
    %3081 = vmatpush1.bf16.msra.mxu0 0
    %3082 = vmatprep.subr.bf16.mxu0 0
    %3083 = vmatpush1.bf16.msra.mxu0 0
    %3084 = vmatprep.subr.bf16.mxu0 0
    %3085 = vmatpush1.bf16.msra.mxu0 0
    %3086 = vmatprep.mubr.bf16.mxu0 0
    %3087 = vmatmul.mubr.bf16.gmra.mrb[0].mxu0 %v3053
    %v3088 = vpop.f32.mrb[0].mxu0
    %v3089 = vadd.f32 0.0, %v3088
    %v3090 = vpop.f32.mrb[0].mxu0
    %v3091 = vadd.f32 0.0, %v3090
    %v3092 = vpop.f32.mrb[0].mxu0
    %v3093 = vpop.f32.mrb[0].mxu0
    %3094 = vdwg.mxu0
    %3095 = vmatprep.subr.bf16.mxu0 %v2273
    %3096 = vmatpush1.bf16.msra.mxu0 %v2272
    %3097 = vmatprep.subr.bf16.mxu0 %v2277
    %3098 = vmatpush1.bf16.msra.mxu0 %v2276
    %3099 = vmatprep.subr.bf16.mxu0 %v2281
    %3100 = vmatpush1.bf16.msra.mxu0 %v2280
    %3101 = vmatprep.subr.bf16.mxu0 %v2285
    %3102 = vmatpush1.bf16.msra.mxu0 %v2284
    %3103 = vmatprep.subr.bf16.mxu0 %v2289
    %3104 = vmatpush1.bf16.msra.mxu0 %v2288
    %3105 = vmatprep.subr.bf16.mxu0 %v2293
    %3106 = vmatpush1.bf16.msra.mxu0 %v2292
    %3107 = vmatprep.subr.bf16.mxu0 %v2297
    %3108 = vmatpush1.bf16.msra.mxu0 %v2296
    %3109 = vmatprep.subr.bf16.mxu0 %v2301
    %3110 = vmatpush1.bf16.msra.mxu0 %v2300
    %3111 = vmatprep.subr.bf16.mxu0 0
    %3112 = vmatpush1.bf16.msra.mxu0 0
    %3113 = vmatprep.subr.bf16.mxu0 0
    %3114 = vmatpush1.bf16.msra.mxu0 0
    %3115 = vmatprep.subr.bf16.mxu0 0
    %3116 = vmatpush1.bf16.msra.mxu0 0
    %3117 = vmatprep.subr.bf16.mxu0 0
    %3118 = vmatpush1.bf16.msra.mxu0 0
    %3119 = vmatprep.subr.bf16.mxu0 0
    %3120 = vmatpush1.bf16.msra.mxu0 0
    %3121 = vmatprep.subr.bf16.mxu0 0
    %3122 = vmatpush1.bf16.msra.mxu0 0
    %3123 = vmatprep.subr.bf16.mxu0 0
    %3124 = vmatpush1.bf16.msra.mxu0 0
    %3125 = vmatprep.subr.bf16.mxu0 0
    %3126 = vmatpush1.bf16.msra.mxu0 0
    %3127 = vmatprep.mubr.bf16.mxu0 0
    %3128 = vmatmul.mubr.bf16.gmra.mrb[0].mxu0 %v3053
    %v3129 = vpop.f32.mrb[0].mxu0
    %v3130 = vadd.f32 0.0, %v3129
    %v3131 = vpop.f32.mrb[0].mxu0
    %v3132 = vadd.f32 0.0, %v3131
    %v3133 = vpop.f32.mrb[0].mxu0
    %v3134 = vpop.f32.mrb[0].mxu0
    %3135 = vdwg.mxu0
    %v3136 = vadd.f32 %v3049, %v3089
    %v3137 = vadd.f32 %v3050, %v3091
    %v3138 = vadd.f32 %v3051, %v3130
    %v3139 = vadd.f32 %v3052, %v3132
    %v3140 = vxor.u32 %v3136, 2147483648
    %v3141 = vmul.f32 %v3140, 1.442695
    %v3142 = vpow.pop %v3141
    %v3143 = vadd.f32 %v3142, 1.0
    %v3144 = vrcp.pop %v3143
    %v3145 = vmul.f32 1.0, %v3144
    %v3146 = vxor.u32 %v3137, 2147483648
    %v3147 = vmul.f32 %v3146, 1.442695
    %v3148 = vpow.pop %v3147
    %v3149 = vadd.f32 %v3148, 1.0
    %v3150 = vrcp.pop %v3149
    %v3151 = vmul.f32 1.0, %v3150
    %v3152 = vtanh.pop %v3138
    %v3153 = vxor.u32 %v3139, 2147483648
    %v3154 = vmul.f32 %v3153, 1.442695
    %v3155 = vpow.pop %v3154
    %v3156 = vadd.f32 %v3155, 1.0
    %v3157 = vrcp.pop %v3156
    %v3158 = vmul.f32 1.0, %v3157
    %v3159 = vmul.f32 %v3151, %v3048
    %v3160 = vmul.f32 %v3145, %v3152
    %v3161 = vadd.f32 %v3159, %v3160
    %v3162 = vtanh.pop %v3161
    %v3163 = vmul.f32 %v3158, %v3162
    %3164 = vst [vmem:[#allocation4] sm:$0xff] %v3161
    %3165 = vst [vmem:[#allocation3] sm:$0xff] %v3163
    %3166 = vst [vmem:[%s1461] sm:$0xff] %v3163
    %v3167 = vld [vmem:[#allocation3] sm:$0xff]
    %v3168 = vld [vmem:[#allocation4] sm:$0xff]
    %v3169 = vld [vmem:[%s1465] sm:$0xff]
    %v3170 = vld [vmem:[%s1465 + $0x8] sm:$0xff]
    %v3171 = vld [vmem:[%s1465 + $0x10] sm:$0xff]
    %v3172 = vld [vmem:[%s1465 + $0x18] sm:$0xff]
    %v3173 = vpack.c.bf16 %v3167, %v3167
    %3174 = vmatprep.subr.bf16.mxu0 %v2271
    %3175 = vmatpush1.bf16.msra.mxu0 %v2270
    %3176 = vmatprep.subr.bf16.mxu0 %v2275
    %3177 = vmatpush1.bf16.msra.mxu0 %v2274
    %3178 = vmatprep.subr.bf16.mxu0 %v2279
    %3179 = vmatpush1.bf16.msra.mxu0 %v2278
    %3180 = vmatprep.subr.bf16.mxu0 %v2283
    %3181 = vmatpush1.bf16.msra.mxu0 %v2282
    %3182 = vmatprep.subr.bf16.mxu0 %v2287
    %3183 = vmatpush1.bf16.msra.mxu0 %v2286
    %3184 = vmatprep.subr.bf16.mxu0 %v2291
    %3185 = vmatpush1.bf16.msra.mxu0 %v2290
    %3186 = vmatprep.subr.bf16.mxu0 %v2295
    %3187 = vmatpush1.bf16.msra.mxu0 %v2294
    %3188 = vmatprep.subr.bf16.mxu0 %v2299
    %3189 = vmatpush1.bf16.msra.mxu0 %v2298
    %3190 = vmatprep.subr.bf16.mxu0 0
    %3191 = vmatpush1.bf16.msra.mxu0 0
    %3192 = vmatprep.subr.bf16.mxu0 0
    %3193 = vmatpush1.bf16.msra.mxu0 0
    %3194 = vmatprep.subr.bf16.mxu0 0
    %3195 = vmatpush1.bf16.msra.mxu0 0
    %3196 = vmatprep.subr.bf16.mxu0 0
    %3197 = vmatpush1.bf16.msra.mxu0 0
    %3198 = vmatprep.subr.bf16.mxu0 0
    %3199 = vmatpush1.bf16.msra.mxu0 0
    %3200 = vmatprep.subr.bf16.mxu0 0
    %3201 = vmatpush1.bf16.msra.mxu0 0
    %3202 = vmatprep.subr.bf16.mxu0 0
    %3203 = vmatpush1.bf16.msra.mxu0 0
    %3204 = vmatprep.subr.bf16.mxu0 0
    %3205 = vmatpush1.bf16.msra.mxu0 0
    %3206 = vmatprep.mubr.bf16.mxu0 0
    %3207 = vmatmul.mubr.bf16.gmra.mrb[0].mxu0 %v3173
    %v3208 = vpop.f32.mrb[0].mxu0
    %v3209 = vadd.f32 0.0, %v3208
    %v3210 = vpop.f32.mrb[0].mxu0
    %v3211 = vadd.f32 0.0, %v3210
    %v3212 = vpop.f32.mrb[0].mxu0
    %v3213 = vpop.f32.mrb[0].mxu0
    %3214 = vdwg.mxu0
    %3215 = vmatprep.subr.bf16.mxu0 %v2273
    %3216 = vmatpush1.bf16.msra.mxu0 %v2272
    %3217 = vmatprep.subr.bf16.mxu0 %v2277
    %3218 = vmatpush1.bf16.msra.mxu0 %v2276
    %3219 = vmatprep.subr.bf16.mxu0 %v2281
    %3220 = vmatpush1.bf16.msra.mxu0 %v2280
    %3221 = vmatprep.subr.bf16.mxu0 %v2285
    %3222 = vmatpush1.bf16.msra.mxu0 %v2284
    %3223 = vmatprep.subr.bf16.mxu0 %v2289
    %3224 = vmatpush1.bf16.msra.mxu0 %v2288
    %3225 = vmatprep.subr.bf16.mxu0 %v2293
    %3226 = vmatpush1.bf16.msra.mxu0 %v2292
    %3227 = vmatprep.subr.bf16.mxu0 %v2297
    %3228 = vmatpush1.bf16.msra.mxu0 %v2296
    %3229 = vmatprep.subr.bf16.mxu0 %v2301
    %3230 = vmatpush1.bf16.msra.mxu0 %v2300
    %3231 = vmatprep.subr.bf16.mxu0 0
    %3232 = vmatpush1.bf16.msra.mxu0 0
    %3233 = vmatprep.subr.bf16.mxu0 0
    %3234 = vmatpush1.bf16.msra.mxu0 0
    %3235 = vmatprep.subr.bf16.mxu0 0
    %3236 = vmatpush1.bf16.msra.mxu0 0
    %3237 = vmatprep.subr.bf16.mxu0 0
    %3238 = vmatpush1.bf16.msra.mxu0 0
    %3239 = vmatprep.subr.bf16.mxu0 0
    %3240 = vmatpush1.bf16.msra.mxu0 0
    %3241 = vmatprep.subr.bf16.mxu0 0
    %3242 = vmatpush1.bf16.msra.mxu0 0
    %3243 = vmatprep.subr.bf16.mxu0 0
    %3244 = vmatpush1.bf16.msra.mxu0 0
    %3245 = vmatprep.subr.bf16.mxu0 0
    %3246 = vmatpush1.bf16.msra.mxu0 0
    %3247 = vmatprep.mubr.bf16.mxu0 0
    %3248 = vmatmul.mubr.bf16.gmra.mrb[0].mxu0 %v3173
    %v3249 = vpop.f32.mrb[0].mxu0
    %v3250 = vadd.f32 0.0, %v3249
    %v3251 = vpop.f32.mrb[0].mxu0
    %v3252 = vadd.f32 0.0, %v3251
    %v3253 = vpop.f32.mrb[0].mxu0
    %v3254 = vpop.f32.mrb[0].mxu0
    %3255 = vdwg.mxu0
    %v3256 = vadd.f32 %v3169, %v3209
    %v3257 = vadd.f32 %v3170, %v3211
    %v3258 = vadd.f32 %v3171, %v3250
    %v3259 = vadd.f32 %v3172, %v3252
    %v3260 = vxor.u32 %v3256, 2147483648
    %v3261 = vmul.f32 %v3260, 1.442695
    %v3262 = vpow.pop %v3261
    %v3263 = vadd.f32 %v3262, 1.0
    %v3264 = vrcp.pop %v3263
    %v3265 = vmul.f32 1.0, %v3264
    %v3266 = vxor.u32 %v3257, 2147483648
    %v3267 = vmul.f32 %v3266, 1.442695
    %v3268 = vpow.pop %v3267
    %v3269 = vadd.f32 %v3268, 1.0
    %v3270 = vrcp.pop %v3269
    %v3271 = vmul.f32 1.0, %v3270
    %v3272 = vtanh.pop %v3258
    %v3273 = vxor.u32 %v3259, 2147483648
    %v3274 = vmul.f32 %v3273, 1.442695
    %v3275 = vpow.pop %v3274
    %v3276 = vadd.f32 %v3275, 1.0
    %v3277 = vrcp.pop %v3276
    %v3278 = vmul.f32 1.0, %v3277
    %v3279 = vmul.f32 %v3271, %v3168
    %v3280 = vmul.f32 %v3265, %v3272
    %v3281 = vadd.f32 %v3279, %v3280
    %v3282 = vtanh.pop %v3281
    %v3283 = vmul.f32 %v3278, %v3282
    %3284 = vst [vmem:[#allocation4] sm:$0xff] %v3281
    %3285 = vst [vmem:[#allocation3] sm:$0xff] %v3283
    %3286 = vst [vmem:[%s1583] sm:$0xff] %v3283
    %v3287 = vld [vmem:[#allocation3] sm:$0xff]
    %v3288 = vld [vmem:[#allocation4] sm:$0xff]
    %v3289 = vld [vmem:[%s1587] sm:$0xff]
    %v3290 = vld [vmem:[%s1587 + $0x8] sm:$0xff]
    %v3291 = vld [vmem:[%s1587 + $0x10] sm:$0xff]
    %v3292 = vld [vmem:[%s1587 + $0x18] sm:$0xff]
    %v3293 = vpack.c.bf16 %v3287, %v3287
    %3294 = vmatprep.subr.bf16.mxu0 %v2271
    %3295 = vmatpush1.bf16.msra.mxu0 %v2270
    %3296 = vmatprep.subr.bf16.mxu0 %v2275
    %3297 = vmatpush1.bf16.msra.mxu0 %v2274
    %3298 = vmatprep.subr.bf16.mxu0 %v2279
    %3299 = vmatpush1.bf16.msra.mxu0 %v2278
    %3300 = vmatprep.subr.bf16.mxu0 %v2283
    %3301 = vmatpush1.bf16.msra.mxu0 %v2282
    %3302 = vmatprep.subr.bf16.mxu0 %v2287
    %3303 = vmatpush1.bf16.msra.mxu0 %v2286
    %3304 = vmatprep.subr.bf16.mxu0 %v2291
    %3305 = vmatpush1.bf16.msra.mxu0 %v2290
    %3306 = vmatprep.subr.bf16.mxu0 %v2295
    %3307 = vmatpush1.bf16.msra.mxu0 %v2294
    %3308 = vmatprep.subr.bf16.mxu0 %v2299
    %3309 = vmatpush1.bf16.msra.mxu0 %v2298
    %3310 = vmatprep.subr.bf16.mxu0 0
    %3311 = vmatpush1.bf16.msra.mxu0 0
    %3312 = vmatprep.subr.bf16.mxu0 0
    %3313 = vmatpush1.bf16.msra.mxu0 0
    %3314 = vmatprep.subr.bf16.mxu0 0
    %3315 = vmatpush1.bf16.msra.mxu0 0
    %3316 = vmatprep.subr.bf16.mxu0 0
    %3317 = vmatpush1.bf16.msra.mxu0 0
    %3318 = vmatprep.subr.bf16.mxu0 0
    %3319 = vmatpush1.bf16.msra.mxu0 0
    %3320 = vmatprep.subr.bf16.mxu0 0
    %3321 = vmatpush1.bf16.msra.mxu0 0
    %3322 = vmatprep.subr.bf16.mxu0 0
    %3323 = vmatpush1.bf16.msra.mxu0 0
    %3324 = vmatprep.subr.bf16.mxu0 0
    %3325 = vmatpush1.bf16.msra.mxu0 0
    %3326 = vmatprep.mubr.bf16.mxu0 0
    %3327 = vmatmul.mubr.bf16.gmra.mrb[0].mxu0 %v3293
    %v3328 = vpop.f32.mrb[0].mxu0
    %v3329 = vadd.f32 0.0, %v3328
    %v3330 = vpop.f32.mrb[0].mxu0
    %v3331 = vadd.f32 0.0, %v3330
    %v3332 = vpop.f32.mrb[0].mxu0
    %v3333 = vpop.f32.mrb[0].mxu0
    %3334 = vdwg.mxu0
    %3335 = vmatprep.subr.bf16.mxu0 %v2273
    %3336 = vmatpush1.bf16.msra.mxu0 %v2272
    %3337 = vmatprep.subr.bf16.mxu0 %v2277
    %3338 = vmatpush1.bf16.msra.mxu0 %v2276
    %3339 = vmatprep.subr.bf16.mxu0 %v2281
    %3340 = vmatpush1.bf16.msra.mxu0 %v2280
    %3341 = vmatprep.subr.bf16.mxu0 %v2285
    %3342 = vmatpush1.bf16.msra.mxu0 %v2284
    %3343 = vmatprep.subr.bf16.mxu0 %v2289
    %3344 = vmatpush1.bf16.msra.mxu0 %v2288
    %3345 = vmatprep.subr.bf16.mxu0 %v2293
    %3346 = vmatpush1.bf16.msra.mxu0 %v2292
    %3347 = vmatprep.subr.bf16.mxu0 %v2297
    %3348 = vmatpush1.bf16.msra.mxu0 %v2296
    %3349 = vmatprep.subr.bf16.mxu0 %v2301
    %3350 = vmatpush1.bf16.msra.mxu0 %v2300
    %3351 = vmatprep.subr.bf16.mxu0 0
    %3352 = vmatpush1.bf16.msra.mxu0 0
    %3353 = vmatprep.subr.bf16.mxu0 0
    %3354 = vmatpush1.bf16.msra.mxu0 0
    %3355 = vmatprep.subr.bf16.mxu0 0
    %3356 = vmatpush1.bf16.msra.mxu0 0
    %3357 = vmatprep.subr.bf16.mxu0 0
    %3358 = vmatpush1.bf16.msra.mxu0 0
    %3359 = vmatprep.subr.bf16.mxu0 0
    %3360 = vmatpush1.bf16.msra.mxu0 0
    %3361 = vmatprep.subr.bf16.mxu0 0
    %3362 = vmatpush1.bf16.msra.mxu0 0
    %3363 = vmatprep.subr.bf16.mxu0 0
    %3364 = vmatpush1.bf16.msra.mxu0 0
    %3365 = vmatprep.subr.bf16.mxu0 0
    %3366 = vmatpush1.bf16.msra.mxu0 0
    %3367 = vmatprep.mubr.bf16.mxu0 0
    %3368 = vmatmul.mubr.bf16.gmra.mrb[0].mxu0 %v3293
    %v3369 = vpop.f32.mrb[0].mxu0
    %v3370 = vadd.f32 0.0, %v3369
    %v3371 = vpop.f32.mrb[0].mxu0
    %v3372 = vadd.f32 0.0, %v3371
    %v3373 = vpop.f32.mrb[0].mxu0
    %v3374 = vpop.f32.mrb[0].mxu0
    %3375 = vdwg.mxu0
    %v3376 = vadd.f32 %v3289, %v3329
    %v3377 = vadd.f32 %v3290, %v3331
    %v3378 = vadd.f32 %v3291, %v3370
    %v3379 = vadd.f32 %v3292, %v3372
    %v3380 = vxor.u32 %v3376, 2147483648
    %v3381 = vmul.f32 %v3380, 1.442695
    %v3382 = vpow.pop %v3381
    %v3383 = vadd.f32 %v3382, 1.0
    %v3384 = vrcp.pop %v3383
    %v3385 = vmul.f32 1.0, %v3384
    %v3386 = vxor.u32 %v3377, 2147483648
    %v3387 = vmul.f32 %v3386, 1.442695
    %v3388 = vpow.pop %v3387
    %v3389 = vadd.f32 %v3388, 1.0
    %v3390 = vrcp.pop %v3389
    %v3391 = vmul.f32 1.0, %v3390
    %v3392 = vtanh.pop %v3378
    %v3393 = vxor.u32 %v3379, 2147483648
    %v3394 = vmul.f32 %v3393, 1.442695
    %v3395 = vpow.pop %v3394
    %v3396 = vadd.f32 %v3395, 1.0
    %v3397 = vrcp.pop %v3396
    %v3398 = vmul.f32 1.0, %v3397
    %v3399 = vmul.f32 %v3391, %v3288
    %v3400 = vmul.f32 %v3385, %v3392
    %v3401 = vadd.f32 %v3399, %v3400
    %v3402 = vtanh.pop %v3401
    %v3403 = vmul.f32 %v3398, %v3402
    %3404 = vst [vmem:[#allocation4] sm:$0xff] %v3401
    %3405 = vst [vmem:[#allocation3] sm:$0xff] %v3403
    %3406 = vst [vmem:[%s1705] sm:$0xff] %v3403
    // Predicated region
    $region58: #{tpu_custom_call.1} parent=1 // pred_check
      _
    $region59: #{tpu_custom_call.1} parent=1 // pred_check_branch
      %3408 = sbr.rel (0) target = $region61
    $region60: #{tpu_custom_call.1} parent=1 // pred_region
      %s3410 = ssub.s32 1152, 1152
      %3411 = vsyncadd [#allocation7], %s3410
      %s3412 = sshll.u32 [#allocation17], 4
      %s3413 = int_to_ptr.vmem [resolvable:$true] %s3412
      %3418 = dma.vmem_to_hbm [thread:$0]  %s3413, 1152, %s7, [#allocation7], 128, 128, 8
    $region61: #{tpu_custom_call.1} parent=1 // pred_fallthru
      _
    // Predicated region
    $region62: #{tpu_custom_call.1} parent=1 // pred_check
      _
    $region63: #{tpu_custom_call.1} parent=1 // pred_check_branch
      %3420 = sbr.rel (0) target = $region65
    $region64: #{tpu_custom_call.1} parent=1 // pred_region
      %3421 = dma.done [#allocation7], 1152
    $region65: #{tpu_custom_call.1} parent=1 // pred_fallthru
      _
    %3422 = vsyncpa [#allocation6], 1
    %3423 = vsyncpa [#allocation9], 1
    %3424 = vsyncpa [#allocation12], 1
    %3425 = vsyncpa [#allocation15], 1
    %3426 = vsyncpa [#allocation7], 1

</llo_original>
